<compile_context>
chip_gen: v7x
topology: tpu7x:2x2x1
jax: 0.10.0
libtpu: 0.0.40
codegen_flags: <defaults>
</compile_context>

<pallas_src>
import jax
import jax.numpy as jnp
import numpy as np
from jax.experimental import pallas as pl
from jax.experimental.pallas import tpu as pltpu

CONTAINER_WIDTH = 5               # lin1 expects 1792 = 256 * (W + 2)  =>  W = 5
SEQ_LEN = CONTAINER_WIDTH + 2     # 7 positions after concat(state, block)
C1, C2, HID = 128, 256, 512
FLAT = C2 * SEQ_LEN               # 1792
BN_EPS = 1e-5


def dqn_kernel(xpos_ref, wp_ref, bp_ref,
               w2_ref, b2_ref, w3_ref, b3_ref,
               w1_ref, bl1_ref, wh_ref, bh_ref,
               out_ref):
    bf16 = jnp.bfloat16
    f32 = jnp.float32
    bt = xpos_ref.shape[1]

    # Stage 1: per-position 1x1 conv (in_ch=1) + folded bn1 + relu, fused over
    # all 7 positions.  (SEQ, bt, 1) * (SEQ, 1, C1) + (SEQ, 1, C1) -> (SEQ, bt, C1)
    x1 = jnp.maximum(xpos_ref[...] * wp_ref[...] + bp_ref[...], 0.0)
    # Free re-view: merge (SEQ, bt) -> SEQ*bt (last dim untouched, bt % 8 == 0).
    x1f = x1.reshape(SEQ_LEN * bt, C1)

    # conv2 + bn2 (folded) + relu: one matmul with M = SEQ*bt.
    x2 = jnp.maximum(
        jnp.dot(x1f.astype(bf16), w2_ref[...],
                preferred_element_type=f32) + b2_ref[...], 0.0)
    # conv3 + bn3 (folded) + relu.
    x3 = jnp.maximum(
        jnp.dot(x2.astype(bf16), w3_ref[...],
                preferred_element_type=f32) + b3_ref[...], 0.0)
    x3 = x3.reshape(SEQ_LEN, bt, C2).astype(bf16)

    # lin1: sum over positions of (bt, 256) @ (256, 512); flatten order c*7+l is
    # baked into w1_ref by the wrapper.
    acc = jnp.dot(x3[0], w1_ref[0], preferred_element_type=f32)
    for l in range(1, SEQ_LEN):
        acc = acc + jnp.dot(x3[l], w1_ref[l], preferred_element_type=f32)

    h = jnp.maximum(acc + bl1_ref[...], 0.0)                           # (bt, 512)

    # head + softmax(dim=1); padded lanes carry -1e30 bias -> exp underflows to 0.
    logits = jnp.dot(h.astype(bf16), wh_ref[...],
                     preferred_element_type=f32) + bh_ref[...]
    m = jnp.max(logits, axis=-1, keepdims=True)
    e = jnp.exp(logits - m)
    inv = pl.reciprocal(jnp.sum(e, axis=-1, keepdims=True), approx=True)
    out_ref[...] = e * inv


def init_params(key, output_size):
    keys = iter(jax.random.split(key, 32))

    def normal(shape, scale):
        return (scale * jax.random.normal(next(keys), shape)).astype(jnp.float32)

    def bn(c):
        return dict(
            gamma=(1.0 + normal((c,), 0.05)),
            beta=normal((c,), 0.05),
            mean=normal((c,), 0.1),
            var=(1.0 + 0.2 * jax.nn.sigmoid(normal((c,), 1.0))),
        )

    return dict(
        conv_state_w=normal((C1, 1, 1), 0.3), conv_state_b=normal((C1,), 0.1),
        conv_block_w=normal((C1, 1, 1), 0.3), conv_block_b=normal((C1,), 0.1),
        bn1=bn(C1),
        conv2_w=normal((C2, C1, 1), 1.0 / np.sqrt(C1)), conv2_b=normal((C2,), 0.05),
        bn2=bn(C2),
        conv3_w=normal((C2, C2, 1), 1.0 / np.sqrt(C2)), conv3_b=normal((C2,), 0.05),
        bn3=bn(C2),
        lin1_w=normal((HID, FLAT), 1.0 / np.sqrt(FLAT)), lin1_b=normal((HID,), 0.05),
        head_w=normal((output_size, HID), 1.0 / np.sqrt(HID)),
        head_b=normal((output_size,), 0.05),
    )


def _cdiv(a, b):
    return -(-a // b)


def _round_up(x, m):
    return _cdiv(x, m) * m


def dqn_forward(state, block, params):
    """state: (B, 1, CONTAINER_WIDTH), block: (B, 1, 2) -- PyTorch NCL layout."""
    B, _, W = state.shape
    assert W == CONTAINER_WIDTH and block.shape[-1] == 2
    f32, bf16 = jnp.float32, jnp.bfloat16

    def fold_bn(bn):
        scale = bn['gamma'] / jnp.sqrt(bn['var'] + BN_EPS)
        shift = bn['beta'] - bn['mean'] * scale
        return scale.astype(f32), shift.astype(f32)

    s1, t1 = fold_bn(params['bn1'])
    s2, t2 = fold_bn(params['bn2'])
    s3, t3 = fold_bn(params['bn3'])

    # Per-position 1x1 conv (in_ch=1) with bn1 folded: first W positions use
    # conv_state, last 2 use conv_block.  Shape (SEQ, 1, 128): broadcast over
    # the batch happens inside the kernel (no O(B) replication in HBM).
    w_s = params['conv_state_w'][:, 0, 0]
    w_b = params['conv_block_w'][:, 0, 0]
    b_s = params['conv_state_b']
    b_b = params['conv_block_b']
    wp = jnp.stack([w_s] * W + [w_b] * 2, axis=0)                          # (SEQ, 128)
    bp = jnp.stack([b_s] * W + [b_b] * 2, axis=0)
    wp_eff = (wp * s1[None, :])[:, None, :].astype(f32)                    # (SEQ, 1, 128)
    bp_eff = (bp * s1[None, :] + t1[None, :])[:, None, :].astype(f32)

    # conv2/conv3 with bn2/bn3 folded into the weights; weights go bf16.
    w2_eff = (params['conv2_w'][:, :, 0].T * s2[None, :]).astype(bf16)     # (128, 256)
    b2_eff = (params['conv2_b'] * s2 + t2)[None, :].astype(f32)            # (1, 256)
    w3_eff = (params['conv3_w'][:, :, 0].T * s3[None, :]).astype(bf16)     # (256, 256)
    b3_eff = (params['conv3_b'] * s3 + t3)[None, :].astype(f32)            # (1, 256)

    # lin1 weight reordered so w1r[l, c, j] = lin1_w[j, c*SEQ + l]
    # (matches PyTorch output.view(B, -1) flatten of a (B, 256, 7) tensor).
    w1r = jnp.transpose(params['lin1_w'].reshape(HID, C2, SEQ_LEN),
                        (2, 1, 0)).astype(bf16)                            # (7, 256, 512)
    bl1 = params['lin1_b'][None, :].astype(f32)                            # (1, 512)

    # Head: pad output channels to a lane-dense 128 multiple; padded lanes get
    # zero weight and -1e30 bias so the in-kernel softmax ignores them.
    out_size = params['head_b'].shape[0]
    OUTP = _round_up(out_size, 128)
    wh = jnp.zeros((HID, OUTP), f32).at[:, :out_size].set(
        params['head_w'].T.astype(f32)).astype(bf16)                       # (512, OUTP)
    bh = jnp.full((1, OUTP), -1e30, f32).at[0, :out_size].set(
        params['head_b'].astype(f32))                                      # (1, OUTP)

    # Batch tiling: at least 2 grid steps when the padded batch is >= 16 rows
    # (megacore sharding on v7x) and minimal padding waste (tile picked as
    # round_up(ceil(b8/n_tiles), 8), n_tiles = max(2, ceil(b8/256))).
    b8 = _round_up(B, 8)
    if b8 <= 8:
        n_tiles = 1
    else:
        n_tiles = max(2, _cdiv(b8, 256))
    bt = _round_up(_cdiv(b8, n_tiles), 8)
    Bp = n_tiles * bt
    grid = (n_tiles,)

    pos_vals = jnp.concatenate([state[:, 0, :], block[:, 0, :]], axis=-1)  # (B, SEQ)
    xpos = jnp.zeros((SEQ_LEN, Bp, 1), f32).at[:, :B, 0].set(pos_vals.T.astype(f32))

    const2 = lambda shape: pl.BlockSpec(shape, lambda i: (0, 0))
    const3 = lambda shape: pl.BlockSpec(shape, lambda i: (0, 0, 0))
    in_specs = [
        pl.BlockSpec((SEQ_LEN, bt, 1), lambda i: (0, i, 0)),   # xpos (batch-tiled)
        const3((SEQ_LEN, 1, C1)), const3((SEQ_LEN, 1, C1)),    # wp, bp
        const2((C1, C2)), const2((1, C2)),                     # w2, b2
        const2((C2, C2)), const2((1, C2)),                     # w3, b3
        const3((SEQ_LEN, C2, HID)), const2((1, HID)),          # w1r, bl1
        const2((HID, OUTP)), const2((1, OUTP)),                # wh, bh
    ]
    out_specs = pl.BlockSpec((bt, OUTP), lambda i: (i, 0))

    inputs = (xpos, wp_eff, bp_eff, w2_eff, b2_eff, w3_eff, b3_eff,
              w1r, bl1, wh, bh)
    flops = 2 * Bp * SEQ_LEN * (C1 * C2 + C2 * C2 + C2 * HID) + 2 * Bp * HID * OUTP
    bytes_accessed = sum(int(np.prod(a.shape)) * a.dtype.itemsize for a in inputs) \
        + Bp * OUTP * 4

    out = pl.pallas_call(
        dqn_kernel,
        out_shape=jax.ShapeDtypeStruct((Bp, OUTP), jnp.float32),
        grid=grid,
        in_specs=in_specs,
        out_specs=out_specs,
        compiler_params=pltpu.CompilerParams(
            dimension_semantics=("parallel",),
            vmem_limit_bytes=32 * 1024 * 1024),
        cost_estimate=pl.CostEstimate(flops=flops,
                                      transcendentals=Bp * (OUTP + 1),
                                      bytes_accessed=bytes_accessed),
    )(*inputs)
    return out[:B, :out_size]


def dqn_reference(state, block, params):
    """Plain-JAX f32 mirror of the PyTorch forward (NCL layout), for checking."""
    def bn_eval(x, bn):  # x: (B, C, L)
        scale = bn['gamma'] / jnp.sqrt(bn['var'] + BN_EPS)
        shift = bn['beta'] - bn['mean'] * scale
        return x * scale[None, :, None] + shift[None, :, None]

    w_s = params['conv_state_w'][:, 0, 0]
    es = w_s[None, :, None] * state[:, 0, :][:, None, :] + params['conv_state_b'][None, :, None]
    w_b = params['conv_block_w'][:, 0, 0]
    eb = w_b[None, :, None] * block[:, 0, :][:, None, :] + params['conv_block_b'][None, :, None]
    x = jnp.concatenate([es, eb], axis=-1)                                 # (B, 128, 7)
    x = jax.nn.relu(bn_eval(x, params['bn1']))
    x = jnp.einsum('bcl,dc->bdl', x, params['conv2_w'][:, :, 0]) + params['conv2_b'][None, :, None]
    x = jax.nn.relu(bn_eval(x, params['bn2']))
    x = jnp.einsum('bcl,dc->bdl', x, params['conv3_w'][:, :, 0]) + params['conv3_b'][None, :, None]
    x = jax.nn.relu(bn_eval(x, params['bn3']))
    flat = x.reshape(x.shape[0], -1)                                       # (B, 1792)
    h = jax.nn.relu(flat @ params['lin1_w'].T + params['lin1_b'])
    logits = h @ params['head_w'].T + params['head_b']
    return jax.nn.softmax(logits, axis=1)


if __name__ == "__main__":
    OUTPUT_SIZE = 8
    B = 2
    key = jax.random.PRNGKey(0)
    k_param, k_state, k_block = jax.random.split(key, 3)

    params = init_params(k_param, OUTPUT_SIZE)
    state = jax.random.normal(k_state, (B, 1, CONTAINER_WIDTH), jnp.float32)
    block = jax.random.normal(k_block, (B, 1, 2), jnp.float32)

    out = dqn_forward(state, block, params)
    out = jax.block_until_ready(out)

    ref = dqn_reference(state, block, params)
    assert out.shape == (B, OUTPUT_SIZE)
    max_diff = float(np.max(np.abs(np.asarray(out) - np.asarray(ref))))
    # bf16 weights/activations on the MXU with f32 accumulation (plus the
    # approx reciprocal in the softmax) vs. the pure-f32 reference -> a
    # slightly loose tolerance; outputs are softmax probabilities in [0, 1].
    assert np.allclose(np.asarray(out), np.asarray(ref), rtol=2e-2, atol=2e-2), \
        f"mismatch vs reference, max abs diff = {max_diff}"
    print("KERNEL_OK")
</pallas_src>

<mosaic_0001>
module attributes {stable_mosaic.version = 11 : i64} {
  func.func @dqn_kernel(%arg0: i32, %arg1: memref<7x8x1xf32, #tpu.memory_space<vmem>>, %arg2: memref<7x1x128xf32, #tpu.memory_space<vmem>>, %arg3: memref<7x1x128xf32, #tpu.memory_space<vmem>>, %arg4: memref<128x256xbf16, #tpu.memory_space<vmem>>, %arg5: memref<1x256xf32, #tpu.memory_space<vmem>>, %arg6: memref<256x256xbf16, #tpu.memory_space<vmem>>, %arg7: memref<1x256xf32, #tpu.memory_space<vmem>>, %arg8: memref<7x256x512xbf16, #tpu.memory_space<vmem>>, %arg9: memref<1x512xf32, #tpu.memory_space<vmem>>, %arg10: memref<512x128xbf16, #tpu.memory_space<vmem>>, %arg11: memref<1x128xf32, #tpu.memory_space<vmem>>, %arg12: memref<8x128xf32, #tpu.memory_space<vmem>>) attributes {dimension_semantics = [#tpu.dimension_semantics<parallel>], iteration_bounds = array<i64: 1>, scalar_prefetch = 0 : i64, scratch_operands = 0 : i64, tpu.core_type = #tpu.core_type<tc>, window_params = [{transform_indices = @transform_0, window_bounds = array<i64: 7, 8, 1>}, {pipeline_mode = #tpu.pipeline_mode<synchronous>, transform_indices = @transform_1, window_bounds = array<i64: 7, 1, 128>}, {pipeline_mode = #tpu.pipeline_mode<synchronous>, transform_indices = @transform_2, window_bounds = array<i64: 7, 1, 128>}, {pipeline_mode = #tpu.pipeline_mode<synchronous>, transform_indices = @transform_3, window_bounds = array<i64: 128, 256>}, {pipeline_mode = #tpu.pipeline_mode<synchronous>, transform_indices = @transform_4, window_bounds = array<i64: 1, 256>}, {pipeline_mode = #tpu.pipeline_mode<synchronous>, transform_indices = @transform_5, window_bounds = array<i64: 256, 256>}, {pipeline_mode = #tpu.pipeline_mode<synchronous>, transform_indices = @transform_6, window_bounds = array<i64: 1, 256>}, {pipeline_mode = #tpu.pipeline_mode<synchronous>, transform_indices = @transform_7, window_bounds = array<i64: 7, 256, 512>}, {pipeline_mode = #tpu.pipeline_mode<synchronous>, transform_indices = @transform_8, window_bounds = array<i64: 1, 512>}, {pipeline_mode = #tpu.pipeline_mode<synchronous>, transform_indices = @transform_9, window_bounds = array<i64: 512, 128>}, {pipeline_mode = #tpu.pipeline_mode<synchronous>, transform_indices = @transform_10, window_bounds = array<i64: 1, 128>}, {transform_indices = @transform_11, window_bounds = array<i64: 8, 128>}]} {
    %c0 = arith.constant 0 : index
    %c0_0 = arith.constant 0 : index
    %c0_1 = arith.constant 0 : index
    %0 = vector.load %arg1[%c0, %c0_0, %c0_1] : memref<7x8x1xf32, #tpu.memory_space<vmem>>, vector<7x8x1xf32>
    %c0_2 = arith.constant 0 : index
    %c0_3 = arith.constant 0 : index
    %c0_4 = arith.constant 0 : index
    %1 = vector.load %arg2[%c0_2, %c0_3, %c0_4] : memref<7x1x128xf32, #tpu.memory_space<vmem>>, vector<7x1x128xf32>
    %2 = vector.broadcast %0 : vector<7x8x1xf32> to vector<7x8x128xf32>
    %3 = vector.broadcast %1 : vector<7x1x128xf32> to vector<7x8x128xf32>
    %4 = arith.mulf %2, %3 : vector<7x8x128xf32>
    %c0_5 = arith.constant 0 : index
    %c0_6 = arith.constant 0 : index
    %c0_7 = arith.constant 0 : index
    %5 = vector.load %arg3[%c0_5, %c0_6, %c0_7] : memref<7x1x128xf32, #tpu.memory_space<vmem>>, vector<7x1x128xf32>
    %6 = vector.broadcast %5 : vector<7x1x128xf32> to vector<7x8x128xf32>
    %7 = arith.addf %4, %6 : vector<7x8x128xf32>
    %cst = arith.constant 0.000000e+00 : f32
    %8 = vector.broadcast %cst : f32 to vector<7x8x128xf32>
    %9 = arith.maximumf %7, %8 : vector<7x8x128xf32>
    %10 = vector.shape_cast %9 : vector<7x8x128xf32> to vector<56x128xf32>
    %11 = arith.truncf %10 : vector<56x128xf32> to vector<56x128xbf16>
    %c0_8 = arith.constant 0 : index
    %c0_9 = arith.constant 0 : index
    %12 = vector.load %arg4[%c0_8, %c0_9] : memref<128x256xbf16, #tpu.memory_space<vmem>>, vector<128x256xbf16>
    %cst_10 = arith.constant dense<0.000000e+00> : vector<56x256xf32>
    %13 = tpu.matmul %11, %12, %cst_10 {dimension_numbers = #tpu.dot_dimension_numbers<[1], [0], [0], [1], [0, 0, 1, 1], [], []>} : vector<56x128xbf16>, vector<128x256xbf16>, vector<56x256xf32> -> vector<56x256xf32>
    %c0_11 = arith.constant 0 : index
    %c0_12 = arith.constant 0 : index
    %14 = vector.load %arg5[%c0_11, %c0_12] : memref<1x256xf32, #tpu.memory_space<vmem>>, vector<1x256xf32>
    %15 = vector.broadcast %14 : vector<1x256xf32> to vector<56x256xf32>
    %16 = arith.addf %13, %15 : vector<56x256xf32>
    %cst_13 = arith.constant 0.000000e+00 : f32
    %17 = vector.broadcast %cst_13 : f32 to vector<56x256xf32>
    %18 = arith.maximumf %16, %17 : vector<56x256xf32>
    %19 = arith.truncf %18 : vector<56x256xf32> to vector<56x256xbf16>
    %c0_14 = arith.constant 0 : index
    %c0_15 = arith.constant 0 : index
    %20 = vector.load %arg6[%c0_14, %c0_15] : memref<256x256xbf16, #tpu.memory_space<vmem>>, vector<256x256xbf16>
    %cst_16 = arith.constant dense<0.000000e+00> : vector<56x256xf32>
    %21 = tpu.matmul %19, %20, %cst_16 {dimension_numbers = #tpu.dot_dimension_numbers<[1], [0], [0], [1], [0, 0, 1, 1], [], []>} : vector<56x256xbf16>, vector<256x256xbf16>, vector<56x256xf32> -> vector<56x256xf32>
    %c0_17 = arith.constant 0 : index
    %c0_18 = arith.constant 0 : index
    %22 = vector.load %arg7[%c0_17, %c0_18] : memref<1x256xf32, #tpu.memory_space<vmem>>, vector<1x256xf32>
    %23 = vector.broadcast %22 : vector<1x256xf32> to vector<56x256xf32>
    %24 = arith.addf %21, %23 : vector<56x256xf32>
    %cst_19 = arith.constant 0.000000e+00 : f32
    %25 = vector.broadcast %cst_19 : f32 to vector<56x256xf32>
    %26 = arith.maximumf %24, %25 : vector<56x256xf32>
    %27 = vector.shape_cast %26 : vector<56x256xf32> to vector<7x8x256xf32>
    %28 = arith.truncf %27 : vector<7x8x256xf32> to vector<7x8x256xbf16>
    %29 = vector.extract_strided_slice %28 {offsets = [0, 0, 0], sizes = [1, 8, 256], strides = [1, 1, 1]} : vector<7x8x256xbf16> to vector<1x8x256xbf16>
    %30 = vector.shape_cast %29 : vector<1x8x256xbf16> to vector<8x256xbf16>
    %c0_20 = arith.constant 0 : index
    %c0_21 = arith.constant 0 : index
    %c0_22 = arith.constant 0 : index
    %31 = vector.load %arg8[%c0_20, %c0_21, %c0_22] : memref<7x256x512xbf16, #tpu.memory_space<vmem>>, vector<1x256x512xbf16>
    %32 = vector.shape_cast %31 : vector<1x256x512xbf16> to vector<256x512xbf16>
    %cst_23 = arith.constant dense<0.000000e+00> : vector<8x512xf32>
    %33 = tpu.matmul %30, %32, %cst_23 {dimension_numbers = #tpu.dot_dimension_numbers<[1], [0], [0], [1], [0, 0, 1, 1], [], []>} : vector<8x256xbf16>, vector<256x512xbf16>, vector<8x512xf32> -> vector<8x512xf32>
    %34 = vector.extract_strided_slice %28 {offsets = [1, 0, 0], sizes = [1, 8, 256], strides = [1, 1, 1]} : vector<7x8x256xbf16> to vector<1x8x256xbf16>
    %35 = vector.shape_cast %34 : vector<1x8x256xbf16> to vector<8x256xbf16>
    %c1 = arith.constant 1 : index
    %c0_24 = arith.constant 0 : index
    %c0_25 = arith.constant 0 : index
    %36 = vector.load %arg8[%c1, %c0_24, %c0_25] : memref<7x256x512xbf16, #tpu.memory_space<vmem>>, vector<1x256x512xbf16>
    %37 = vector.shape_cast %36 : vector<1x256x512xbf16> to vector<256x512xbf16>
    %cst_26 = arith.constant dense<0.000000e+00> : vector<8x512xf32>
    %38 = tpu.matmul %35, %37, %cst_26 {dimension_numbers = #tpu.dot_dimension_numbers<[1], [0], [0], [1], [0, 0, 1, 1], [], []>} : vector<8x256xbf16>, vector<256x512xbf16>, vector<8x512xf32> -> vector<8x512xf32>
    %39 = arith.addf %33, %38 : vector<8x512xf32>
    %40 = vector.extract_strided_slice %28 {offsets = [2, 0, 0], sizes = [1, 8, 256], strides = [1, 1, 1]} : vector<7x8x256xbf16> to vector<1x8x256xbf16>
    %41 = vector.shape_cast %40 : vector<1x8x256xbf16> to vector<8x256xbf16>
    %c2 = arith.constant 2 : index
    %c0_27 = arith.constant 0 : index
    %c0_28 = arith.constant 0 : index
    %42 = vector.load %arg8[%c2, %c0_27, %c0_28] : memref<7x256x512xbf16, #tpu.memory_space<vmem>>, vector<1x256x512xbf16>
    %43 = vector.shape_cast %42 : vector<1x256x512xbf16> to vector<256x512xbf16>
    %cst_29 = arith.constant dense<0.000000e+00> : vector<8x512xf32>
    %44 = tpu.matmul %41, %43, %cst_29 {dimension_numbers = #tpu.dot_dimension_numbers<[1], [0], [0], [1], [0, 0, 1, 1], [], []>} : vector<8x256xbf16>, vector<256x512xbf16>, vector<8x512xf32> -> vector<8x512xf32>
    %45 = arith.addf %39, %44 : vector<8x512xf32>
    %46 = vector.extract_strided_slice %28 {offsets = [3, 0, 0], sizes = [1, 8, 256], strides = [1, 1, 1]} : vector<7x8x256xbf16> to vector<1x8x256xbf16>
    %47 = vector.shape_cast %46 : vector<1x8x256xbf16> to vector<8x256xbf16>
    %c3 = arith.constant 3 : index
    %c0_30 = arith.constant 0 : index
    %c0_31 = arith.constant 0 : index
    %48 = vector.load %arg8[%c3, %c0_30, %c0_31] : memref<7x256x512xbf16, #tpu.memory_space<vmem>>, vector<1x256x512xbf16>
    %49 = vector.shape_cast %48 : vector<1x256x512xbf16> to vector<256x512xbf16>
    %cst_32 = arith.constant dense<0.000000e+00> : vector<8x512xf32>
    %50 = tpu.matmul %47, %49, %cst_32 {dimension_numbers = #tpu.dot_dimension_numbers<[1], [0], [0], [1], [0, 0, 1, 1], [], []>} : vector<8x256xbf16>, vector<256x512xbf16>, vector<8x512xf32> -> vector<8x512xf32>
    %51 = arith.addf %45, %50 : vector<8x512xf32>
    %52 = vector.extract_strided_slice %28 {offsets = [4, 0, 0], sizes = [1, 8, 256], strides = [1, 1, 1]} : vector<7x8x256xbf16> to vector<1x8x256xbf16>
    %53 = vector.shape_cast %52 : vector<1x8x256xbf16> to vector<8x256xbf16>
    %c4 = arith.constant 4 : index
    %c0_33 = arith.constant 0 : index
    %c0_34 = arith.constant 0 : index
    %54 = vector.load %arg8[%c4, %c0_33, %c0_34] : memref<7x256x512xbf16, #tpu.memory_space<vmem>>, vector<1x256x512xbf16>
    %55 = vector.shape_cast %54 : vector<1x256x512xbf16> to vector<256x512xbf16>
    %cst_35 = arith.constant dense<0.000000e+00> : vector<8x512xf32>
    %56 = tpu.matmul %53, %55, %cst_35 {dimension_numbers = #tpu.dot_dimension_numbers<[1], [0], [0], [1], [0, 0, 1, 1], [], []>} : vector<8x256xbf16>, vector<256x512xbf16>, vector<8x512xf32> -> vector<8x512xf32>
    %57 = arith.addf %51, %56 : vector<8x512xf32>
    %58 = vector.extract_strided_slice %28 {offsets = [5, 0, 0], sizes = [1, 8, 256], strides = [1, 1, 1]} : vector<7x8x256xbf16> to vector<1x8x256xbf16>
    %59 = vector.shape_cast %58 : vector<1x8x256xbf16> to vector<8x256xbf16>
    %c5 = arith.constant 5 : index
    %c0_36 = arith.constant 0 : index
    %c0_37 = arith.constant 0 : index
    %60 = vector.load %arg8[%c5, %c0_36, %c0_37] : memref<7x256x512xbf16, #tpu.memory_space<vmem>>, vector<1x256x512xbf16>
    %61 = vector.shape_cast %60 : vector<1x256x512xbf16> to vector<256x512xbf16>
    %cst_38 = arith.constant dense<0.000000e+00> : vector<8x512xf32>
    %62 = tpu.matmul %59, %61, %cst_38 {dimension_numbers = #tpu.dot_dimension_numbers<[1], [0], [0], [1], [0, 0, 1, 1], [], []>} : vector<8x256xbf16>, vector<256x512xbf16>, vector<8x512xf32> -> vector<8x512xf32>
    %63 = arith.addf %57, %62 : vector<8x512xf32>
    %64 = vector.extract_strided_slice %28 {offsets = [6, 0, 0], sizes = [1, 8, 256], strides = [1, 1, 1]} : vector<7x8x256xbf16> to vector<1x8x256xbf16>
    %65 = vector.shape_cast %64 : vector<1x8x256xbf16> to vector<8x256xbf16>
    %c6 = arith.constant 6 : index
    %c0_39 = arith.constant 0 : index
    %c0_40 = arith.constant 0 : index
    %66 = vector.load %arg8[%c6, %c0_39, %c0_40] : memref<7x256x512xbf16, #tpu.memory_space<vmem>>, vector<1x256x512xbf16>
    %67 = vector.shape_cast %66 : vector<1x256x512xbf16> to vector<256x512xbf16>
    %cst_41 = arith.constant dense<0.000000e+00> : vector<8x512xf32>
    %68 = tpu.matmul %65, %67, %cst_41 {dimension_numbers = #tpu.dot_dimension_numbers<[1], [0], [0], [1], [0, 0, 1, 1], [], []>} : vector<8x256xbf16>, vector<256x512xbf16>, vector<8x512xf32> -> vector<8x512xf32>
    %69 = arith.addf %63, %68 : vector<8x512xf32>
    %c0_42 = arith.constant 0 : index
    %c0_43 = arith.constant 0 : index
    %70 = vector.load %arg9[%c0_42, %c0_43] : memref<1x512xf32, #tpu.memory_space<vmem>>, vector<1x512xf32>
    %71 = vector.broadcast %70 : vector<1x512xf32> to vector<8x512xf32>
    %72 = arith.addf %69, %71 : vector<8x512xf32>
    %cst_44 = arith.constant 0.000000e+00 : f32
    %73 = vector.broadcast %cst_44 : f32 to vector<8x512xf32>
    %74 = arith.maximumf %72, %73 : vector<8x512xf32>
    %75 = arith.truncf %74 : vector<8x512xf32> to vector<8x512xbf16>
    %c0_45 = arith.constant 0 : index
    %c0_46 = arith.constant 0 : index
    %76 = vector.load %arg10[%c0_45, %c0_46] : memref<512x128xbf16, #tpu.memory_space<vmem>>, vector<512x128xbf16>
    %cst_47 = arith.constant dense<0.000000e+00> : vector<8x128xf32>
    %77 = tpu.matmul %75, %76, %cst_47 {dimension_numbers = #tpu.dot_dimension_numbers<[1], [0], [0], [1], [0, 0, 1, 1], [], []>} : vector<8x512xbf16>, vector<512x128xbf16>, vector<8x128xf32> -> vector<8x128xf32>
    %c0_48 = arith.constant 0 : index
    %c0_49 = arith.constant 0 : index
    %78 = vector.load %arg11[%c0_48, %c0_49] : memref<1x128xf32, #tpu.memory_space<vmem>>, vector<1x128xf32>
    %79 = vector.broadcast %78 : vector<1x128xf32> to vector<8x128xf32>
    %80 = arith.addf %77, %79 : vector<8x128xf32>
    %cst_50 = arith.constant dense<0xFF800000> : vector<8xf32>
    %81 = vector.multi_reduction <maximumf>, %80, %cst_50 [1] : vector<8x128xf32> to vector<8xf32>
    %82 = vector.shape_cast %81 : vector<8xf32> to vector<8x1xf32>
    %83 = vector.broadcast %82 : vector<8x1xf32> to vector<8x128xf32>
    %84 = arith.subf %80, %83 : vector<8x128xf32>
    %85 = math.exp %84 : vector<8x128xf32>
    %cst_51 = arith.constant dense<0.000000e+00> : vector<8xf32>
    %86 = vector.multi_reduction <add>, %85, %cst_51 [1] : vector<8x128xf32> to vector<8xf32>
    %87 = vector.shape_cast %86 : vector<8xf32> to vector<8x1xf32>
    %88 = tpu.reciprocal %87 {approx = true} : vector<8x1xf32> -> vector<8x1xf32>
    %89 = vector.broadcast %88 : vector<8x1xf32> to vector<8x128xf32>
    %90 = arith.mulf %85, %89 : vector<8x128xf32>
    %c0_52 = arith.constant 0 : index
    %c0_53 = arith.constant 0 : index
    %91 = vector.load %arg12[%c0_52, %c0_53] : memref<8x128xf32, #tpu.memory_space<vmem>>, vector<8x128xf32>
    tpu.vector_store %arg12[%c0_52, %c0_53], %90 {strides = array<i32>} : memref<8x128xf32, #tpu.memory_space<vmem>>, vector<8x128xf32>,
    return
  }
  func.func @transform_0(%arg0: i32) -> (i32, i32, i32) {
    %c0_i32 = arith.constant 0 : i32
    %c0_i32_0 = arith.constant 0 : i32
    %c0_i32_1 = arith.constant 0 : i32
    return %c0_i32, %arg0, %c0_i32_0 : i32, i32, i32
  }
  func.func @transform_1(%arg0: i32) -> (i32, i32, i32) {
    %c0_i32 = arith.constant 0 : i32
    %c0_i32_0 = arith.constant 0 : i32
    %c0_i32_1 = arith.constant 0 : i32
    %c0_i32_2 = arith.constant 0 : i32
    return %c0_i32, %c0_i32_0, %c0_i32_1 : i32, i32, i32
  }
  func.func @transform_2(%arg0: i32) -> (i32, i32, i32) {
    %c0_i32 = arith.constant 0 : i32
    %c0_i32_0 = arith.constant 0 : i32
    %c0_i32_1 = arith.constant 0 : i32
    %c0_i32_2 = arith.constant 0 : i32
    return %c0_i32, %c0_i32_0, %c0_i32_1 : i32, i32, i32
  }
  func.func @transform_3(%arg0: i32) -> (i32, i32) {
    %c0_i32 = arith.constant 0 : i32
    %c0_i32_0 = arith.constant 0 : i32
    %c0_i32_1 = arith.constant 0 : i32
    return %c0_i32, %c0_i32_0 : i32, i32
  }
  func.func @transform_4(%arg0: i32) -> (i32, i32) {
    %c0_i32 = arith.constant 0 : i32
    %c0_i32_0 = arith.constant 0 : i32
    %c0_i32_1 = arith.constant 0 : i32
    return %c0_i32, %c0_i32_0 : i32, i32
  }
  func.func @transform_5(%arg0: i32) -> (i32, i32) {
    %c0_i32 = arith.constant 0 : i32
    %c0_i32_0 = arith.constant 0 : i32
    %c0_i32_1 = arith.constant 0 : i32
    return %c0_i32, %c0_i32_0 : i32, i32
  }
  func.func @transform_6(%arg0: i32) -> (i32, i32) {
    %c0_i32 = arith.constant 0 : i32
    %c0_i32_0 = arith.constant 0 : i32
    %c0_i32_1 = arith.constant 0 : i32
    return %c0_i32, %c0_i32_0 : i32, i32
  }
  func.func @transform_7(%arg0: i32) -> (i32, i32, i32) {
    %c0_i32 = arith.constant 0 : i32
    %c0_i32_0 = arith.constant 0 : i32
    %c0_i32_1 = arith.constant 0 : i32
    %c0_i32_2 = arith.constant 0 : i32
    return %c0_i32, %c0_i32_0, %c0_i32_1 : i32, i32, i32
  }
  func.func @transform_8(%arg0: i32) -> (i32, i32) {
    %c0_i32 = arith.constant 0 : i32
    %c0_i32_0 = arith.constant 0 : i32
    %c0_i32_1 = arith.constant 0 : i32
    return %c0_i32, %c0_i32_0 : i32, i32
  }
  func.func @transform_9(%arg0: i32) -> (i32, i32) {
    %c0_i32 = arith.constant 0 : i32
    %c0_i32_0 = arith.constant 0 : i32
    %c0_i32_1 = arith.constant 0 : i32
    return %c0_i32, %c0_i32_0 : i32, i32
  }
  func.func @transform_10(%arg0: i32) -> (i32, i32) {
    %c0_i32 = arith.constant 0 : i32
    %c0_i32_0 = arith.constant 0 : i32
    %c0_i32_1 = arith.constant 0 : i32
    return %c0_i32, %c0_i32_0 : i32, i32
  }
  func.func @transform_11(%arg0: i32) -> (i32, i32) {
    %c0_i32 = arith.constant 0 : i32
    %c0_i32_0 = arith.constant 0 : i32
    return %arg0, %c0_i32 : i32, i32
  }
}

</mosaic_0001>

<llo_original>
// kernel: tpu_custom_call.1
$region0: #{tpu_custom_call.1}
  #allocation0 [shape = 'u32[]', space=smem, size = 0x4, offset = 0x4, fixed_abs, tag = 'smem constant byte address 0x4 - core index']
  #allocation1 [shape = 'u32[144,128]{1,0:T(1,128)}', space=vmem, size = 0x12000, scoped, tag = 'internal scratch']
  %s0 = inlined_call_operand.vmem [shape: f32[7,8,1], index: 0, kind: input, shape index: {}]
  %s1 = inlined_call_operand.hbm [shape: f32[7,1,128], index: 1, kind: input, shape index: {}]
  %s2 = inlined_call_operand.hbm [shape: f32[7,1,128], index: 2, kind: input, shape index: {}]
  %s3 = inlined_call_operand.hbm [shape: bf16[128,256], index: 3, kind: input, shape index: {}]
  %s4 = inlined_call_operand.hbm [shape: f32[1,256], index: 4, kind: input, shape index: {}]
  %s5 = inlined_call_operand.hbm [shape: bf16[256,256], index: 5, kind: input, shape index: {}]
  %s6 = inlined_call_operand.hbm [shape: f32[1,256], index: 6, kind: input, shape index: {}]
  %s7 = inlined_call_operand.hbm [shape: bf16[7,256,512], index: 7, kind: input, shape index: {}]
  %s8 = inlined_call_operand.hbm [shape: f32[1,512], index: 8, kind: input, shape index: {}]
  %s9 = inlined_call_operand.hbm [shape: bf16[512,128], index: 9, kind: input, shape index: {}]
  %s10 = inlined_call_operand.hbm [shape: f32[1,128], index: 10, kind: input, shape index: {}]
  %s11 = inlined_call_operand.hbm [shape: f32[8,128], index: 11, kind: output, shape index: {}]
  %s12 = sld [smem:[#allocation0]]
  $region94: #{tpu_custom_call.1} parent=0
    _
  %s14 = ssub.s32 1, %s12
  %s15 = scalar_select 0, %s14, %s12
  $region1: #{tpu_custom_call.1} parent=0
    #allocation2 [shape = 'u8[3584]{0}', space=vmem, size = 0x1000, scoped, tag = 'input window, operand 1, single buffered']
    #allocation3 [shape = 's32[1]{0}', space=sflag, size = 0x4, scoped, tag = 'scoped memory for tpu_custom_call.1']
    #allocation4 [shape = 's32[1]{0}', space=sflag, size = 0x4, scoped, tag = 'scoped memory for tpu_custom_call.1']
    #allocation5 [shape = 'u8[3584]{0}', space=vmem, size = 0x1000, scoped, tag = 'input window, operand 2, single buffered']
    #allocation6 [shape = 's32[1]{0}', space=sflag, size = 0x4, scoped, tag = 'scoped memory for tpu_custom_call.1']
    #allocation7 [shape = 'u8[65536]{0}', space=vmem, size = 0x10000, scoped, tag = 'input window, operand 3, single buffered']
    #allocation8 [shape = 'u8[1024]{0}', space=vmem, size = 0x400, scoped, tag = 'input window, operand 4, single buffered']
    #allocation9 [shape = 's32[1]{0}', space=sflag, size = 0x4, scoped, tag = 'scoped memory for tpu_custom_call.1']
    #allocation10 [shape = 'u8[131072]{0}', space=vmem, size = 0x20000, scoped, tag = 'input window, operand 5, single buffered']
    #allocation11 [shape = 'u8[1024]{0}', space=vmem, size = 0x400, scoped, tag = 'input window, operand 6, single buffered']
    #allocation12 [shape = 's32[1]{0}', space=sflag, size = 0x4, scoped, tag = 'scoped memory for tpu_custom_call.1']
    #allocation13 [shape = 'u8[1835008]{0}', space=vmem, size = 0x1c0000, scoped, tag = 'input window, operand 7, single buffered']
    #allocation14 [shape = 'u8[2048]{0}', space=vmem, size = 0x800, scoped, tag = 'input window, operand 8, single buffered']
    #allocation15 [shape = 's32[1]{0}', space=sflag, size = 0x4, scoped, tag = 'scoped memory for tpu_custom_call.1']
    #allocation16 [shape = 'u8[131072]{0}', space=vmem, size = 0x20000, scoped, tag = 'input window, operand 9, single buffered']
    #allocation17 [shape = 'u8[512]{0}', space=vmem, size = 0x400, scoped, tag = 'input window, operand 10, single buffered']
    #allocation18 [shape = 's32[1]{0}', space=sflag, size = 0x4, scoped, tag = 'scoped memory for tpu_custom_call.1']
    #allocation19 [shape = 'u8[4096]{0}', space=vmem, size = 0x1000, scoped, tag = 'output window, operand 0, single buffered']
    %16 = vsyncpa [#allocation3], 0
    %17 = vsyncpa [#allocation6], 0
    %18 = vsyncpa [#allocation9], 0
    %19 = vsyncpa [#allocation12], 0
    %20 = vsyncpa [#allocation15], 0
    %21 = vsyncpa [#allocation18], 0
    %22 = vsyncpa [#allocation4], 0
    // Predicated region
    $region2: #{tpu_custom_call.1} parent=1 // pred_check
      _
    $region3: #{tpu_custom_call.1} parent=1 // pred_check_branch
      %24 = sbr.rel (0) target = $region5
    $region4: #{tpu_custom_call.1} parent=1 // pred_region
      _
    $region5: #{tpu_custom_call.1} parent=1 // pred_fallthru
      _
    // Predicated region
    $region6: #{tpu_custom_call.1} parent=1 // pred_check
      _
    $region7: #{tpu_custom_call.1} parent=1 // pred_check_branch
      %26 = sbr.rel (0) target = $region9
    $region8: #{tpu_custom_call.1} parent=1 // pred_region
      %s28 = ssub.s32 112, 112
      %29 = vsyncadd [#allocation3], %s28
      %s30 = sshll.u32 [#allocation2], 4
      %s31 = int_to_ptr.vmem [resolvable:$true] %s30
      %36 = dma.hbm_to_vmem [thread:$0]  %s1, 112, %s31, [#allocation3], 16, 16, 1
    $region9: #{tpu_custom_call.1} parent=1 // pred_fallthru
      _
    // Predicated region
    $region10: #{tpu_custom_call.1} parent=1 // pred_check
      _
    $region11: #{tpu_custom_call.1} parent=1 // pred_check_branch
      %38 = sbr.rel (0) target = $region13
    $region12: #{tpu_custom_call.1} parent=1 // pred_region
      %s40 = ssub.s32 112, 112
      %41 = vsyncadd [#allocation6], %s40
      %s42 = sshll.u32 [#allocation5], 4
      %s43 = int_to_ptr.vmem [resolvable:$true] %s42
      %48 = dma.hbm_to_vmem [thread:$0]  %s2, 112, %s43, [#allocation6], 16, 16, 1
    $region13: #{tpu_custom_call.1} parent=1 // pred_fallthru
      _
    // Predicated region
    $region14: #{tpu_custom_call.1} parent=1 // pred_check
      _
    $region15: #{tpu_custom_call.1} parent=1 // pred_check_branch
      %50 = sbr.rel (0) target = $region17
    $region16: #{tpu_custom_call.1} parent=1 // pred_region
      %s52 = ssub.s32 2048, 2048
      %53 = vsyncadd [#allocation6], %s52
      %s54 = sshll.u32 [#allocation7], 4
      %s55 = int_to_ptr.vmem [resolvable:$true] %s54
      %60 = dma.hbm_to_vmem [thread:$0]  %s3, 2048, %s55, [#allocation6], 128, 128, 8
    $region17: #{tpu_custom_call.1} parent=1 // pred_fallthru
      _
    // Predicated region
    $region18: #{tpu_custom_call.1} parent=1 // pred_check
      _
    $region19: #{tpu_custom_call.1} parent=1 // pred_check_branch
      %62 = sbr.rel (0) target = $region21
    $region20: #{tpu_custom_call.1} parent=1 // pred_region
      %s64 = ssub.s32 32, 32
      %65 = vsyncadd [#allocation9], %s64
      %s67 = sshll.u32 [#allocation8], 4
      %s68 = int_to_ptr.vmem [resolvable:$true] %s67
      %70 = dma.hbm_to_vmem [thread:$0]  %s4, 32, %s68, [#allocation9]
    $region21: #{tpu_custom_call.1} parent=1 // pred_fallthru
      _
    // Predicated region
    $region22: #{tpu_custom_call.1} parent=1 // pred_check
      _
    $region23: #{tpu_custom_call.1} parent=1 // pred_check_branch
      %72 = sbr.rel (0) target = $region25
    $region24: #{tpu_custom_call.1} parent=1 // pred_region
      %s74 = ssub.s32 4096, 4096
      %75 = vsyncadd [#allocation9], %s74
      %s76 = sshll.u32 [#allocation10], 4
      %s77 = int_to_ptr.vmem [resolvable:$true] %s76
      %82 = dma.hbm_to_vmem [thread:$0]  %s5, 4096, %s77, [#allocation9], 128, 128, 8
    $region25: #{tpu_custom_call.1} parent=1 // pred_fallthru
      _
    // Predicated region
    $region26: #{tpu_custom_call.1} parent=1 // pred_check
      _
    $region27: #{tpu_custom_call.1} parent=1 // pred_check_branch
      %84 = sbr.rel (0) target = $region29
    $region28: #{tpu_custom_call.1} parent=1 // pred_region
      %s86 = ssub.s32 32, 32
      %87 = vsyncadd [#allocation12], %s86
      %s89 = sshll.u32 [#allocation11], 4
      %s90 = int_to_ptr.vmem [resolvable:$true] %s89
      %92 = dma.hbm_to_vmem [thread:$0]  %s6, 32, %s90, [#allocation12]
    $region29: #{tpu_custom_call.1} parent=1 // pred_fallthru
      _
    // Predicated region
    $region30: #{tpu_custom_call.1} parent=1 // pred_check
      _
    $region31: #{tpu_custom_call.1} parent=1 // pred_check_branch
      %94 = sbr.rel (0) target = $region33
    $region32: #{tpu_custom_call.1} parent=1 // pred_region
      %s96 = ssub.s32 57344, 57344
      %97 = vsyncadd [#allocation12], %s96
      %s98 = sshll.u32 [#allocation13], 4
      %s99 = int_to_ptr.vmem [resolvable:$true] %s98
      %104 = dma.hbm_to_vmem [thread:$0]  %s7, 57344, %s99, [#allocation12], 256, 256, 16
    $region33: #{tpu_custom_call.1} parent=1 // pred_fallthru
      _
    // Predicated region
    $region34: #{tpu_custom_call.1} parent=1 // pred_check
      _
    $region35: #{tpu_custom_call.1} parent=1 // pred_check_branch
      %106 = sbr.rel (0) target = $region37
    $region36: #{tpu_custom_call.1} parent=1 // pred_region
      %s108 = ssub.s32 64, 64
      %109 = vsyncadd [#allocation15], %s108
      %s111 = sshll.u32 [#allocation14], 4
      %s112 = int_to_ptr.vmem [resolvable:$true] %s111
      %114 = dma.hbm_to_vmem [thread:$0]  %s8, 64, %s112, [#allocation15]
    $region37: #{tpu_custom_call.1} parent=1 // pred_fallthru
      _
    // Predicated region
    $region38: #{tpu_custom_call.1} parent=1 // pred_check
      _
    $region39: #{tpu_custom_call.1} parent=1 // pred_check_branch
      %116 = sbr.rel (0) target = $region41
    $region40: #{tpu_custom_call.1} parent=1 // pred_region
      %s118 = ssub.s32 4096, 4096
      %119 = vsyncadd [#allocation15], %s118
      %s120 = sshll.u32 [#allocation16], 4
      %s121 = int_to_ptr.vmem [resolvable:$true] %s120
      %126 = dma.hbm_to_vmem [thread:$0]  %s9, 4096, %s121, [#allocation15], 64, 64, 4
    $region41: #{tpu_custom_call.1} parent=1 // pred_fallthru
      _
    // Predicated region
    $region42: #{tpu_custom_call.1} parent=1 // pred_check
      _
    $region43: #{tpu_custom_call.1} parent=1 // pred_check_branch
      %128 = sbr.rel (0) target = $region45
    $region44: #{tpu_custom_call.1} parent=1 // pred_region
      %s130 = ssub.s32 16, 16
      %131 = vsyncadd [#allocation18], %s130
      %s133 = sshll.u32 [#allocation17], 4
      %s134 = int_to_ptr.vmem [resolvable:$true] %s133
      %136 = dma.hbm_to_vmem [thread:$0]  %s10, 16, %s134, [#allocation18]
    $region45: #{tpu_custom_call.1} parent=1 // pred_fallthru
      _
    // Predicated region
    $region46: #{tpu_custom_call.1} parent=1 // pred_check
      _
    $region47: #{tpu_custom_call.1} parent=1 // pred_check_branch
      %138 = sbr.rel (0) target = $region49
    $region48: #{tpu_custom_call.1} parent=1 // pred_region
      %139 = dma.done [#allocation3], 112
    $region49: #{tpu_custom_call.1} parent=1 // pred_fallthru
      _
    // Predicated region
    $region50: #{tpu_custom_call.1} parent=1 // pred_check
      _
    $region51: #{tpu_custom_call.1} parent=1 // pred_check_branch
      %141 = sbr.rel (0) target = $region53
    $region52: #{tpu_custom_call.1} parent=1 // pred_region
      %142 = dma.done [#allocation6], 112
    $region53: #{tpu_custom_call.1} parent=1 // pred_fallthru
      _
    // Predicated region
    $region54: #{tpu_custom_call.1} parent=1 // pred_check
      _
    $region55: #{tpu_custom_call.1} parent=1 // pred_check_branch
      %144 = sbr.rel (0) target = $region57
    $region56: #{tpu_custom_call.1} parent=1 // pred_region
      %145 = dma.done [#allocation6], 2048
    $region57: #{tpu_custom_call.1} parent=1 // pred_fallthru
      _
    // Predicated region
    $region58: #{tpu_custom_call.1} parent=1 // pred_check
      _
    $region59: #{tpu_custom_call.1} parent=1 // pred_check_branch
      %147 = sbr.rel (0) target = $region61
    $region60: #{tpu_custom_call.1} parent=1 // pred_region
      %148 = dma.done [#allocation9], 32
    $region61: #{tpu_custom_call.1} parent=1 // pred_fallthru
      _
    // Predicated region
    $region62: #{tpu_custom_call.1} parent=1 // pred_check
      _
    $region63: #{tpu_custom_call.1} parent=1 // pred_check_branch
      %150 = sbr.rel (0) target = $region65
    $region64: #{tpu_custom_call.1} parent=1 // pred_region
      %151 = dma.done [#allocation9], 4096
    $region65: #{tpu_custom_call.1} parent=1 // pred_fallthru
      _
    // Predicated region
    $region66: #{tpu_custom_call.1} parent=1 // pred_check
      _
    $region67: #{tpu_custom_call.1} parent=1 // pred_check_branch
      %153 = sbr.rel (0) target = $region69
    $region68: #{tpu_custom_call.1} parent=1 // pred_region
      %154 = dma.done [#allocation12], 32
    $region69: #{tpu_custom_call.1} parent=1 // pred_fallthru
      _
    // Predicated region
    $region70: #{tpu_custom_call.1} parent=1 // pred_check
      _
    $region71: #{tpu_custom_call.1} parent=1 // pred_check_branch
      %156 = sbr.rel (0) target = $region73
    $region72: #{tpu_custom_call.1} parent=1 // pred_region
      %157 = dma.done [#allocation12], 57344
    $region73: #{tpu_custom_call.1} parent=1 // pred_fallthru
      _
    // Predicated region
    $region74: #{tpu_custom_call.1} parent=1 // pred_check
      _
    $region75: #{tpu_custom_call.1} parent=1 // pred_check_branch
      %159 = sbr.rel (0) target = $region77
    $region76: #{tpu_custom_call.1} parent=1 // pred_region
      %160 = dma.done [#allocation15], 64
    $region77: #{tpu_custom_call.1} parent=1 // pred_fallthru
      _
    // Predicated region
    $region78: #{tpu_custom_call.1} parent=1 // pred_check
      _
    $region79: #{tpu_custom_call.1} parent=1 // pred_check_branch
      %162 = sbr.rel (0) target = $region81
    $region80: #{tpu_custom_call.1} parent=1 // pred_region
      %163 = dma.done [#allocation15], 4096
    $region81: #{tpu_custom_call.1} parent=1 // pred_fallthru
      _
    // Predicated region
    $region82: #{tpu_custom_call.1} parent=1 // pred_check
      _
    $region83: #{tpu_custom_call.1} parent=1 // pred_check_branch
      %165 = sbr.rel (0) target = $region85
    $region84: #{tpu_custom_call.1} parent=1 // pred_region
      %166 = dma.done [#allocation18], 16
    $region85: #{tpu_custom_call.1} parent=1 // pred_fallthru
      _
    %v168 = vld [vmem:[%s0] sm:$0xff]
    %v169 = vld [vmem:[%s0 + $0x8] sm:$0xff]
    %v170 = vld [vmem:[%s0 + $0x10] sm:$0xff]
    %v171 = vld [vmem:[%s0 + $0x18] sm:$0xff]
    %v172 = vld [vmem:[%s0 + $0x20] sm:$0xff]
    %v173 = vld [vmem:[%s0 + $0x28] sm:$0xff]
    %v174 = vld [vmem:[%s0 + $0x30] sm:$0xff]
    %v175 = vld [vmem:[#allocation2] sm:$0x1]
    %v176 = vld [vmem:[#allocation2 + $0x1] sm:$0x1]
    %v177 = vld [vmem:[#allocation2 + $0x2] sm:$0x1]
    %v178 = vld [vmem:[#allocation2 + $0x3] sm:$0x1]
    %v179 = vld [vmem:[#allocation2 + $0x4] sm:$0x1]
    %v180 = vld [vmem:[#allocation2 + $0x5] sm:$0x1]
    %v181 = vld [vmem:[#allocation2 + $0x6] sm:$0x1]
    %183 = vset.pattern.permute.xlu0 0
    %184 = vperm.xlu0 %183, %v168
    %v185 = vpop.permute.xlu0 %184
    %188 = vset.pattern.permute.xlu0 0
    %189 = vperm.xlu0 %188, %v169
    %v190 = vpop.permute.xlu0 %189
    %193 = vset.pattern.permute.xlu0 0
    %194 = vperm.xlu0 %193, %v170
    %v195 = vpop.permute.xlu0 %194
    %198 = vset.pattern.permute.xlu0 0
    %199 = vperm.xlu0 %198, %v171
    %v200 = vpop.permute.xlu0 %199
    %203 = vset.pattern.permute.xlu0 0
    %204 = vperm.xlu0 %203, %v172
    %v205 = vpop.permute.xlu0 %204
    %208 = vset.pattern.permute.xlu0 0
    %209 = vperm.xlu0 %208, %v173
    %v210 = vpop.permute.xlu0 %209
    %213 = vset.pattern.permute.xlu0 0
    %214 = vperm.xlu0 %213, %v174
    %v215 = vpop.permute.xlu0 %214
    %v224 = vlaneseq
    %v225 = vshrl.u32 %v224, 7
    %v226 = vsub.s32 0, %v225
    %v227 = vrot.slane %v175, %v226
    %v228 = vlaneseq
    %v229 = vshrl.u32 %v228, 7
    %v230 = vsub.s32 0, %v229
    %v231 = vrot.slane %v176, %v230
    %v232 = vlaneseq
    %v233 = vshrl.u32 %v232, 7
    %v234 = vsub.s32 0, %v233
    %v235 = vrot.slane %v177, %v234
    %v236 = vlaneseq
    %v237 = vshrl.u32 %v236, 7
    %v238 = vsub.s32 0, %v237
    %v239 = vrot.slane %v178, %v238
    %v240 = vlaneseq
    %v241 = vshrl.u32 %v240, 7
    %v242 = vsub.s32 0, %v241
    %v243 = vrot.slane %v179, %v242
    %v244 = vlaneseq
    %v245 = vshrl.u32 %v244, 7
    %v246 = vsub.s32 0, %v245
    %v247 = vrot.slane %v180, %v246
    %v248 = vlaneseq
    %v249 = vshrl.u32 %v248, 7
    %v250 = vsub.s32 0, %v249
    %v251 = vrot.slane %v181, %v250
    %v259 = vmul.f32 %v185, %v227
    %v260 = vmul.f32 %v190, %v231
    %v261 = vmul.f32 %v195, %v235
    %v262 = vmul.f32 %v200, %v239
    %v263 = vmul.f32 %v205, %v243
    %v264 = vmul.f32 %v210, %v247
    %v265 = vmul.f32 %v215, %v251
    %v266 = vld [vmem:[#allocation5] sm:$0x1]
    %v267 = vld [vmem:[#allocation5 + $0x1] sm:$0x1]
    %v268 = vld [vmem:[#allocation5 + $0x2] sm:$0x1]
    %v269 = vld [vmem:[#allocation5 + $0x3] sm:$0x1]
    %v270 = vld [vmem:[#allocation5 + $0x4] sm:$0x1]
    %v271 = vld [vmem:[#allocation5 + $0x5] sm:$0x1]
    %v272 = vld [vmem:[#allocation5 + $0x6] sm:$0x1]
    %v280 = vlaneseq
    %v281 = vshrl.u32 %v280, 7
    %v282 = vsub.s32 0, %v281
    %v283 = vrot.slane %v266, %v282
    %v284 = vlaneseq
    %v285 = vshrl.u32 %v284, 7
    %v286 = vsub.s32 0, %v285
    %v287 = vrot.slane %v267, %v286
    %v288 = vlaneseq
    %v289 = vshrl.u32 %v288, 7
    %v290 = vsub.s32 0, %v289
    %v291 = vrot.slane %v268, %v290
    %v292 = vlaneseq
    %v293 = vshrl.u32 %v292, 7
    %v294 = vsub.s32 0, %v293
    %v295 = vrot.slane %v269, %v294
    %v296 = vlaneseq
    %v297 = vshrl.u32 %v296, 7
    %v298 = vsub.s32 0, %v297
    %v299 = vrot.slane %v270, %v298
    %v300 = vlaneseq
    %v301 = vshrl.u32 %v300, 7
    %v302 = vsub.s32 0, %v301
    %v303 = vrot.slane %v271, %v302
    %v304 = vlaneseq
    %v305 = vshrl.u32 %v304, 7
    %v306 = vsub.s32 0, %v305
    %v307 = vrot.slane %v272, %v306
    %v315 = vadd.f32 %v259, %v283
    %v316 = vadd.f32 %v260, %v287
    %v317 = vadd.f32 %v261, %v291
    %v318 = vadd.f32 %v262, %v295
    %v319 = vadd.f32 %v263, %v299
    %v320 = vadd.f32 %v264, %v303
    %v321 = vadd.f32 %v265, %v307
    %v322 = vmax.f32 %v315, 0.0
    %v323 = vmax.f32 %v316, 0.0
    %v324 = vmax.f32 %v317, 0.0
    %v325 = vmax.f32 %v318, 0.0
    %v326 = vmax.f32 %v319, 0.0
    %v327 = vmax.f32 %v320, 0.0
    %v328 = vmax.f32 %v321, 0.0
    %v329 = vpack.c.bf16 %v323, %v322
    %v330 = vpack.c.bf16 %v325, %v324
    %v331 = vpack.c.bf16 %v327, %v326
    %v332 = vpack.c.bf16 %v328, %v328
    %v333 = vld [vmem:[#allocation7] sm:$0xff]
    %v334 = vld [vmem:[#allocation7 + $0x8] sm:$0xff]
    %v335 = vld [vmem:[#allocation7 + $0x10] sm:$0xff]
    %v336 = vld [vmem:[#allocation7 + $0x18] sm:$0xff]
    %v337 = vld [vmem:[#allocation7 + $0x20] sm:$0xff]
    %v338 = vld [vmem:[#allocation7 + $0x28] sm:$0xff]
    %v339 = vld [vmem:[#allocation7 + $0x30] sm:$0xff]
    %v340 = vld [vmem:[#allocation7 + $0x38] sm:$0xff]
    %v341 = vld [vmem:[#allocation7 + $0x40] sm:$0xff]
    %v342 = vld [vmem:[#allocation7 + $0x48] sm:$0xff]
    %v343 = vld [vmem:[#allocation7 + $0x50] sm:$0xff]
    %v344 = vld [vmem:[#allocation7 + $0x58] sm:$0xff]
    %v345 = vld [vmem:[#allocation7 + $0x60] sm:$0xff]
    %v346 = vld [vmem:[#allocation7 + $0x68] sm:$0xff]
    %v347 = vld [vmem:[#allocation7 + $0x70] sm:$0xff]
    %v348 = vld [vmem:[#allocation7 + $0x78] sm:$0xff]
    %v349 = vld [vmem:[#allocation8] sm:$0x3]
    %v351 = vlaneseq
    %v352 = vshrl.u32 %v351, 7
    %v353 = vsub.s32 0, %v352
    %v354 = vrot.slane %v349, %v353
    %v355 = vlaneseq
    %v356 = vshrl.u32 %v355, 7
    %v357 = vsub.s32 1, %v356
    %v358 = vrot.slane %v349, %v357
    %v377 = vunpack.c.l.b16 %v333
    %v378 = vunpack.c.h.b16 %v333
    %v379 = vunpack.c.l.b16 %v334
    %v380 = vunpack.c.h.b16 %v334
    %v381 = vunpack.c.l.b16 %v335
    %v382 = vunpack.c.h.b16 %v335
    %v383 = vunpack.c.l.b16 %v336
    %v384 = vunpack.c.h.b16 %v336
    %v385 = vunpack.c.l.b16 %v337
    %v386 = vunpack.c.h.b16 %v337
    %v387 = vunpack.c.l.b16 %v338
    %v388 = vunpack.c.h.b16 %v338
    %v389 = vunpack.c.l.b16 %v339
    %v390 = vunpack.c.h.b16 %v339
    %v391 = vunpack.c.l.b16 %v340
    %v392 = vunpack.c.h.b16 %v340
    %v393 = vunpack.c.l.b16 %v341
    %v394 = vunpack.c.h.b16 %v341
    %v395 = vunpack.c.l.b16 %v342
    %v396 = vunpack.c.h.b16 %v342
    %v397 = vunpack.c.l.b16 %v343
    %v398 = vunpack.c.h.b16 %v343
    %v399 = vunpack.c.l.b16 %v344
    %v400 = vunpack.c.h.b16 %v344
    %v401 = vunpack.c.l.b16 %v345
    %v402 = vunpack.c.h.b16 %v345
    %v403 = vunpack.c.l.b16 %v346
    %v404 = vunpack.c.h.b16 %v346
    %v405 = vunpack.c.l.b16 %v347
    %v406 = vunpack.c.h.b16 %v347
    %v407 = vunpack.c.l.b16 %v348
    %v408 = vunpack.c.h.b16 %v348
    %v409 = vpack.c.b16 %v379, %v377
    %v410 = vpack.c.b16 %v380, %v378
    %v411 = vpack.c.b16 %v383, %v381
    %v412 = vpack.c.b16 %v384, %v382
    %v413 = vpack.c.b16 %v387, %v385
    %v414 = vpack.c.b16 %v388, %v386
    %v415 = vpack.c.b16 %v391, %v389
    %v416 = vpack.c.b16 %v392, %v390
    %v417 = vpack.c.b16 %v395, %v393
    %v418 = vpack.c.b16 %v396, %v394
    %v419 = vpack.c.b16 %v399, %v397
    %v420 = vpack.c.b16 %v400, %v398
    %v421 = vpack.c.b16 %v403, %v401
    %v422 = vpack.c.b16 %v404, %v402
    %v423 = vpack.c.b16 %v407, %v405
    %v424 = vpack.c.b16 %v408, %v406
    %441 = vmatprep.subr.bf16.mxu0 %v410
    %442 = vmatpush1.bf16.msra.mxu0 %v409
    %443 = vmatprep.subr.bf16.mxu0 %v412
    %444 = vmatpush1.bf16.msra.mxu0 %v411
    %445 = vmatprep.subr.bf16.mxu0 %v414
    %446 = vmatpush1.bf16.msra.mxu0 %v413
    %447 = vmatprep.subr.bf16.mxu0 %v416
    %448 = vmatpush1.bf16.msra.mxu0 %v415
    %449 = vmatprep.subr.bf16.mxu0 %v418
    %450 = vmatpush1.bf16.msra.mxu0 %v417
    %451 = vmatprep.subr.bf16.mxu0 %v420
    %452 = vmatpush1.bf16.msra.mxu0 %v419
    %453 = vmatprep.subr.bf16.mxu0 %v422
    %454 = vmatpush1.bf16.msra.mxu0 %v421
    %455 = vmatprep.subr.bf16.mxu0 %v424
    %456 = vmatpush1.bf16.msra.mxu0 %v423
    %457 = vmatprep.subr.bf16.mxu0 0
    %458 = vmatpush1.bf16.msra.mxu0 0
    %459 = vmatprep.subr.bf16.mxu0 0
    %460 = vmatpush1.bf16.msra.mxu0 0
    %461 = vmatprep.subr.bf16.mxu0 0
    %462 = vmatpush1.bf16.msra.mxu0 0
    %463 = vmatprep.subr.bf16.mxu0 0
    %464 = vmatpush1.bf16.msra.mxu0 0
    %465 = vmatprep.subr.bf16.mxu0 0
    %466 = vmatpush1.bf16.msra.mxu0 0
    %467 = vmatprep.subr.bf16.mxu0 0
    %468 = vmatpush1.bf16.msra.mxu0 0
    %469 = vmatprep.subr.bf16.mxu0 0
    %470 = vmatpush1.bf16.msra.mxu0 0
    %471 = vmatprep.subr.bf16.mxu0 0
    %472 = vmatpush1.bf16.msra.mxu0 0
    %473 = vmatprep.mubr.bf16.mxu0 0
    %474 = vmatmul.mubr.bf16.gmra.mrb[0].mxu0 %v329
    %v475 = vpop.f32.mrb[0].mxu0
    %v476 = vadd.f32 %v354, %v475
    %v477 = vpop.f32.mrb[0].mxu0
    %v478 = vadd.f32 %v358, %v477
    %v479 = vpop.f32.mrb[0].mxu0
    %v480 = vadd.f32 %v354, %v479
    %v481 = vpop.f32.mrb[0].mxu0
    %v482 = vadd.f32 %v358, %v481
    %483 = vmatprep.mubr.bf16.mxu0 0
    %484 = vmatmul.mubr.bf16.gmra.mrb[0].mxu0 %v330
    %v485 = vpop.f32.mrb[0].mxu0
    %v486 = vadd.f32 %v354, %v485
    %v487 = vpop.f32.mrb[0].mxu0
    %v488 = vadd.f32 %v358, %v487
    %v489 = vpop.f32.mrb[0].mxu0
    %v490 = vadd.f32 %v354, %v489
    %v491 = vpop.f32.mrb[0].mxu0
    %v492 = vadd.f32 %v358, %v491
    %493 = vmatprep.mubr.bf16.mxu0 0
    %494 = vmatmul.mubr.bf16.gmra.mrb[0].mxu0 %v331
    %v495 = vpop.f32.mrb[0].mxu0
    %v496 = vadd.f32 %v354, %v495
    %v497 = vpop.f32.mrb[0].mxu0
    %v498 = vadd.f32 %v358, %v497
    %v499 = vpop.f32.mrb[0].mxu0
    %v500 = vadd.f32 %v354, %v499
    %v501 = vpop.f32.mrb[0].mxu0
    %v502 = vadd.f32 %v358, %v501
    %503 = vmatprep.mubr.bf16.mxu0 0
    %504 = vmatmul.mubr.bf16.gmra.mrb[0].mxu0 %v332
    %v505 = vpop.f32.mrb[0].mxu0
    %v506 = vadd.f32 %v354, %v505
    %v507 = vpop.f32.mrb[0].mxu0
    %v508 = vadd.f32 %v358, %v507
    %v509 = vpop.f32.mrb[0].mxu0
    %v510 = vpop.f32.mrb[0].mxu0
    %511 = vdwg.mxu0
    %v512 = vmax.f32 %v476, 0.0
    %v513 = vmax.f32 %v478, 0.0
    %v514 = vmax.f32 %v480, 0.0
    %v515 = vmax.f32 %v482, 0.0
    %v516 = vmax.f32 %v486, 0.0
    %v517 = vmax.f32 %v488, 0.0
    %v518 = vmax.f32 %v490, 0.0
    %v519 = vmax.f32 %v492, 0.0
    %v520 = vmax.f32 %v496, 0.0
    %v521 = vmax.f32 %v498, 0.0
    %v522 = vmax.f32 %v500, 0.0
    %v523 = vmax.f32 %v502, 0.0
    %v524 = vmax.f32 %v506, 0.0
    %v525 = vmax.f32 %v508, 0.0
    %v526 = vpack.c.bf16 %v514, %v512
    %v527 = vpack.c.bf16 %v515, %v513
    %v528 = vpack.c.bf16 %v518, %v516
    %v529 = vpack.c.bf16 %v519, %v517
    %v530 = vpack.c.bf16 %v522, %v520
    %v531 = vpack.c.bf16 %v523, %v521
    %v532 = vpack.c.bf16 %v524, %v524
    %v533 = vpack.c.bf16 %v525, %v525
    %v534 = vld [vmem:[#allocation10] sm:$0xff]
    %v535 = vld [vmem:[#allocation10 + $0x8] sm:$0xff]
    %v536 = vld [vmem:[#allocation10 + $0x10] sm:$0xff]
    %v537 = vld [vmem:[#allocation10 + $0x18] sm:$0xff]
    %v538 = vld [vmem:[#allocation10 + $0x20] sm:$0xff]
    %v539 = vld [vmem:[#allocation10 + $0x28] sm:$0xff]
    %v540 = vld [vmem:[#allocation10 + $0x30] sm:$0xff]
    %v541 = vld [vmem:[#allocation10 + $0x38] sm:$0xff]
    %v542 = vld [vmem:[#allocation10 + $0x40] sm:$0xff]
    %v543 = vld [vmem:[#allocation10 + $0x48] sm:$0xff]
    %v544 = vld [vmem:[#allocation10 + $0x50] sm:$0xff]
    %v545 = vld [vmem:[#allocation10 + $0x58] sm:$0xff]
    %v546 = vld [vmem:[#allocation10 + $0x60] sm:$0xff]
    %v547 = vld [vmem:[#allocation10 + $0x68] sm:$0xff]
    %v548 = vld [vmem:[#allocation10 + $0x70] sm:$0xff]
    %v549 = vld [vmem:[#allocation10 + $0x78] sm:$0xff]
    %v550 = vld [vmem:[#allocation10 + $0x80] sm:$0xff]
    %v551 = vld [vmem:[#allocation10 + $0x88] sm:$0xff]
    %v552 = vld [vmem:[#allocation10 + $0x90] sm:$0xff]
    %v553 = vld [vmem:[#allocation10 + $0x98] sm:$0xff]
    %v554 = vld [vmem:[#allocation10 + $0xa0] sm:$0xff]
    %v555 = vld [vmem:[#allocation10 + $0xa8] sm:$0xff]
    %v556 = vld [vmem:[#allocation10 + $0xb0] sm:$0xff]
    %v557 = vld [vmem:[#allocation10 + $0xb8] sm:$0xff]
    %v558 = vld [vmem:[#allocation10 + $0xc0] sm:$0xff]
    %v559 = vld [vmem:[#allocation10 + $0xc8] sm:$0xff]
    %v560 = vld [vmem:[#allocation10 + $0xd0] sm:$0xff]
    %v561 = vld [vmem:[#allocation10 + $0xd8] sm:$0xff]
    %v562 = vld [vmem:[#allocation10 + $0xe0] sm:$0xff]
    %v563 = vld [vmem:[#allocation10 + $0xe8] sm:$0xff]
    %v564 = vld [vmem:[#allocation10 + $0xf0] sm:$0xff]
    %v565 = vld [vmem:[#allocation10 + $0xf8] sm:$0xff]
    %v566 = vld [vmem:[#allocation11] sm:$0x3]
    %v568 = vlaneseq
    %v569 = vshrl.u32 %v568, 7
    %v570 = vsub.s32 0, %v569
    %v571 = vrot.slane %v566, %v570
    %v572 = vlaneseq
    %v573 = vshrl.u32 %v572, 7
    %v574 = vsub.s32 1, %v573
    %v575 = vrot.slane %v566, %v574
    %v610 = vunpack.c.l.b16 %v534
    %v611 = vunpack.c.h.b16 %v534
    %v612 = vunpack.c.l.b16 %v535
    %v613 = vunpack.c.h.b16 %v535
    %v614 = vunpack.c.l.b16 %v536
    %v615 = vunpack.c.h.b16 %v536
    %v616 = vunpack.c.l.b16 %v537
    %v617 = vunpack.c.h.b16 %v537
    %v618 = vunpack.c.l.b16 %v538
    %v619 = vunpack.c.h.b16 %v538
    %v620 = vunpack.c.l.b16 %v539
    %v621 = vunpack.c.h.b16 %v539
    %v622 = vunpack.c.l.b16 %v540
    %v623 = vunpack.c.h.b16 %v540
    %v624 = vunpack.c.l.b16 %v541
    %v625 = vunpack.c.h.b16 %v541
    %v626 = vunpack.c.l.b16 %v542
    %v627 = vunpack.c.h.b16 %v542
    %v628 = vunpack.c.l.b16 %v543
    %v629 = vunpack.c.h.b16 %v543
    %v630 = vunpack.c.l.b16 %v544
    %v631 = vunpack.c.h.b16 %v544
    %v632 = vunpack.c.l.b16 %v545
    %v633 = vunpack.c.h.b16 %v545
    %v634 = vunpack.c.l.b16 %v546
    %v635 = vunpack.c.h.b16 %v546
    %v636 = vunpack.c.l.b16 %v547
    %v637 = vunpack.c.h.b16 %v547
    %v638 = vunpack.c.l.b16 %v548
    %v639 = vunpack.c.h.b16 %v548
    %v640 = vunpack.c.l.b16 %v549
    %v641 = vunpack.c.h.b16 %v549
    %v642 = vunpack.c.l.b16 %v550
    %v643 = vunpack.c.h.b16 %v550
    %v644 = vunpack.c.l.b16 %v551
    %v645 = vunpack.c.h.b16 %v551
    %v646 = vunpack.c.l.b16 %v552
    %v647 = vunpack.c.h.b16 %v552
    %v648 = vunpack.c.l.b16 %v553
    %v649 = vunpack.c.h.b16 %v553
    %v650 = vunpack.c.l.b16 %v554
    %v651 = vunpack.c.h.b16 %v554
    %v652 = vunpack.c.l.b16 %v555
    %v653 = vunpack.c.h.b16 %v555
    %v654 = vunpack.c.l.b16 %v556
    %v655 = vunpack.c.h.b16 %v556
    %v656 = vunpack.c.l.b16 %v557
    %v657 = vunpack.c.h.b16 %v557
    %v658 = vunpack.c.l.b16 %v558
    %v659 = vunpack.c.h.b16 %v558
    %v660 = vunpack.c.l.b16 %v559
    %v661 = vunpack.c.h.b16 %v559
    %v662 = vunpack.c.l.b16 %v560
    %v663 = vunpack.c.h.b16 %v560
    %v664 = vunpack.c.l.b16 %v561
    %v665 = vunpack.c.h.b16 %v561
    %v666 = vunpack.c.l.b16 %v562
    %v667 = vunpack.c.h.b16 %v562
    %v668 = vunpack.c.l.b16 %v563
    %v669 = vunpack.c.h.b16 %v563
    %v670 = vunpack.c.l.b16 %v564
    %v671 = vunpack.c.h.b16 %v564
    %v672 = vunpack.c.l.b16 %v565
    %v673 = vunpack.c.h.b16 %v565
    %v674 = vpack.c.b16 %v612, %v610
    %v675 = vpack.c.b16 %v613, %v611
    %v676 = vpack.c.b16 %v616, %v614
    %v677 = vpack.c.b16 %v617, %v615
    %v678 = vpack.c.b16 %v620, %v618
    %v679 = vpack.c.b16 %v621, %v619
    %v680 = vpack.c.b16 %v624, %v622
    %v681 = vpack.c.b16 %v625, %v623
    %v682 = vpack.c.b16 %v628, %v626
    %v683 = vpack.c.b16 %v629, %v627
    %v684 = vpack.c.b16 %v632, %v630
    %v685 = vpack.c.b16 %v633, %v631
    %v686 = vpack.c.b16 %v636, %v634
    %v687 = vpack.c.b16 %v637, %v635
    %v688 = vpack.c.b16 %v640, %v638
    %v689 = vpack.c.b16 %v641, %v639
    %v690 = vpack.c.b16 %v644, %v642
    %v691 = vpack.c.b16 %v645, %v643
    %v692 = vpack.c.b16 %v648, %v646
    %v693 = vpack.c.b16 %v649, %v647
    %v694 = vpack.c.b16 %v652, %v650
    %v695 = vpack.c.b16 %v653, %v651
    %v696 = vpack.c.b16 %v656, %v654
    %v697 = vpack.c.b16 %v657, %v655
    %v698 = vpack.c.b16 %v660, %v658
    %v699 = vpack.c.b16 %v661, %v659
    %v700 = vpack.c.b16 %v664, %v662
    %v701 = vpack.c.b16 %v665, %v663
    %v702 = vpack.c.b16 %v668, %v666
    %v703 = vpack.c.b16 %v669, %v667
    %v704 = vpack.c.b16 %v672, %v670
    %v705 = vpack.c.b16 %v673, %v671
    %738 = vmatprep.subr.bf16.mxu0 %v675
    %739 = vmatpush1.bf16.msra.mxu0 %v674
    %740 = vmatprep.subr.bf16.mxu0 %v677
    %741 = vmatpush1.bf16.msra.mxu0 %v676
    %742 = vmatprep.subr.bf16.mxu0 %v679
    %743 = vmatpush1.bf16.msra.mxu0 %v678
    %744 = vmatprep.subr.bf16.mxu0 %v681
    %745 = vmatpush1.bf16.msra.mxu0 %v680
    %746 = vmatprep.subr.bf16.mxu0 %v683
    %747 = vmatpush1.bf16.msra.mxu0 %v682
    %748 = vmatprep.subr.bf16.mxu0 %v685
    %749 = vmatpush1.bf16.msra.mxu0 %v684
    %750 = vmatprep.subr.bf16.mxu0 %v687
    %751 = vmatpush1.bf16.msra.mxu0 %v686
    %752 = vmatprep.subr.bf16.mxu0 %v689
    %753 = vmatpush1.bf16.msra.mxu0 %v688
    %754 = vmatprep.subr.bf16.mxu0 %v691
    %755 = vmatpush1.bf16.msra.mxu0 %v690
    %756 = vmatprep.subr.bf16.mxu0 %v693
    %757 = vmatpush1.bf16.msra.mxu0 %v692
    %758 = vmatprep.subr.bf16.mxu0 %v695
    %759 = vmatpush1.bf16.msra.mxu0 %v694
    %760 = vmatprep.subr.bf16.mxu0 %v697
    %761 = vmatpush1.bf16.msra.mxu0 %v696
    %762 = vmatprep.subr.bf16.mxu0 %v699
    %763 = vmatpush1.bf16.msra.mxu0 %v698
    %764 = vmatprep.subr.bf16.mxu0 %v701
    %765 = vmatpush1.bf16.msra.mxu0 %v700
    %766 = vmatprep.subr.bf16.mxu0 %v703
    %767 = vmatpush1.bf16.msra.mxu0 %v702
    %768 = vmatprep.subr.bf16.mxu0 %v705
    %769 = vmatpush1.bf16.msra.mxu0 %v704
    %770 = vmatprep.mubr.bf16.mxu0 %v527
    %771 = vmatmul.mubr.bf16.gmra.mrb[0].mxu0 %v526
    %v772 = vpop.f32.mrb[0].mxu0
    %v773 = vadd.f32 %v571, %v772
    %v774 = vpop.f32.mrb[0].mxu0
    %v775 = vadd.f32 %v575, %v774
    %v776 = vpop.f32.mrb[0].mxu0
    %v777 = vadd.f32 %v571, %v776
    %v778 = vpop.f32.mrb[0].mxu0
    %v779 = vadd.f32 %v575, %v778
    %780 = vmatprep.mubr.bf16.mxu0 %v529
    %781 = vmatmul.mubr.bf16.gmra.mrb[0].mxu0 %v528
    %v782 = vpop.f32.mrb[0].mxu0
    %v783 = vadd.f32 %v571, %v782
    %v784 = vpop.f32.mrb[0].mxu0
    %v785 = vadd.f32 %v575, %v784
    %v786 = vpop.f32.mrb[0].mxu0
    %v787 = vadd.f32 %v571, %v786
    %v788 = vpop.f32.mrb[0].mxu0
    %v789 = vadd.f32 %v575, %v788
    %790 = vmatprep.mubr.bf16.mxu0 %v531
    %791 = vmatmul.mubr.bf16.gmra.mrb[0].mxu0 %v530
    %v792 = vpop.f32.mrb[0].mxu0
    %v793 = vadd.f32 %v571, %v792
    %v794 = vpop.f32.mrb[0].mxu0
    %v795 = vadd.f32 %v575, %v794
    %v796 = vpop.f32.mrb[0].mxu0
    %v797 = vadd.f32 %v571, %v796
    %v798 = vpop.f32.mrb[0].mxu0
    %v799 = vadd.f32 %v575, %v798
    %800 = vmatprep.mubr.bf16.mxu0 %v533
    %801 = vmatmul.mubr.bf16.gmra.mrb[0].mxu0 %v532
    %v802 = vpop.f32.mrb[0].mxu0
    %v803 = vadd.f32 %v571, %v802
    %v804 = vpop.f32.mrb[0].mxu0
    %v805 = vadd.f32 %v575, %v804
    %v806 = vpop.f32.mrb[0].mxu0
    %v807 = vpop.f32.mrb[0].mxu0
    %808 = vdwg.mxu0
    %v809 = vmax.f32 %v773, 0.0
    %v810 = vmax.f32 %v775, 0.0
    %v811 = vmax.f32 %v777, 0.0
    %v812 = vmax.f32 %v779, 0.0
    %v813 = vmax.f32 %v783, 0.0
    %v814 = vmax.f32 %v785, 0.0
    %v815 = vmax.f32 %v787, 0.0
    %v816 = vmax.f32 %v789, 0.0
    %v817 = vmax.f32 %v793, 0.0
    %v818 = vmax.f32 %v795, 0.0
    %v819 = vmax.f32 %v797, 0.0
    %v820 = vmax.f32 %v799, 0.0
    %v821 = vmax.f32 %v803, 0.0
    %v822 = vmax.f32 %v805, 0.0
    %v823 = vpack.c.bf16 %v809, %v809
    %v824 = vpack.c.bf16 %v810, %v810
    %v825 = vpack.c.bf16 %v811, %v811
    %v826 = vpack.c.bf16 %v812, %v812
    %v827 = vpack.c.bf16 %v813, %v813
    %v828 = vpack.c.bf16 %v814, %v814
    %v829 = vpack.c.bf16 %v815, %v815
    %v830 = vpack.c.bf16 %v816, %v816
    %v831 = vpack.c.bf16 %v817, %v817
    %v832 = vpack.c.bf16 %v818, %v818
    %v833 = vpack.c.bf16 %v819, %v819
    %v834 = vpack.c.bf16 %v820, %v820
    %v835 = vpack.c.bf16 %v821, %v821
    %v836 = vpack.c.bf16 %v822, %v822
    %v837 = vld [vmem:[#allocation13] sm:$0xff]
    %v838 = vld [vmem:[#allocation13 + $0x8] sm:$0xff]
    %v839 = vld [vmem:[#allocation13 + $0x10] sm:$0xff]
    %v840 = vld [vmem:[#allocation13 + $0x18] sm:$0xff]
    %v841 = vld [vmem:[#allocation13 + $0x20] sm:$0xff]
    %v842 = vld [vmem:[#allocation13 + $0x28] sm:$0xff]
    %v843 = vld [vmem:[#allocation13 + $0x30] sm:$0xff]
    %v844 = vld [vmem:[#allocation13 + $0x38] sm:$0xff]
    %v845 = vld [vmem:[#allocation13 + $0x40] sm:$0xff]
    %v846 = vld [vmem:[#allocation13 + $0x48] sm:$0xff]
    %v847 = vld [vmem:[#allocation13 + $0x50] sm:$0xff]
    %v848 = vld [vmem:[#allocation13 + $0x58] sm:$0xff]
    %v849 = vld [vmem:[#allocation13 + $0x60] sm:$0xff]
    %v850 = vld [vmem:[#allocation13 + $0x68] sm:$0xff]
    %v851 = vld [vmem:[#allocation13 + $0x70] sm:$0xff]
    %v852 = vld [vmem:[#allocation13 + $0x78] sm:$0xff]
    %v853 = vld [vmem:[#allocation13 + $0x80] sm:$0xff]
    %v854 = vld [vmem:[#allocation13 + $0x88] sm:$0xff]
    %v855 = vld [vmem:[#allocation13 + $0x90] sm:$0xff]
    %v856 = vld [vmem:[#allocation13 + $0x98] sm:$0xff]
    %v857 = vld [vmem:[#allocation13 + $0xa0] sm:$0xff]
    %v858 = vld [vmem:[#allocation13 + $0xa8] sm:$0xff]
    %v859 = vld [vmem:[#allocation13 + $0xb0] sm:$0xff]
    %v860 = vld [vmem:[#allocation13 + $0xb8] sm:$0xff]
    %v861 = vld [vmem:[#allocation13 + $0xc0] sm:$0xff]
    %v862 = vld [vmem:[#allocation13 + $0xc8] sm:$0xff]
    %v863 = vld [vmem:[#allocation13 + $0xd0] sm:$0xff]
    %v864 = vld [vmem:[#allocation13 + $0xd8] sm:$0xff]
    %v865 = vld [vmem:[#allocation13 + $0xe0] sm:$0xff]
    %v866 = vld [vmem:[#allocation13 + $0xe8] sm:$0xff]
    %v867 = vld [vmem:[#allocation13 + $0xf0] sm:$0xff]
    %v868 = vld [vmem:[#allocation13 + $0xf8] sm:$0xff]
    %v869 = vld [vmem:[#allocation13 + $0x100] sm:$0xff]
    %v870 = vld [vmem:[#allocation13 + $0x108] sm:$0xff]
    %v871 = vld [vmem:[#allocation13 + $0x110] sm:$0xff]
    %v872 = vld [vmem:[#allocation13 + $0x118] sm:$0xff]
    %v873 = vld [vmem:[#allocation13 + $0x120] sm:$0xff]
    %v874 = vld [vmem:[#allocation13 + $0x128] sm:$0xff]
    %v875 = vld [vmem:[#allocation13 + $0x130] sm:$0xff]
    %v876 = vld [vmem:[#allocation13 + $0x138] sm:$0xff]
    %v877 = vld [vmem:[#allocation13 + $0x140] sm:$0xff]
    %v878 = vld [vmem:[#allocation13 + $0x148] sm:$0xff]
    %v879 = vld [vmem:[#allocation13 + $0x150] sm:$0xff]
    %v880 = vld [vmem:[#allocation13 + $0x158] sm:$0xff]
    %v881 = vld [vmem:[#allocation13 + $0x160] sm:$0xff]
    %v882 = vld [vmem:[#allocation13 + $0x168] sm:$0xff]
    %v883 = vld [vmem:[#allocation13 + $0x170] sm:$0xff]
    %v884 = vld [vmem:[#allocation13 + $0x178] sm:$0xff]
    %v885 = vld [vmem:[#allocation13 + $0x180] sm:$0xff]
    %v886 = vld [vmem:[#allocation13 + $0x188] sm:$0xff]
    %v887 = vld [vmem:[#allocation13 + $0x190] sm:$0xff]
    %v888 = vld [vmem:[#allocation13 + $0x198] sm:$0xff]
    %v889 = vld [vmem:[#allocation13 + $0x1a0] sm:$0xff]
    %v890 = vld [vmem:[#allocation13 + $0x1a8] sm:$0xff]
    %v891 = vld [vmem:[#allocation13 + $0x1b0] sm:$0xff]
    %v892 = vld [vmem:[#allocation13 + $0x1b8] sm:$0xff]
    %v893 = vld [vmem:[#allocation13 + $0x1c0] sm:$0xff]
    %v894 = vld [vmem:[#allocation13 + $0x1c8] sm:$0xff]
    %v895 = vld [vmem:[#allocation13 + $0x1d0] sm:$0xff]
    %v896 = vld [vmem:[#allocation13 + $0x1d8] sm:$0xff]
    %v897 = vld [vmem:[#allocation13 + $0x1e0] sm:$0xff]
    %v898 = vld [vmem:[#allocation13 + $0x1e8] sm:$0xff]
    %v899 = vld [vmem:[#allocation13 + $0x1f0] sm:$0xff]
    %v900 = vld [vmem:[#allocation13 + $0x1f8] sm:$0xff]
    %s901 = scalar_lea.vmem [#allocation13], 512
    %v902 = vld [vmem:[%s901] sm:$0xff]
    %v903 = vld [vmem:[%s901 + $0x8] sm:$0xff]
    %v904 = vld [vmem:[%s901 + $0x10] sm:$0xff]
    %v905 = vld [vmem:[%s901 + $0x18] sm:$0xff]
    %v906 = vld [vmem:[%s901 + $0x20] sm:$0xff]
    %v907 = vld [vmem:[%s901 + $0x28] sm:$0xff]
    %v908 = vld [vmem:[%s901 + $0x30] sm:$0xff]
    %v909 = vld [vmem:[%s901 + $0x38] sm:$0xff]
    %v910 = vld [vmem:[%s901 + $0x40] sm:$0xff]
    %v911 = vld [vmem:[%s901 + $0x48] sm:$0xff]
    %v912 = vld [vmem:[%s901 + $0x50] sm:$0xff]
    %v913 = vld [vmem:[%s901 + $0x58] sm:$0xff]
    %v914 = vld [vmem:[%s901 + $0x60] sm:$0xff]
    %v915 = vld [vmem:[%s901 + $0x68] sm:$0xff]
    %v916 = vld [vmem:[%s901 + $0x70] sm:$0xff]
    %v917 = vld [vmem:[%s901 + $0x78] sm:$0xff]
    %v918 = vld [vmem:[%s901 + $0x80] sm:$0xff]
    %v919 = vld [vmem:[%s901 + $0x88] sm:$0xff]
    %v920 = vld [vmem:[%s901 + $0x90] sm:$0xff]
    %v921 = vld [vmem:[%s901 + $0x98] sm:$0xff]
    %v922 = vld [vmem:[%s901 + $0xa0] sm:$0xff]
    %v923 = vld [vmem:[%s901 + $0xa8] sm:$0xff]
    %v924 = vld [vmem:[%s901 + $0xb0] sm:$0xff]
    %v925 = vld [vmem:[%s901 + $0xb8] sm:$0xff]
    %v926 = vld [vmem:[%s901 + $0xc0] sm:$0xff]
    %v927 = vld [vmem:[%s901 + $0xc8] sm:$0xff]
    %v928 = vld [vmem:[%s901 + $0xd0] sm:$0xff]
    %v929 = vld [vmem:[%s901 + $0xd8] sm:$0xff]
    %v930 = vld [vmem:[%s901 + $0xe0] sm:$0xff]
    %v931 = vld [vmem:[%s901 + $0xe8] sm:$0xff]
    %v932 = vld [vmem:[%s901 + $0xf0] sm:$0xff]
    %v933 = vld [vmem:[%s901 + $0xf8] sm:$0xff]
    %v934 = vld [vmem:[%s901 + $0x100] sm:$0xff]
    %v935 = vld [vmem:[%s901 + $0x108] sm:$0xff]
    %v936 = vld [vmem:[%s901 + $0x110] sm:$0xff]
    %v937 = vld [vmem:[%s901 + $0x118] sm:$0xff]
    %v938 = vld [vmem:[%s901 + $0x120] sm:$0xff]
    %v939 = vld [vmem:[%s901 + $0x128] sm:$0xff]
    %v940 = vld [vmem:[%s901 + $0x130] sm:$0xff]
    %v941 = vld [vmem:[%s901 + $0x138] sm:$0xff]
    %v942 = vld [vmem:[%s901 + $0x140] sm:$0xff]
    %v943 = vld [vmem:[%s901 + $0x148] sm:$0xff]
    %v944 = vld [vmem:[%s901 + $0x150] sm:$0xff]
    %v945 = vld [vmem:[%s901 + $0x158] sm:$0xff]
    %v946 = vld [vmem:[%s901 + $0x160] sm:$0xff]
    %v947 = vld [vmem:[%s901 + $0x168] sm:$0xff]
    %v948 = vld [vmem:[%s901 + $0x170] sm:$0xff]
    %v949 = vld [vmem:[%s901 + $0x178] sm:$0xff]
    %v950 = vld [vmem:[%s901 + $0x180] sm:$0xff]
    %v951 = vld [vmem:[%s901 + $0x188] sm:$0xff]
    %v952 = vld [vmem:[%s901 + $0x190] sm:$0xff]
    %v953 = vld [vmem:[%s901 + $0x198] sm:$0xff]
    %v954 = vld [vmem:[%s901 + $0x1a0] sm:$0xff]
    %v955 = vld [vmem:[%s901 + $0x1a8] sm:$0xff]
    %v956 = vld [vmem:[%s901 + $0x1b0] sm:$0xff]
    %v957 = vld [vmem:[%s901 + $0x1b8] sm:$0xff]
    %v958 = vld [vmem:[%s901 + $0x1c0] sm:$0xff]
    %v959 = vld [vmem:[%s901 + $0x1c8] sm:$0xff]
    %v960 = vld [vmem:[%s901 + $0x1d0] sm:$0xff]
    %v961 = vld [vmem:[%s901 + $0x1d8] sm:$0xff]
    %v962 = vld [vmem:[%s901 + $0x1e0] sm:$0xff]
    %v963 = vld [vmem:[%s901 + $0x1e8] sm:$0xff]
    %v964 = vld [vmem:[%s901 + $0x1f0] sm:$0xff]
    %v965 = vld [vmem:[%s901 + $0x1f8] sm:$0xff]
    %v1030 = vunpack.c.l.b16 %v902
    %v1031 = vunpack.c.h.b16 %v902
    %v1032 = vunpack.c.l.b16 %v903
    %v1033 = vunpack.c.h.b16 %v903
    %v1034 = vunpack.c.l.b16 %v904
    %v1035 = vunpack.c.h.b16 %v904
    %v1036 = vunpack.c.l.b16 %v905
    %v1037 = vunpack.c.h.b16 %v905
    %v1038 = vunpack.c.l.b16 %v906
    %v1039 = vunpack.c.h.b16 %v906
    %v1040 = vunpack.c.l.b16 %v907
    %v1041 = vunpack.c.h.b16 %v907
    %v1042 = vunpack.c.l.b16 %v908
    %v1043 = vunpack.c.h.b16 %v908
    %v1044 = vunpack.c.l.b16 %v909
    %v1045 = vunpack.c.h.b16 %v909
    %v1046 = vunpack.c.l.b16 %v910
    %v1047 = vunpack.c.h.b16 %v910
    %v1048 = vunpack.c.l.b16 %v911
    %v1049 = vunpack.c.h.b16 %v911
    %v1050 = vunpack.c.l.b16 %v912
    %v1051 = vunpack.c.h.b16 %v912
    %v1052 = vunpack.c.l.b16 %v913
    %v1053 = vunpack.c.h.b16 %v913
    %v1054 = vunpack.c.l.b16 %v914
    %v1055 = vunpack.c.h.b16 %v914
    %v1056 = vunpack.c.l.b16 %v915
    %v1057 = vunpack.c.h.b16 %v915
    %v1058 = vunpack.c.l.b16 %v916
    %v1059 = vunpack.c.h.b16 %v916
    %v1060 = vunpack.c.l.b16 %v917
    %v1061 = vunpack.c.h.b16 %v917
    %v1062 = vunpack.c.l.b16 %v918
    %v1063 = vunpack.c.h.b16 %v918
    %v1064 = vunpack.c.l.b16 %v919
    %v1065 = vunpack.c.h.b16 %v919
    %v1066 = vunpack.c.l.b16 %v920
    %v1067 = vunpack.c.h.b16 %v920
    %v1068 = vunpack.c.l.b16 %v921
    %v1069 = vunpack.c.h.b16 %v921
    %v1070 = vunpack.c.l.b16 %v922
    %v1071 = vunpack.c.h.b16 %v922
    %v1072 = vunpack.c.l.b16 %v923
    %v1073 = vunpack.c.h.b16 %v923
    %v1074 = vunpack.c.l.b16 %v924
    %v1075 = vunpack.c.h.b16 %v924
    %v1076 = vunpack.c.l.b16 %v925
    %v1077 = vunpack.c.h.b16 %v925
    %v1078 = vunpack.c.l.b16 %v926
    %v1079 = vunpack.c.h.b16 %v926
    %v1080 = vunpack.c.l.b16 %v927
    %v1081 = vunpack.c.h.b16 %v927
    %v1082 = vunpack.c.l.b16 %v928
    %v1083 = vunpack.c.h.b16 %v928
    %v1084 = vunpack.c.l.b16 %v929
    %v1085 = vunpack.c.h.b16 %v929
    %v1086 = vunpack.c.l.b16 %v930
    %v1087 = vunpack.c.h.b16 %v930
    %v1088 = vunpack.c.l.b16 %v931
    %v1089 = vunpack.c.h.b16 %v931
    %v1090 = vunpack.c.l.b16 %v932
    %v1091 = vunpack.c.h.b16 %v932
    %v1092 = vunpack.c.l.b16 %v933
    %v1093 = vunpack.c.h.b16 %v933
    %v1094 = vunpack.c.l.b16 %v934
    %v1095 = vunpack.c.h.b16 %v934
    %v1096 = vunpack.c.l.b16 %v935
    %v1097 = vunpack.c.h.b16 %v935
    %v1098 = vunpack.c.l.b16 %v936
    %v1099 = vunpack.c.h.b16 %v936
    %v1100 = vunpack.c.l.b16 %v937
    %v1101 = vunpack.c.h.b16 %v937
    %v1102 = vunpack.c.l.b16 %v938
    %v1103 = vunpack.c.h.b16 %v938
    %v1104 = vunpack.c.l.b16 %v939
    %v1105 = vunpack.c.h.b16 %v939
    %v1106 = vunpack.c.l.b16 %v940
    %v1107 = vunpack.c.h.b16 %v940
    %v1108 = vunpack.c.l.b16 %v941
    %v1109 = vunpack.c.h.b16 %v941
    %v1110 = vunpack.c.l.b16 %v942
    %v1111 = vunpack.c.h.b16 %v942
    %v1112 = vunpack.c.l.b16 %v943
    %v1113 = vunpack.c.h.b16 %v943
    %v1114 = vunpack.c.l.b16 %v944
    %v1115 = vunpack.c.h.b16 %v944
    %v1116 = vunpack.c.l.b16 %v945
    %v1117 = vunpack.c.h.b16 %v945
    %v1118 = vunpack.c.l.b16 %v946
    %v1119 = vunpack.c.h.b16 %v946
    %v1120 = vunpack.c.l.b16 %v947
    %v1121 = vunpack.c.h.b16 %v947
    %v1122 = vunpack.c.l.b16 %v948
    %v1123 = vunpack.c.h.b16 %v948
    %v1124 = vunpack.c.l.b16 %v949
    %v1125 = vunpack.c.h.b16 %v949
    %v1126 = vunpack.c.l.b16 %v950
    %v1127 = vunpack.c.h.b16 %v950
    %v1128 = vunpack.c.l.b16 %v951
    %v1129 = vunpack.c.h.b16 %v951
    %v1130 = vunpack.c.l.b16 %v952
    %v1131 = vunpack.c.h.b16 %v952
    %v1132 = vunpack.c.l.b16 %v953
    %v1133 = vunpack.c.h.b16 %v953
    %v1134 = vunpack.c.l.b16 %v954
    %v1135 = vunpack.c.h.b16 %v954
    %v1136 = vunpack.c.l.b16 %v955
    %v1137 = vunpack.c.h.b16 %v955
    %v1138 = vunpack.c.l.b16 %v956
    %v1139 = vunpack.c.h.b16 %v956
    %v1140 = vunpack.c.l.b16 %v957
    %v1141 = vunpack.c.h.b16 %v957
    %v1142 = vunpack.c.l.b16 %v958
    %v1143 = vunpack.c.h.b16 %v958
    %v1144 = vunpack.c.l.b16 %v959
    %v1145 = vunpack.c.h.b16 %v959
    %v1146 = vunpack.c.l.b16 %v960
    %v1147 = vunpack.c.h.b16 %v960
    %v1148 = vunpack.c.l.b16 %v961
    %v1149 = vunpack.c.h.b16 %v961
    %v1150 = vunpack.c.l.b16 %v962
    %v1151 = vunpack.c.h.b16 %v962
    %v1152 = vunpack.c.l.b16 %v963
    %v1153 = vunpack.c.h.b16 %v963
    %v1154 = vunpack.c.l.b16 %v964
    %v1155 = vunpack.c.h.b16 %v964
    %v1156 = vunpack.c.l.b16 %v965
    %v1157 = vunpack.c.h.b16 %v965
    %v1158 = vpack.c.b16 %v1034, %v1030
    %v1159 = vpack.c.b16 %v1035, %v1031
    %v1160 = vpack.c.b16 %v1036, %v1032
    %v1161 = vpack.c.b16 %v1037, %v1033
    %v1162 = vpack.c.b16 %v1042, %v1038
    %v1163 = vpack.c.b16 %v1043, %v1039
    %v1164 = vpack.c.b16 %v1044, %v1040
    %v1165 = vpack.c.b16 %v1045, %v1041
    %v1166 = vpack.c.b16 %v1050, %v1046
    %v1167 = vpack.c.b16 %v1051, %v1047
    %v1168 = vpack.c.b16 %v1052, %v1048
    %v1169 = vpack.c.b16 %v1053, %v1049
    %v1170 = vpack.c.b16 %v1058, %v1054
    %v1171 = vpack.c.b16 %v1059, %v1055
    %v1172 = vpack.c.b16 %v1060, %v1056
    %v1173 = vpack.c.b16 %v1061, %v1057
    %v1174 = vpack.c.b16 %v1066, %v1062
    %v1175 = vpack.c.b16 %v1067, %v1063
    %v1176 = vpack.c.b16 %v1068, %v1064
    %v1177 = vpack.c.b16 %v1069, %v1065
    %v1178 = vpack.c.b16 %v1074, %v1070
    %v1179 = vpack.c.b16 %v1075, %v1071
    %v1180 = vpack.c.b16 %v1076, %v1072
    %v1181 = vpack.c.b16 %v1077, %v1073
    %v1182 = vpack.c.b16 %v1082, %v1078
    %v1183 = vpack.c.b16 %v1083, %v1079
    %v1184 = vpack.c.b16 %v1084, %v1080
    %v1185 = vpack.c.b16 %v1085, %v1081
    %v1186 = vpack.c.b16 %v1090, %v1086
    %v1187 = vpack.c.b16 %v1091, %v1087
    %v1188 = vpack.c.b16 %v1092, %v1088
    %v1189 = vpack.c.b16 %v1093, %v1089
    %v1190 = vpack.c.b16 %v1098, %v1094
    %v1191 = vpack.c.b16 %v1099, %v1095
    %v1192 = vpack.c.b16 %v1100, %v1096
    %v1193 = vpack.c.b16 %v1101, %v1097
    %v1194 = vpack.c.b16 %v1106, %v1102
    %v1195 = vpack.c.b16 %v1107, %v1103
    %v1196 = vpack.c.b16 %v1108, %v1104
    %v1197 = vpack.c.b16 %v1109, %v1105
    %v1198 = vpack.c.b16 %v1114, %v1110
    %v1199 = vpack.c.b16 %v1115, %v1111
    %v1200 = vpack.c.b16 %v1116, %v1112
    %v1201 = vpack.c.b16 %v1117, %v1113
    %v1202 = vpack.c.b16 %v1122, %v1118
    %v1203 = vpack.c.b16 %v1123, %v1119
    %v1204 = vpack.c.b16 %v1124, %v1120
    %v1205 = vpack.c.b16 %v1125, %v1121
    %v1206 = vpack.c.b16 %v1130, %v1126
    %v1207 = vpack.c.b16 %v1131, %v1127
    %v1208 = vpack.c.b16 %v1132, %v1128
    %v1209 = vpack.c.b16 %v1133, %v1129
    %v1210 = vpack.c.b16 %v1138, %v1134
    %v1211 = vpack.c.b16 %v1139, %v1135
    %v1212 = vpack.c.b16 %v1140, %v1136
    %v1213 = vpack.c.b16 %v1141, %v1137
    %v1214 = vpack.c.b16 %v1146, %v1142
    %v1215 = vpack.c.b16 %v1147, %v1143
    %v1216 = vpack.c.b16 %v1148, %v1144
    %v1217 = vpack.c.b16 %v1149, %v1145
    %v1218 = vpack.c.b16 %v1154, %v1150
    %v1219 = vpack.c.b16 %v1155, %v1151
    %v1220 = vpack.c.b16 %v1156, %v1152
    %v1221 = vpack.c.b16 %v1157, %v1153
    %1286 = vmatprep.subr.bf16.mxu0 %v1159
    %1287 = vmatpush1.bf16.msra.mxu0 %v1158
    %1288 = vmatprep.subr.bf16.mxu0 %v1163
    %1289 = vmatpush1.bf16.msra.mxu0 %v1162
    %1290 = vmatprep.subr.bf16.mxu0 %v1167
    %1291 = vmatpush1.bf16.msra.mxu0 %v1166
    %1292 = vmatprep.subr.bf16.mxu0 %v1171
    %1293 = vmatpush1.bf16.msra.mxu0 %v1170
    %1294 = vmatprep.subr.bf16.mxu0 %v1175
    %1295 = vmatpush1.bf16.msra.mxu0 %v1174
    %1296 = vmatprep.subr.bf16.mxu0 %v1179
    %1297 = vmatpush1.bf16.msra.mxu0 %v1178
    %1298 = vmatprep.subr.bf16.mxu0 %v1183
    %1299 = vmatpush1.bf16.msra.mxu0 %v1182
    %1300 = vmatprep.subr.bf16.mxu0 %v1187
    %1301 = vmatpush1.bf16.msra.mxu0 %v1186
    %1302 = vmatprep.subr.bf16.mxu0 %v1191
    %1303 = vmatpush1.bf16.msra.mxu0 %v1190
    %1304 = vmatprep.subr.bf16.mxu0 %v1195
    %1305 = vmatpush1.bf16.msra.mxu0 %v1194
    %1306 = vmatprep.subr.bf16.mxu0 %v1199
    %1307 = vmatpush1.bf16.msra.mxu0 %v1198
    %1308 = vmatprep.subr.bf16.mxu0 %v1203
    %1309 = vmatpush1.bf16.msra.mxu0 %v1202
    %1310 = vmatprep.subr.bf16.mxu0 %v1207
    %1311 = vmatpush1.bf16.msra.mxu0 %v1206
    %1312 = vmatprep.subr.bf16.mxu0 %v1211
    %1313 = vmatpush1.bf16.msra.mxu0 %v1210
    %1314 = vmatprep.subr.bf16.mxu0 %v1215
    %1315 = vmatpush1.bf16.msra.mxu0 %v1214
    %1316 = vmatprep.subr.bf16.mxu0 %v1219
    %1317 = vmatpush1.bf16.msra.mxu0 %v1218
    %1318 = vmatprep.mubr.bf16.mxu0 %v826
    %1319 = vmatmul.mubr.bf16.gmra.mrb[0].mxu0 %v825
    %v1320 = vpop.f32.mrb[0].mxu0
    %v1321 = vadd.f32 0.0, %v1320
    %v1322 = vpop.f32.mrb[0].mxu0
    %v1323 = vadd.f32 0.0, %v1322
    %v1324 = vpop.f32.mrb[0].mxu0
    %v1325 = vpop.f32.mrb[0].mxu0
    %1326 = vdwg.mxu0
    %1327 = vmatprep.subr.bf16.mxu0 %v1161
    %1328 = vmatpush1.bf16.msra.mxu0 %v1160
    %1329 = vmatprep.subr.bf16.mxu0 %v1165
    %1330 = vmatpush1.bf16.msra.mxu0 %v1164
    %1331 = vmatprep.subr.bf16.mxu0 %v1169
    %1332 = vmatpush1.bf16.msra.mxu0 %v1168
    %1333 = vmatprep.subr.bf16.mxu0 %v1173
    %1334 = vmatpush1.bf16.msra.mxu0 %v1172
    %1335 = vmatprep.subr.bf16.mxu0 %v1177
    %1336 = vmatpush1.bf16.msra.mxu0 %v1176
    %1337 = vmatprep.subr.bf16.mxu0 %v1181
    %1338 = vmatpush1.bf16.msra.mxu0 %v1180
    %1339 = vmatprep.subr.bf16.mxu0 %v1185
    %1340 = vmatpush1.bf16.msra.mxu0 %v1184
    %1341 = vmatprep.subr.bf16.mxu0 %v1189
    %1342 = vmatpush1.bf16.msra.mxu0 %v1188
    %1343 = vmatprep.subr.bf16.mxu0 %v1193
    %1344 = vmatpush1.bf16.msra.mxu0 %v1192
    %1345 = vmatprep.subr.bf16.mxu0 %v1197
    %1346 = vmatpush1.bf16.msra.mxu0 %v1196
    %1347 = vmatprep.subr.bf16.mxu0 %v1201
    %1348 = vmatpush1.bf16.msra.mxu0 %v1200
    %1349 = vmatprep.subr.bf16.mxu0 %v1205
    %1350 = vmatpush1.bf16.msra.mxu0 %v1204
    %1351 = vmatprep.subr.bf16.mxu0 %v1209
    %1352 = vmatpush1.bf16.msra.mxu0 %v1208
    %1353 = vmatprep.subr.bf16.mxu0 %v1213
    %1354 = vmatpush1.bf16.msra.mxu0 %v1212
    %1355 = vmatprep.subr.bf16.mxu0 %v1217
    %1356 = vmatpush1.bf16.msra.mxu0 %v1216
    %1357 = vmatprep.subr.bf16.mxu0 %v1221
    %1358 = vmatpush1.bf16.msra.mxu0 %v1220
    %1359 = vmatprep.mubr.bf16.mxu0 %v826
    %1360 = vmatmul.mubr.bf16.gmra.mrb[0].mxu0 %v825
    %v1361 = vpop.f32.mrb[0].mxu0
    %v1362 = vadd.f32 0.0, %v1361
    %v1363 = vpop.f32.mrb[0].mxu0
    %v1364 = vadd.f32 0.0, %v1363
    %v1365 = vpop.f32.mrb[0].mxu0
    %v1366 = vpop.f32.mrb[0].mxu0
    %1367 = vdwg.mxu0
    %v1432 = vunpack.c.l.b16 %v837
    %v1433 = vunpack.c.h.b16 %v837
    %v1434 = vunpack.c.l.b16 %v838
    %v1435 = vunpack.c.h.b16 %v838
    %v1436 = vunpack.c.l.b16 %v839
    %v1437 = vunpack.c.h.b16 %v839
    %v1438 = vunpack.c.l.b16 %v840
    %v1439 = vunpack.c.h.b16 %v840
    %v1440 = vunpack.c.l.b16 %v841
    %v1441 = vunpack.c.h.b16 %v841
    %v1442 = vunpack.c.l.b16 %v842
    %v1443 = vunpack.c.h.b16 %v842
    %v1444 = vunpack.c.l.b16 %v843
    %v1445 = vunpack.c.h.b16 %v843
    %v1446 = vunpack.c.l.b16 %v844
    %v1447 = vunpack.c.h.b16 %v844
    %v1448 = vunpack.c.l.b16 %v845
    %v1449 = vunpack.c.h.b16 %v845
    %v1450 = vunpack.c.l.b16 %v846
    %v1451 = vunpack.c.h.b16 %v846
    %v1452 = vunpack.c.l.b16 %v847
    %v1453 = vunpack.c.h.b16 %v847
    %v1454 = vunpack.c.l.b16 %v848
    %v1455 = vunpack.c.h.b16 %v848
    %v1456 = vunpack.c.l.b16 %v849
    %v1457 = vunpack.c.h.b16 %v849
    %v1458 = vunpack.c.l.b16 %v850
    %v1459 = vunpack.c.h.b16 %v850
    %v1460 = vunpack.c.l.b16 %v851
    %v1461 = vunpack.c.h.b16 %v851
    %v1462 = vunpack.c.l.b16 %v852
    %v1463 = vunpack.c.h.b16 %v852
    %v1464 = vunpack.c.l.b16 %v853
    %v1465 = vunpack.c.h.b16 %v853
    %v1466 = vunpack.c.l.b16 %v854
    %v1467 = vunpack.c.h.b16 %v854
    %v1468 = vunpack.c.l.b16 %v855
    %v1469 = vunpack.c.h.b16 %v855
    %v1470 = vunpack.c.l.b16 %v856
    %v1471 = vunpack.c.h.b16 %v856
    %v1472 = vunpack.c.l.b16 %v857
    %v1473 = vunpack.c.h.b16 %v857
    %v1474 = vunpack.c.l.b16 %v858
    %v1475 = vunpack.c.h.b16 %v858
    %v1476 = vunpack.c.l.b16 %v859
    %v1477 = vunpack.c.h.b16 %v859
    %v1478 = vunpack.c.l.b16 %v860
    %v1479 = vunpack.c.h.b16 %v860
    %v1480 = vunpack.c.l.b16 %v861
    %v1481 = vunpack.c.h.b16 %v861
    %v1482 = vunpack.c.l.b16 %v862
    %v1483 = vunpack.c.h.b16 %v862
    %v1484 = vunpack.c.l.b16 %v863
    %v1485 = vunpack.c.h.b16 %v863
    %v1486 = vunpack.c.l.b16 %v864
    %v1487 = vunpack.c.h.b16 %v864
    %v1488 = vunpack.c.l.b16 %v865
    %v1489 = vunpack.c.h.b16 %v865
    %v1490 = vunpack.c.l.b16 %v866
    %v1491 = vunpack.c.h.b16 %v866
    %v1492 = vunpack.c.l.b16 %v867
    %v1493 = vunpack.c.h.b16 %v867
    %v1494 = vunpack.c.l.b16 %v868
    %v1495 = vunpack.c.h.b16 %v868
    %v1496 = vunpack.c.l.b16 %v869
    %v1497 = vunpack.c.h.b16 %v869
    %v1498 = vunpack.c.l.b16 %v870
    %v1499 = vunpack.c.h.b16 %v870
    %v1500 = vunpack.c.l.b16 %v871
    %v1501 = vunpack.c.h.b16 %v871
    %v1502 = vunpack.c.l.b16 %v872
    %v1503 = vunpack.c.h.b16 %v872
    %v1504 = vunpack.c.l.b16 %v873
    %v1505 = vunpack.c.h.b16 %v873
    %v1506 = vunpack.c.l.b16 %v874
    %v1507 = vunpack.c.h.b16 %v874
    %v1508 = vunpack.c.l.b16 %v875
    %v1509 = vunpack.c.h.b16 %v875
    %v1510 = vunpack.c.l.b16 %v876
    %v1511 = vunpack.c.h.b16 %v876
    %v1512 = vunpack.c.l.b16 %v877
    %v1513 = vunpack.c.h.b16 %v877
    %v1514 = vunpack.c.l.b16 %v878
    %v1515 = vunpack.c.h.b16 %v878
    %v1516 = vunpack.c.l.b16 %v879
    %v1517 = vunpack.c.h.b16 %v879
    %v1518 = vunpack.c.l.b16 %v880
    %v1519 = vunpack.c.h.b16 %v880
    %v1520 = vunpack.c.l.b16 %v881
    %v1521 = vunpack.c.h.b16 %v881
    %v1522 = vunpack.c.l.b16 %v882
    %v1523 = vunpack.c.h.b16 %v882
    %v1524 = vunpack.c.l.b16 %v883
    %v1525 = vunpack.c.h.b16 %v883
    %v1526 = vunpack.c.l.b16 %v884
    %v1527 = vunpack.c.h.b16 %v884
    %v1528 = vunpack.c.l.b16 %v885
    %v1529 = vunpack.c.h.b16 %v885
    %v1530 = vunpack.c.l.b16 %v886
    %v1531 = vunpack.c.h.b16 %v886
    %v1532 = vunpack.c.l.b16 %v887
    %v1533 = vunpack.c.h.b16 %v887
    %v1534 = vunpack.c.l.b16 %v888
    %v1535 = vunpack.c.h.b16 %v888
    %v1536 = vunpack.c.l.b16 %v889
    %v1537 = vunpack.c.h.b16 %v889
    %v1538 = vunpack.c.l.b16 %v890
    %v1539 = vunpack.c.h.b16 %v890
    %v1540 = vunpack.c.l.b16 %v891
    %v1541 = vunpack.c.h.b16 %v891
    %v1542 = vunpack.c.l.b16 %v892
    %v1543 = vunpack.c.h.b16 %v892
    %v1544 = vunpack.c.l.b16 %v893
    %v1545 = vunpack.c.h.b16 %v893
    %v1546 = vunpack.c.l.b16 %v894
    %v1547 = vunpack.c.h.b16 %v894
    %v1548 = vunpack.c.l.b16 %v895
    %v1549 = vunpack.c.h.b16 %v895
    %v1550 = vunpack.c.l.b16 %v896
    %v1551 = vunpack.c.h.b16 %v896
    %v1552 = vunpack.c.l.b16 %v897
    %v1553 = vunpack.c.h.b16 %v897
    %v1554 = vunpack.c.l.b16 %v898
    %v1555 = vunpack.c.h.b16 %v898
    %v1556 = vunpack.c.l.b16 %v899
    %v1557 = vunpack.c.h.b16 %v899
    %v1558 = vunpack.c.l.b16 %v900
    %v1559 = vunpack.c.h.b16 %v900
    %v1560 = vpack.c.b16 %v1436, %v1432
    %v1561 = vpack.c.b16 %v1437, %v1433
    %v1562 = vpack.c.b16 %v1438, %v1434
    %v1563 = vpack.c.b16 %v1439, %v1435
    %v1564 = vpack.c.b16 %v1444, %v1440
    %v1565 = vpack.c.b16 %v1445, %v1441
    %v1566 = vpack.c.b16 %v1446, %v1442
    %v1567 = vpack.c.b16 %v1447, %v1443
    %v1568 = vpack.c.b16 %v1452, %v1448
    %v1569 = vpack.c.b16 %v1453, %v1449
    %v1570 = vpack.c.b16 %v1454, %v1450
    %v1571 = vpack.c.b16 %v1455, %v1451
    %v1572 = vpack.c.b16 %v1460, %v1456
    %v1573 = vpack.c.b16 %v1461, %v1457
    %v1574 = vpack.c.b16 %v1462, %v1458
    %v1575 = vpack.c.b16 %v1463, %v1459
    %v1576 = vpack.c.b16 %v1468, %v1464
    %v1577 = vpack.c.b16 %v1469, %v1465
    %v1578 = vpack.c.b16 %v1470, %v1466
    %v1579 = vpack.c.b16 %v1471, %v1467
    %v1580 = vpack.c.b16 %v1476, %v1472
    %v1581 = vpack.c.b16 %v1477, %v1473
    %v1582 = vpack.c.b16 %v1478, %v1474
    %v1583 = vpack.c.b16 %v1479, %v1475
    %v1584 = vpack.c.b16 %v1484, %v1480
    %v1585 = vpack.c.b16 %v1485, %v1481
    %v1586 = vpack.c.b16 %v1486, %v1482
    %v1587 = vpack.c.b16 %v1487, %v1483
    %v1588 = vpack.c.b16 %v1492, %v1488
    %v1589 = vpack.c.b16 %v1493, %v1489
    %v1590 = vpack.c.b16 %v1494, %v1490
    %v1591 = vpack.c.b16 %v1495, %v1491
    %v1592 = vpack.c.b16 %v1500, %v1496
    %v1593 = vpack.c.b16 %v1501, %v1497
    %v1594 = vpack.c.b16 %v1502, %v1498
    %v1595 = vpack.c.b16 %v1503, %v1499
    %v1596 = vpack.c.b16 %v1508, %v1504
    %v1597 = vpack.c.b16 %v1509, %v1505
    %v1598 = vpack.c.b16 %v1510, %v1506
    %v1599 = vpack.c.b16 %v1511, %v1507
    %v1600 = vpack.c.b16 %v1516, %v1512
    %v1601 = vpack.c.b16 %v1517, %v1513
    %v1602 = vpack.c.b16 %v1518, %v1514
    %v1603 = vpack.c.b16 %v1519, %v1515
    %v1604 = vpack.c.b16 %v1524, %v1520
    %v1605 = vpack.c.b16 %v1525, %v1521
    %v1606 = vpack.c.b16 %v1526, %v1522
    %v1607 = vpack.c.b16 %v1527, %v1523
    %v1608 = vpack.c.b16 %v1532, %v1528
    %v1609 = vpack.c.b16 %v1533, %v1529
    %v1610 = vpack.c.b16 %v1534, %v1530
    %v1611 = vpack.c.b16 %v1535, %v1531
    %v1612 = vpack.c.b16 %v1540, %v1536
    %v1613 = vpack.c.b16 %v1541, %v1537
    %v1614 = vpack.c.b16 %v1542, %v1538
    %v1615 = vpack.c.b16 %v1543, %v1539
    %v1616 = vpack.c.b16 %v1548, %v1544
    %v1617 = vpack.c.b16 %v1549, %v1545
    %v1618 = vpack.c.b16 %v1550, %v1546
    %v1619 = vpack.c.b16 %v1551, %v1547
    %v1620 = vpack.c.b16 %v1556, %v1552
    %v1621 = vpack.c.b16 %v1557, %v1553
    %v1622 = vpack.c.b16 %v1558, %v1554
    %v1623 = vpack.c.b16 %v1559, %v1555
    %1688 = vmatprep.subr.bf16.mxu0 %v1561
    %1689 = vmatpush1.bf16.msra.mxu0 %v1560
    %1690 = vmatprep.subr.bf16.mxu0 %v1565
    %1691 = vmatpush1.bf16.msra.mxu0 %v1564
    %1692 = vmatprep.subr.bf16.mxu0 %v1569
    %1693 = vmatpush1.bf16.msra.mxu0 %v1568
    %1694 = vmatprep.subr.bf16.mxu0 %v1573
    %1695 = vmatpush1.bf16.msra.mxu0 %v1572
    %1696 = vmatprep.subr.bf16.mxu0 %v1577
    %1697 = vmatpush1.bf16.msra.mxu0 %v1576
    %1698 = vmatprep.subr.bf16.mxu0 %v1581
    %1699 = vmatpush1.bf16.msra.mxu0 %v1580
    %1700 = vmatprep.subr.bf16.mxu0 %v1585
    %1701 = vmatpush1.bf16.msra.mxu0 %v1584
    %1702 = vmatprep.subr.bf16.mxu0 %v1589
    %1703 = vmatpush1.bf16.msra.mxu0 %v1588
    %1704 = vmatprep.subr.bf16.mxu0 %v1593
    %1705 = vmatpush1.bf16.msra.mxu0 %v1592
    %1706 = vmatprep.subr.bf16.mxu0 %v1597
    %1707 = vmatpush1.bf16.msra.mxu0 %v1596
    %1708 = vmatprep.subr.bf16.mxu0 %v1601
    %1709 = vmatpush1.bf16.msra.mxu0 %v1600
    %1710 = vmatprep.subr.bf16.mxu0 %v1605
    %1711 = vmatpush1.bf16.msra.mxu0 %v1604
    %1712 = vmatprep.subr.bf16.mxu0 %v1609
    %1713 = vmatpush1.bf16.msra.mxu0 %v1608
    %1714 = vmatprep.subr.bf16.mxu0 %v1613
    %1715 = vmatpush1.bf16.msra.mxu0 %v1612
    %1716 = vmatprep.subr.bf16.mxu0 %v1617
    %1717 = vmatpush1.bf16.msra.mxu0 %v1616
    %1718 = vmatprep.subr.bf16.mxu0 %v1621
    %1719 = vmatpush1.bf16.msra.mxu0 %v1620
    %1720 = vmatprep.mubr.bf16.mxu0 %v824
    %1721 = vmatmul.mubr.bf16.gmra.mrb[0].mxu0 %v823
    %v1722 = vpop.f32.mrb[0].mxu0
    %v1723 = vadd.f32 %v1321, %v1722
    %v1724 = vpop.f32.mrb[0].mxu0
    %v1725 = vadd.f32 %v1323, %v1724
    %v1726 = vpop.f32.mrb[0].mxu0
    %v1727 = vpop.f32.mrb[0].mxu0
    %1728 = vdwg.mxu0
    %1729 = vmatprep.subr.bf16.mxu0 %v1563
    %1730 = vmatpush1.bf16.msra.mxu0 %v1562
    %1731 = vmatprep.subr.bf16.mxu0 %v1567
    %1732 = vmatpush1.bf16.msra.mxu0 %v1566
    %1733 = vmatprep.subr.bf16.mxu0 %v1571
    %1734 = vmatpush1.bf16.msra.mxu0 %v1570
    %1735 = vmatprep.subr.bf16.mxu0 %v1575
    %1736 = vmatpush1.bf16.msra.mxu0 %v1574
    %1737 = vmatprep.subr.bf16.mxu0 %v1579
    %1738 = vmatpush1.bf16.msra.mxu0 %v1578
    %1739 = vmatprep.subr.bf16.mxu0 %v1583
    %1740 = vmatpush1.bf16.msra.mxu0 %v1582
    %1741 = vmatprep.subr.bf16.mxu0 %v1587
    %1742 = vmatpush1.bf16.msra.mxu0 %v1586
    %1743 = vmatprep.subr.bf16.mxu0 %v1591
    %1744 = vmatpush1.bf16.msra.mxu0 %v1590
    %1745 = vmatprep.subr.bf16.mxu0 %v1595
    %1746 = vmatpush1.bf16.msra.mxu0 %v1594
    %1747 = vmatprep.subr.bf16.mxu0 %v1599
    %1748 = vmatpush1.bf16.msra.mxu0 %v1598
    %1749 = vmatprep.subr.bf16.mxu0 %v1603
    %1750 = vmatpush1.bf16.msra.mxu0 %v1602
    %1751 = vmatprep.subr.bf16.mxu0 %v1607
    %1752 = vmatpush1.bf16.msra.mxu0 %v1606
    %1753 = vmatprep.subr.bf16.mxu0 %v1611
    %1754 = vmatpush1.bf16.msra.mxu0 %v1610
    %1755 = vmatprep.subr.bf16.mxu0 %v1615
    %1756 = vmatpush1.bf16.msra.mxu0 %v1614
    %1757 = vmatprep.subr.bf16.mxu0 %v1619
    %1758 = vmatpush1.bf16.msra.mxu0 %v1618
    %1759 = vmatprep.subr.bf16.mxu0 %v1623
    %1760 = vmatpush1.bf16.msra.mxu0 %v1622
    %1761 = vmatprep.mubr.bf16.mxu0 %v824
    %1762 = vmatmul.mubr.bf16.gmra.mrb[0].mxu0 %v823
    %v1763 = vpop.f32.mrb[0].mxu0
    %v1764 = vadd.f32 %v1362, %v1763
    %v1765 = vpop.f32.mrb[0].mxu0
    %v1766 = vadd.f32 %v1364, %v1765
    %v1767 = vpop.f32.mrb[0].mxu0
    %v1768 = vpop.f32.mrb[0].mxu0
    %1769 = vdwg.mxu0
    %s1770 = scalar_lea.vmem [#allocation13], 1024
    %v1771 = vld [vmem:[%s1770] sm:$0xff]
    %v1772 = vld [vmem:[%s1770 + $0x8] sm:$0xff]
    %v1773 = vld [vmem:[%s1770 + $0x10] sm:$0xff]
    %v1774 = vld [vmem:[%s1770 + $0x18] sm:$0xff]
    %v1775 = vld [vmem:[%s1770 + $0x20] sm:$0xff]
    %v1776 = vld [vmem:[%s1770 + $0x28] sm:$0xff]
    %v1777 = vld [vmem:[%s1770 + $0x30] sm:$0xff]
    %v1778 = vld [vmem:[%s1770 + $0x38] sm:$0xff]
    %v1779 = vld [vmem:[%s1770 + $0x40] sm:$0xff]
    %v1780 = vld [vmem:[%s1770 + $0x48] sm:$0xff]
    %v1781 = vld [vmem:[%s1770 + $0x50] sm:$0xff]
    %v1782 = vld [vmem:[%s1770 + $0x58] sm:$0xff]
    %v1783 = vld [vmem:[%s1770 + $0x60] sm:$0xff]
    %v1784 = vld [vmem:[%s1770 + $0x68] sm:$0xff]
    %v1785 = vld [vmem:[%s1770 + $0x70] sm:$0xff]
    %v1786 = vld [vmem:[%s1770 + $0x78] sm:$0xff]
    %v1787 = vld [vmem:[%s1770 + $0x80] sm:$0xff]
    %v1788 = vld [vmem:[%s1770 + $0x88] sm:$0xff]
    %v1789 = vld [vmem:[%s1770 + $0x90] sm:$0xff]
    %v1790 = vld [vmem:[%s1770 + $0x98] sm:$0xff]
    %v1791 = vld [vmem:[%s1770 + $0xa0] sm:$0xff]
    %v1792 = vld [vmem:[%s1770 + $0xa8] sm:$0xff]
    %v1793 = vld [vmem:[%s1770 + $0xb0] sm:$0xff]
    %v1794 = vld [vmem:[%s1770 + $0xb8] sm:$0xff]
    %v1795 = vld [vmem:[%s1770 + $0xc0] sm:$0xff]
    %v1796 = vld [vmem:[%s1770 + $0xc8] sm:$0xff]
    %v1797 = vld [vmem:[%s1770 + $0xd0] sm:$0xff]
    %v1798 = vld [vmem:[%s1770 + $0xd8] sm:$0xff]
    %v1799 = vld [vmem:[%s1770 + $0xe0] sm:$0xff]
    %v1800 = vld [vmem:[%s1770 + $0xe8] sm:$0xff]
    %v1801 = vld [vmem:[%s1770 + $0xf0] sm:$0xff]
    %v1802 = vld [vmem:[%s1770 + $0xf8] sm:$0xff]
    %v1803 = vld [vmem:[%s1770 + $0x100] sm:$0xff]
    %v1804 = vld [vmem:[%s1770 + $0x108] sm:$0xff]
    %v1805 = vld [vmem:[%s1770 + $0x110] sm:$0xff]
    %v1806 = vld [vmem:[%s1770 + $0x118] sm:$0xff]
    %v1807 = vld [vmem:[%s1770 + $0x120] sm:$0xff]
    %v1808 = vld [vmem:[%s1770 + $0x128] sm:$0xff]
    %v1809 = vld [vmem:[%s1770 + $0x130] sm:$0xff]
    %v1810 = vld [vmem:[%s1770 + $0x138] sm:$0xff]
    %v1811 = vld [vmem:[%s1770 + $0x140] sm:$0xff]
    %v1812 = vld [vmem:[%s1770 + $0x148] sm:$0xff]
    %v1813 = vld [vmem:[%s1770 + $0x150] sm:$0xff]
    %v1814 = vld [vmem:[%s1770 + $0x158] sm:$0xff]
    %v1815 = vld [vmem:[%s1770 + $0x160] sm:$0xff]
    %v1816 = vld [vmem:[%s1770 + $0x168] sm:$0xff]
    %v1817 = vld [vmem:[%s1770 + $0x170] sm:$0xff]
    %v1818 = vld [vmem:[%s1770 + $0x178] sm:$0xff]
    %v1819 = vld [vmem:[%s1770 + $0x180] sm:$0xff]
    %v1820 = vld [vmem:[%s1770 + $0x188] sm:$0xff]
    %v1821 = vld [vmem:[%s1770 + $0x190] sm:$0xff]
    %v1822 = vld [vmem:[%s1770 + $0x198] sm:$0xff]
    %v1823 = vld [vmem:[%s1770 + $0x1a0] sm:$0xff]
    %v1824 = vld [vmem:[%s1770 + $0x1a8] sm:$0xff]
    %v1825 = vld [vmem:[%s1770 + $0x1b0] sm:$0xff]
    %v1826 = vld [vmem:[%s1770 + $0x1b8] sm:$0xff]
    %v1827 = vld [vmem:[%s1770 + $0x1c0] sm:$0xff]
    %v1828 = vld [vmem:[%s1770 + $0x1c8] sm:$0xff]
    %v1829 = vld [vmem:[%s1770 + $0x1d0] sm:$0xff]
    %v1830 = vld [vmem:[%s1770 + $0x1d8] sm:$0xff]
    %v1831 = vld [vmem:[%s1770 + $0x1e0] sm:$0xff]
    %v1832 = vld [vmem:[%s1770 + $0x1e8] sm:$0xff]
    %v1833 = vld [vmem:[%s1770 + $0x1f0] sm:$0xff]
    %v1834 = vld [vmem:[%s1770 + $0x1f8] sm:$0xff]
    %v1899 = vunpack.c.l.b16 %v1771
    %v1900 = vunpack.c.h.b16 %v1771
    %v1901 = vunpack.c.l.b16 %v1772
    %v1902 = vunpack.c.h.b16 %v1772
    %v1903 = vunpack.c.l.b16 %v1773
    %v1904 = vunpack.c.h.b16 %v1773
    %v1905 = vunpack.c.l.b16 %v1774
    %v1906 = vunpack.c.h.b16 %v1774
    %v1907 = vunpack.c.l.b16 %v1775
    %v1908 = vunpack.c.h.b16 %v1775
    %v1909 = vunpack.c.l.b16 %v1776
    %v1910 = vunpack.c.h.b16 %v1776
    %v1911 = vunpack.c.l.b16 %v1777
    %v1912 = vunpack.c.h.b16 %v1777
    %v1913 = vunpack.c.l.b16 %v1778
    %v1914 = vunpack.c.h.b16 %v1778
    %v1915 = vunpack.c.l.b16 %v1779
    %v1916 = vunpack.c.h.b16 %v1779
    %v1917 = vunpack.c.l.b16 %v1780
    %v1918 = vunpack.c.h.b16 %v1780
    %v1919 = vunpack.c.l.b16 %v1781
    %v1920 = vunpack.c.h.b16 %v1781
    %v1921 = vunpack.c.l.b16 %v1782
    %v1922 = vunpack.c.h.b16 %v1782
    %v1923 = vunpack.c.l.b16 %v1783
    %v1924 = vunpack.c.h.b16 %v1783
    %v1925 = vunpack.c.l.b16 %v1784
    %v1926 = vunpack.c.h.b16 %v1784
    %v1927 = vunpack.c.l.b16 %v1785
    %v1928 = vunpack.c.h.b16 %v1785
    %v1929 = vunpack.c.l.b16 %v1786
    %v1930 = vunpack.c.h.b16 %v1786
    %v1931 = vunpack.c.l.b16 %v1787
    %v1932 = vunpack.c.h.b16 %v1787
    %v1933 = vunpack.c.l.b16 %v1788
    %v1934 = vunpack.c.h.b16 %v1788
    %v1935 = vunpack.c.l.b16 %v1789
    %v1936 = vunpack.c.h.b16 %v1789
    %v1937 = vunpack.c.l.b16 %v1790
    %v1938 = vunpack.c.h.b16 %v1790
    %v1939 = vunpack.c.l.b16 %v1791
    %v1940 = vunpack.c.h.b16 %v1791
    %v1941 = vunpack.c.l.b16 %v1792
    %v1942 = vunpack.c.h.b16 %v1792
    %v1943 = vunpack.c.l.b16 %v1793
    %v1944 = vunpack.c.h.b16 %v1793
    %v1945 = vunpack.c.l.b16 %v1794
    %v1946 = vunpack.c.h.b16 %v1794
    %v1947 = vunpack.c.l.b16 %v1795
    %v1948 = vunpack.c.h.b16 %v1795
    %v1949 = vunpack.c.l.b16 %v1796
    %v1950 = vunpack.c.h.b16 %v1796
    %v1951 = vunpack.c.l.b16 %v1797
    %v1952 = vunpack.c.h.b16 %v1797
    %v1953 = vunpack.c.l.b16 %v1798
    %v1954 = vunpack.c.h.b16 %v1798
    %v1955 = vunpack.c.l.b16 %v1799
    %v1956 = vunpack.c.h.b16 %v1799
    %v1957 = vunpack.c.l.b16 %v1800
    %v1958 = vunpack.c.h.b16 %v1800
    %v1959 = vunpack.c.l.b16 %v1801
    %v1960 = vunpack.c.h.b16 %v1801
    %v1961 = vunpack.c.l.b16 %v1802
    %v1962 = vunpack.c.h.b16 %v1802
    %v1963 = vunpack.c.l.b16 %v1803
    %v1964 = vunpack.c.h.b16 %v1803
    %v1965 = vunpack.c.l.b16 %v1804
    %v1966 = vunpack.c.h.b16 %v1804
    %v1967 = vunpack.c.l.b16 %v1805
    %v1968 = vunpack.c.h.b16 %v1805
    %v1969 = vunpack.c.l.b16 %v1806
    %v1970 = vunpack.c.h.b16 %v1806
    %v1971 = vunpack.c.l.b16 %v1807
    %v1972 = vunpack.c.h.b16 %v1807
    %v1973 = vunpack.c.l.b16 %v1808
    %v1974 = vunpack.c.h.b16 %v1808
    %v1975 = vunpack.c.l.b16 %v1809
    %v1976 = vunpack.c.h.b16 %v1809
    %v1977 = vunpack.c.l.b16 %v1810
    %v1978 = vunpack.c.h.b16 %v1810
    %v1979 = vunpack.c.l.b16 %v1811
    %v1980 = vunpack.c.h.b16 %v1811
    %v1981 = vunpack.c.l.b16 %v1812
    %v1982 = vunpack.c.h.b16 %v1812
    %v1983 = vunpack.c.l.b16 %v1813
    %v1984 = vunpack.c.h.b16 %v1813
    %v1985 = vunpack.c.l.b16 %v1814
    %v1986 = vunpack.c.h.b16 %v1814
    %v1987 = vunpack.c.l.b16 %v1815
    %v1988 = vunpack.c.h.b16 %v1815
    %v1989 = vunpack.c.l.b16 %v1816
    %v1990 = vunpack.c.h.b16 %v1816
    %v1991 = vunpack.c.l.b16 %v1817
    %v1992 = vunpack.c.h.b16 %v1817
    %v1993 = vunpack.c.l.b16 %v1818
    %v1994 = vunpack.c.h.b16 %v1818
    %v1995 = vunpack.c.l.b16 %v1819
    %v1996 = vunpack.c.h.b16 %v1819
    %v1997 = vunpack.c.l.b16 %v1820
    %v1998 = vunpack.c.h.b16 %v1820
    %v1999 = vunpack.c.l.b16 %v1821
    %v2000 = vunpack.c.h.b16 %v1821
    %v2001 = vunpack.c.l.b16 %v1822
    %v2002 = vunpack.c.h.b16 %v1822
    %v2003 = vunpack.c.l.b16 %v1823
    %v2004 = vunpack.c.h.b16 %v1823
    %v2005 = vunpack.c.l.b16 %v1824
    %v2006 = vunpack.c.h.b16 %v1824
    %v2007 = vunpack.c.l.b16 %v1825
    %v2008 = vunpack.c.h.b16 %v1825
    %v2009 = vunpack.c.l.b16 %v1826
    %v2010 = vunpack.c.h.b16 %v1826
    %v2011 = vunpack.c.l.b16 %v1827
    %v2012 = vunpack.c.h.b16 %v1827
    %v2013 = vunpack.c.l.b16 %v1828
    %v2014 = vunpack.c.h.b16 %v1828
    %v2015 = vunpack.c.l.b16 %v1829
    %v2016 = vunpack.c.h.b16 %v1829
    %v2017 = vunpack.c.l.b16 %v1830
    %v2018 = vunpack.c.h.b16 %v1830
    %v2019 = vunpack.c.l.b16 %v1831
    %v2020 = vunpack.c.h.b16 %v1831
    %v2021 = vunpack.c.l.b16 %v1832
    %v2022 = vunpack.c.h.b16 %v1832
    %v2023 = vunpack.c.l.b16 %v1833
    %v2024 = vunpack.c.h.b16 %v1833
    %v2025 = vunpack.c.l.b16 %v1834
    %v2026 = vunpack.c.h.b16 %v1834
    %v2027 = vpack.c.b16 %v1903, %v1899
    %v2028 = vpack.c.b16 %v1904, %v1900
    %v2029 = vpack.c.b16 %v1905, %v1901
    %v2030 = vpack.c.b16 %v1906, %v1902
    %v2031 = vpack.c.b16 %v1911, %v1907
    %v2032 = vpack.c.b16 %v1912, %v1908
    %v2033 = vpack.c.b16 %v1913, %v1909
    %v2034 = vpack.c.b16 %v1914, %v1910
    %v2035 = vpack.c.b16 %v1919, %v1915
    %v2036 = vpack.c.b16 %v1920, %v1916
    %v2037 = vpack.c.b16 %v1921, %v1917
    %v2038 = vpack.c.b16 %v1922, %v1918
    %v2039 = vpack.c.b16 %v1927, %v1923
    %v2040 = vpack.c.b16 %v1928, %v1924
    %v2041 = vpack.c.b16 %v1929, %v1925
    %v2042 = vpack.c.b16 %v1930, %v1926
    %v2043 = vpack.c.b16 %v1935, %v1931
    %v2044 = vpack.c.b16 %v1936, %v1932
    %v2045 = vpack.c.b16 %v1937, %v1933
    %v2046 = vpack.c.b16 %v1938, %v1934
    %v2047 = vpack.c.b16 %v1943, %v1939
    %v2048 = vpack.c.b16 %v1944, %v1940
    %v2049 = vpack.c.b16 %v1945, %v1941
    %v2050 = vpack.c.b16 %v1946, %v1942
    %v2051 = vpack.c.b16 %v1951, %v1947
    %v2052 = vpack.c.b16 %v1952, %v1948
    %v2053 = vpack.c.b16 %v1953, %v1949
    %v2054 = vpack.c.b16 %v1954, %v1950
    %v2055 = vpack.c.b16 %v1959, %v1955
    %v2056 = vpack.c.b16 %v1960, %v1956
    %v2057 = vpack.c.b16 %v1961, %v1957
    %v2058 = vpack.c.b16 %v1962, %v1958
    %v2059 = vpack.c.b16 %v1967, %v1963
    %v2060 = vpack.c.b16 %v1968, %v1964
    %v2061 = vpack.c.b16 %v1969, %v1965
    %v2062 = vpack.c.b16 %v1970, %v1966
    %v2063 = vpack.c.b16 %v1975, %v1971
    %v2064 = vpack.c.b16 %v1976, %v1972
    %v2065 = vpack.c.b16 %v1977, %v1973
    %v2066 = vpack.c.b16 %v1978, %v1974
    %v2067 = vpack.c.b16 %v1983, %v1979
    %v2068 = vpack.c.b16 %v1984, %v1980
    %v2069 = vpack.c.b16 %v1985, %v1981
    %v2070 = vpack.c.b16 %v1986, %v1982
    %v2071 = vpack.c.b16 %v1991, %v1987
    %v2072 = vpack.c.b16 %v1992, %v1988
    %v2073 = vpack.c.b16 %v1993, %v1989
    %v2074 = vpack.c.b16 %v1994, %v1990
    %v2075 = vpack.c.b16 %v1999, %v1995
    %v2076 = vpack.c.b16 %v2000, %v1996
    %v2077 = vpack.c.b16 %v2001, %v1997
    %v2078 = vpack.c.b16 %v2002, %v1998
    %v2079 = vpack.c.b16 %v2007, %v2003
    %v2080 = vpack.c.b16 %v2008, %v2004
    %v2081 = vpack.c.b16 %v2009, %v2005
    %v2082 = vpack.c.b16 %v2010, %v2006
    %v2083 = vpack.c.b16 %v2015, %v2011
    %v2084 = vpack.c.b16 %v2016, %v2012
    %v2085 = vpack.c.b16 %v2017, %v2013
    %v2086 = vpack.c.b16 %v2018, %v2014
    %v2087 = vpack.c.b16 %v2023, %v2019
    %v2088 = vpack.c.b16 %v2024, %v2020
    %v2089 = vpack.c.b16 %v2025, %v2021
    %v2090 = vpack.c.b16 %v2026, %v2022
    %2155 = vmatprep.subr.bf16.mxu0 %v2028
    %2156 = vmatpush1.bf16.msra.mxu0 %v2027
    %2157 = vmatprep.subr.bf16.mxu0 %v2032
    %2158 = vmatpush1.bf16.msra.mxu0 %v2031
    %2159 = vmatprep.subr.bf16.mxu0 %v2036
    %2160 = vmatpush1.bf16.msra.mxu0 %v2035
    %2161 = vmatprep.subr.bf16.mxu0 %v2040
    %2162 = vmatpush1.bf16.msra.mxu0 %v2039
    %2163 = vmatprep.subr.bf16.mxu0 %v2044
    %2164 = vmatpush1.bf16.msra.mxu0 %v2043
    %2165 = vmatprep.subr.bf16.mxu0 %v2048
    %2166 = vmatpush1.bf16.msra.mxu0 %v2047
    %2167 = vmatprep.subr.bf16.mxu0 %v2052
    %2168 = vmatpush1.bf16.msra.mxu0 %v2051
    %2169 = vmatprep.subr.bf16.mxu0 %v2056
    %2170 = vmatpush1.bf16.msra.mxu0 %v2055
    %2171 = vmatprep.subr.bf16.mxu0 %v2060
    %2172 = vmatpush1.bf16.msra.mxu0 %v2059
    %2173 = vmatprep.subr.bf16.mxu0 %v2064
    %2174 = vmatpush1.bf16.msra.mxu0 %v2063
    %2175 = vmatprep.subr.bf16.mxu0 %v2068
    %2176 = vmatpush1.bf16.msra.mxu0 %v2067
    %2177 = vmatprep.subr.bf16.mxu0 %v2072
    %2178 = vmatpush1.bf16.msra.mxu0 %v2071
    %2179 = vmatprep.subr.bf16.mxu0 %v2076
    %2180 = vmatpush1.bf16.msra.mxu0 %v2075
    %2181 = vmatprep.subr.bf16.mxu0 %v2080
    %2182 = vmatpush1.bf16.msra.mxu0 %v2079
    %2183 = vmatprep.subr.bf16.mxu0 %v2084
    %2184 = vmatpush1.bf16.msra.mxu0 %v2083
    %2185 = vmatprep.subr.bf16.mxu0 %v2088
    %2186 = vmatpush1.bf16.msra.mxu0 %v2087
    %2187 = vmatprep.mubr.bf16.mxu0 %v828
    %2188 = vmatmul.mubr.bf16.gmra.mrb[0].mxu0 %v827
    %v2189 = vpop.f32.mrb[0].mxu0
    %v2190 = vadd.f32 0.0, %v2189
    %v2191 = vpop.f32.mrb[0].mxu0
    %v2192 = vadd.f32 0.0, %v2191
    %v2193 = vpop.f32.mrb[0].mxu0
    %v2194 = vpop.f32.mrb[0].mxu0
    %2195 = vdwg.mxu0
    %2196 = vmatprep.subr.bf16.mxu0 %v2030
    %2197 = vmatpush1.bf16.msra.mxu0 %v2029
    %2198 = vmatprep.subr.bf16.mxu0 %v2034
    %2199 = vmatpush1.bf16.msra.mxu0 %v2033
    %2200 = vmatprep.subr.bf16.mxu0 %v2038
    %2201 = vmatpush1.bf16.msra.mxu0 %v2037
    %2202 = vmatprep.subr.bf16.mxu0 %v2042
    %2203 = vmatpush1.bf16.msra.mxu0 %v2041
    %2204 = vmatprep.subr.bf16.mxu0 %v2046
    %2205 = vmatpush1.bf16.msra.mxu0 %v2045
    %2206 = vmatprep.subr.bf16.mxu0 %v2050
    %2207 = vmatpush1.bf16.msra.mxu0 %v2049
    %2208 = vmatprep.subr.bf16.mxu0 %v2054
    %2209 = vmatpush1.bf16.msra.mxu0 %v2053
    %2210 = vmatprep.subr.bf16.mxu0 %v2058
    %2211 = vmatpush1.bf16.msra.mxu0 %v2057
    %2212 = vmatprep.subr.bf16.mxu0 %v2062
    %2213 = vmatpush1.bf16.msra.mxu0 %v2061
    %2214 = vmatprep.subr.bf16.mxu0 %v2066
    %2215 = vmatpush1.bf16.msra.mxu0 %v2065
    %2216 = vmatprep.subr.bf16.mxu0 %v2070
    %2217 = vmatpush1.bf16.msra.mxu0 %v2069
    %2218 = vmatprep.subr.bf16.mxu0 %v2074
    %2219 = vmatpush1.bf16.msra.mxu0 %v2073
    %2220 = vmatprep.subr.bf16.mxu0 %v2078
    %2221 = vmatpush1.bf16.msra.mxu0 %v2077
    %2222 = vmatprep.subr.bf16.mxu0 %v2082
    %2223 = vmatpush1.bf16.msra.mxu0 %v2081
    %2224 = vmatprep.subr.bf16.mxu0 %v2086
    %2225 = vmatpush1.bf16.msra.mxu0 %v2085
    %2226 = vmatprep.subr.bf16.mxu0 %v2090
    %2227 = vmatpush1.bf16.msra.mxu0 %v2089
    %2228 = vmatprep.mubr.bf16.mxu0 %v828
    %2229 = vmatmul.mubr.bf16.gmra.mrb[0].mxu0 %v827
    %v2230 = vpop.f32.mrb[0].mxu0
    %v2231 = vadd.f32 0.0, %v2230
    %v2232 = vpop.f32.mrb[0].mxu0
    %v2233 = vadd.f32 0.0, %v2232
    %v2234 = vpop.f32.mrb[0].mxu0
    %v2235 = vpop.f32.mrb[0].mxu0
    %2236 = vdwg.mxu0
    %v2237 = vadd.f32 %v1723, %v2190
    %v2238 = vadd.f32 %v1725, %v2192
    %v2239 = vadd.f32 %v1764, %v2231
    %v2240 = vadd.f32 %v1766, %v2233
    %s2241 = scalar_lea.vmem [#allocation13], 1536
    %v2242 = vld [vmem:[%s2241] sm:$0xff]
    %v2243 = vld [vmem:[%s2241 + $0x8] sm:$0xff]
    %v2244 = vld [vmem:[%s2241 + $0x10] sm:$0xff]
    %v2245 = vld [vmem:[%s2241 + $0x18] sm:$0xff]
    %v2246 = vld [vmem:[%s2241 + $0x20] sm:$0xff]
    %v2247 = vld [vmem:[%s2241 + $0x28] sm:$0xff]
    %v2248 = vld [vmem:[%s2241 + $0x30] sm:$0xff]
    %v2249 = vld [vmem:[%s2241 + $0x38] sm:$0xff]
    %v2250 = vld [vmem:[%s2241 + $0x40] sm:$0xff]
    %v2251 = vld [vmem:[%s2241 + $0x48] sm:$0xff]
    %v2252 = vld [vmem:[%s2241 + $0x50] sm:$0xff]
    %v2253 = vld [vmem:[%s2241 + $0x58] sm:$0xff]
    %v2254 = vld [vmem:[%s2241 + $0x60] sm:$0xff]
    %v2255 = vld [vmem:[%s2241 + $0x68] sm:$0xff]
    %v2256 = vld [vmem:[%s2241 + $0x70] sm:$0xff]
    %v2257 = vld [vmem:[%s2241 + $0x78] sm:$0xff]
    %v2258 = vld [vmem:[%s2241 + $0x80] sm:$0xff]
    %v2259 = vld [vmem:[%s2241 + $0x88] sm:$0xff]
    %v2260 = vld [vmem:[%s2241 + $0x90] sm:$0xff]
    %v2261 = vld [vmem:[%s2241 + $0x98] sm:$0xff]
    %v2262 = vld [vmem:[%s2241 + $0xa0] sm:$0xff]
    %v2263 = vld [vmem:[%s2241 + $0xa8] sm:$0xff]
    %v2264 = vld [vmem:[%s2241 + $0xb0] sm:$0xff]
    %v2265 = vld [vmem:[%s2241 + $0xb8] sm:$0xff]
    %v2266 = vld [vmem:[%s2241 + $0xc0] sm:$0xff]
    %v2267 = vld [vmem:[%s2241 + $0xc8] sm:$0xff]
    %v2268 = vld [vmem:[%s2241 + $0xd0] sm:$0xff]
    %v2269 = vld [vmem:[%s2241 + $0xd8] sm:$0xff]
    %v2270 = vld [vmem:[%s2241 + $0xe0] sm:$0xff]
    %v2271 = vld [vmem:[%s2241 + $0xe8] sm:$0xff]
    %v2272 = vld [vmem:[%s2241 + $0xf0] sm:$0xff]
    %v2273 = vld [vmem:[%s2241 + $0xf8] sm:$0xff]
    %v2274 = vld [vmem:[%s2241 + $0x100] sm:$0xff]
    %v2275 = vld [vmem:[%s2241 + $0x108] sm:$0xff]
    %v2276 = vld [vmem:[%s2241 + $0x110] sm:$0xff]
    %v2277 = vld [vmem:[%s2241 + $0x118] sm:$0xff]
    %v2278 = vld [vmem:[%s2241 + $0x120] sm:$0xff]
    %v2279 = vld [vmem:[%s2241 + $0x128] sm:$0xff]
    %v2280 = vld [vmem:[%s2241 + $0x130] sm:$0xff]
    %v2281 = vld [vmem:[%s2241 + $0x138] sm:$0xff]
    %v2282 = vld [vmem:[%s2241 + $0x140] sm:$0xff]
    %v2283 = vld [vmem:[%s2241 + $0x148] sm:$0xff]
    %v2284 = vld [vmem:[%s2241 + $0x150] sm:$0xff]
    %v2285 = vld [vmem:[%s2241 + $0x158] sm:$0xff]
    %v2286 = vld [vmem:[%s2241 + $0x160] sm:$0xff]
    %v2287 = vld [vmem:[%s2241 + $0x168] sm:$0xff]
    %v2288 = vld [vmem:[%s2241 + $0x170] sm:$0xff]
    %v2289 = vld [vmem:[%s2241 + $0x178] sm:$0xff]
    %v2290 = vld [vmem:[%s2241 + $0x180] sm:$0xff]
    %v2291 = vld [vmem:[%s2241 + $0x188] sm:$0xff]
    %v2292 = vld [vmem:[%s2241 + $0x190] sm:$0xff]
    %v2293 = vld [vmem:[%s2241 + $0x198] sm:$0xff]
    %v2294 = vld [vmem:[%s2241 + $0x1a0] sm:$0xff]
    %v2295 = vld [vmem:[%s2241 + $0x1a8] sm:$0xff]
    %v2296 = vld [vmem:[%s2241 + $0x1b0] sm:$0xff]
    %v2297 = vld [vmem:[%s2241 + $0x1b8] sm:$0xff]
    %v2298 = vld [vmem:[%s2241 + $0x1c0] sm:$0xff]
    %v2299 = vld [vmem:[%s2241 + $0x1c8] sm:$0xff]
    %v2300 = vld [vmem:[%s2241 + $0x1d0] sm:$0xff]
    %v2301 = vld [vmem:[%s2241 + $0x1d8] sm:$0xff]
    %v2302 = vld [vmem:[%s2241 + $0x1e0] sm:$0xff]
    %v2303 = vld [vmem:[%s2241 + $0x1e8] sm:$0xff]
    %v2304 = vld [vmem:[%s2241 + $0x1f0] sm:$0xff]
    %v2305 = vld [vmem:[%s2241 + $0x1f8] sm:$0xff]
    %v2370 = vunpack.c.l.b16 %v2242
    %v2371 = vunpack.c.h.b16 %v2242
    %v2372 = vunpack.c.l.b16 %v2243
    %v2373 = vunpack.c.h.b16 %v2243
    %v2374 = vunpack.c.l.b16 %v2244
    %v2375 = vunpack.c.h.b16 %v2244
    %v2376 = vunpack.c.l.b16 %v2245
    %v2377 = vunpack.c.h.b16 %v2245
    %v2378 = vunpack.c.l.b16 %v2246
    %v2379 = vunpack.c.h.b16 %v2246
    %v2380 = vunpack.c.l.b16 %v2247
    %v2381 = vunpack.c.h.b16 %v2247
    %v2382 = vunpack.c.l.b16 %v2248
    %v2383 = vunpack.c.h.b16 %v2248
    %v2384 = vunpack.c.l.b16 %v2249
    %v2385 = vunpack.c.h.b16 %v2249
    %v2386 = vunpack.c.l.b16 %v2250
    %v2387 = vunpack.c.h.b16 %v2250
    %v2388 = vunpack.c.l.b16 %v2251
    %v2389 = vunpack.c.h.b16 %v2251
    %v2390 = vunpack.c.l.b16 %v2252
    %v2391 = vunpack.c.h.b16 %v2252
    %v2392 = vunpack.c.l.b16 %v2253
    %v2393 = vunpack.c.h.b16 %v2253
    %v2394 = vunpack.c.l.b16 %v2254
    %v2395 = vunpack.c.h.b16 %v2254
    %v2396 = vunpack.c.l.b16 %v2255
    %v2397 = vunpack.c.h.b16 %v2255
    %v2398 = vunpack.c.l.b16 %v2256
    %v2399 = vunpack.c.h.b16 %v2256
    %v2400 = vunpack.c.l.b16 %v2257
    %v2401 = vunpack.c.h.b16 %v2257
    %v2402 = vunpack.c.l.b16 %v2258
    %v2403 = vunpack.c.h.b16 %v2258
    %v2404 = vunpack.c.l.b16 %v2259
    %v2405 = vunpack.c.h.b16 %v2259
    %v2406 = vunpack.c.l.b16 %v2260
    %v2407 = vunpack.c.h.b16 %v2260
    %v2408 = vunpack.c.l.b16 %v2261
    %v2409 = vunpack.c.h.b16 %v2261
    %v2410 = vunpack.c.l.b16 %v2262
    %v2411 = vunpack.c.h.b16 %v2262
    %v2412 = vunpack.c.l.b16 %v2263
    %v2413 = vunpack.c.h.b16 %v2263
    %v2414 = vunpack.c.l.b16 %v2264
    %v2415 = vunpack.c.h.b16 %v2264
    %v2416 = vunpack.c.l.b16 %v2265
    %v2417 = vunpack.c.h.b16 %v2265
    %v2418 = vunpack.c.l.b16 %v2266
    %v2419 = vunpack.c.h.b16 %v2266
    %v2420 = vunpack.c.l.b16 %v2267
    %v2421 = vunpack.c.h.b16 %v2267
    %v2422 = vunpack.c.l.b16 %v2268
    %v2423 = vunpack.c.h.b16 %v2268
    %v2424 = vunpack.c.l.b16 %v2269
    %v2425 = vunpack.c.h.b16 %v2269
    %v2426 = vunpack.c.l.b16 %v2270
    %v2427 = vunpack.c.h.b16 %v2270
    %v2428 = vunpack.c.l.b16 %v2271
    %v2429 = vunpack.c.h.b16 %v2271
    %v2430 = vunpack.c.l.b16 %v2272
    %v2431 = vunpack.c.h.b16 %v2272
    %v2432 = vunpack.c.l.b16 %v2273
    %v2433 = vunpack.c.h.b16 %v2273
    %v2434 = vunpack.c.l.b16 %v2274
    %v2435 = vunpack.c.h.b16 %v2274
    %v2436 = vunpack.c.l.b16 %v2275
    %v2437 = vunpack.c.h.b16 %v2275
    %v2438 = vunpack.c.l.b16 %v2276
    %v2439 = vunpack.c.h.b16 %v2276
    %v2440 = vunpack.c.l.b16 %v2277
    %v2441 = vunpack.c.h.b16 %v2277
    %v2442 = vunpack.c.l.b16 %v2278
    %v2443 = vunpack.c.h.b16 %v2278
    %v2444 = vunpack.c.l.b16 %v2279
    %v2445 = vunpack.c.h.b16 %v2279
    %v2446 = vunpack.c.l.b16 %v2280
    %v2447 = vunpack.c.h.b16 %v2280
    %v2448 = vunpack.c.l.b16 %v2281
    %v2449 = vunpack.c.h.b16 %v2281
    %v2450 = vunpack.c.l.b16 %v2282
    %v2451 = vunpack.c.h.b16 %v2282
    %v2452 = vunpack.c.l.b16 %v2283
    %v2453 = vunpack.c.h.b16 %v2283
    %v2454 = vunpack.c.l.b16 %v2284
    %v2455 = vunpack.c.h.b16 %v2284
    %v2456 = vunpack.c.l.b16 %v2285
    %v2457 = vunpack.c.h.b16 %v2285
    %v2458 = vunpack.c.l.b16 %v2286
    %v2459 = vunpack.c.h.b16 %v2286
    %v2460 = vunpack.c.l.b16 %v2287
    %v2461 = vunpack.c.h.b16 %v2287
    %v2462 = vunpack.c.l.b16 %v2288
    %v2463 = vunpack.c.h.b16 %v2288
    %v2464 = vunpack.c.l.b16 %v2289
    %v2465 = vunpack.c.h.b16 %v2289
    %v2466 = vunpack.c.l.b16 %v2290
    %v2467 = vunpack.c.h.b16 %v2290
    %v2468 = vunpack.c.l.b16 %v2291
    %v2469 = vunpack.c.h.b16 %v2291
    %v2470 = vunpack.c.l.b16 %v2292
    %v2471 = vunpack.c.h.b16 %v2292
    %v2472 = vunpack.c.l.b16 %v2293
    %v2473 = vunpack.c.h.b16 %v2293
    %v2474 = vunpack.c.l.b16 %v2294
    %v2475 = vunpack.c.h.b16 %v2294
    %v2476 = vunpack.c.l.b16 %v2295
    %v2477 = vunpack.c.h.b16 %v2295
    %v2478 = vunpack.c.l.b16 %v2296
    %v2479 = vunpack.c.h.b16 %v2296
    %v2480 = vunpack.c.l.b16 %v2297
    %v2481 = vunpack.c.h.b16 %v2297
    %v2482 = vunpack.c.l.b16 %v2298
    %v2483 = vunpack.c.h.b16 %v2298
    %v2484 = vunpack.c.l.b16 %v2299
    %v2485 = vunpack.c.h.b16 %v2299
    %v2486 = vunpack.c.l.b16 %v2300
    %v2487 = vunpack.c.h.b16 %v2300
    %v2488 = vunpack.c.l.b16 %v2301
    %v2489 = vunpack.c.h.b16 %v2301
    %v2490 = vunpack.c.l.b16 %v2302
    %v2491 = vunpack.c.h.b16 %v2302
    %v2492 = vunpack.c.l.b16 %v2303
    %v2493 = vunpack.c.h.b16 %v2303
    %v2494 = vunpack.c.l.b16 %v2304
    %v2495 = vunpack.c.h.b16 %v2304
    %v2496 = vunpack.c.l.b16 %v2305
    %v2497 = vunpack.c.h.b16 %v2305
    %v2498 = vpack.c.b16 %v2374, %v2370
    %v2499 = vpack.c.b16 %v2375, %v2371
    %v2500 = vpack.c.b16 %v2376, %v2372
    %v2501 = vpack.c.b16 %v2377, %v2373
    %v2502 = vpack.c.b16 %v2382, %v2378
    %v2503 = vpack.c.b16 %v2383, %v2379
    %v2504 = vpack.c.b16 %v2384, %v2380
    %v2505 = vpack.c.b16 %v2385, %v2381
    %v2506 = vpack.c.b16 %v2390, %v2386
    %v2507 = vpack.c.b16 %v2391, %v2387
    %v2508 = vpack.c.b16 %v2392, %v2388
    %v2509 = vpack.c.b16 %v2393, %v2389
    %v2510 = vpack.c.b16 %v2398, %v2394
    %v2511 = vpack.c.b16 %v2399, %v2395
    %v2512 = vpack.c.b16 %v2400, %v2396
    %v2513 = vpack.c.b16 %v2401, %v2397
    %v2514 = vpack.c.b16 %v2406, %v2402
    %v2515 = vpack.c.b16 %v2407, %v2403
    %v2516 = vpack.c.b16 %v2408, %v2404
    %v2517 = vpack.c.b16 %v2409, %v2405
    %v2518 = vpack.c.b16 %v2414, %v2410
    %v2519 = vpack.c.b16 %v2415, %v2411
    %v2520 = vpack.c.b16 %v2416, %v2412
    %v2521 = vpack.c.b16 %v2417, %v2413
    %v2522 = vpack.c.b16 %v2422, %v2418
    %v2523 = vpack.c.b16 %v2423, %v2419
    %v2524 = vpack.c.b16 %v2424, %v2420
    %v2525 = vpack.c.b16 %v2425, %v2421
    %v2526 = vpack.c.b16 %v2430, %v2426
    %v2527 = vpack.c.b16 %v2431, %v2427
    %v2528 = vpack.c.b16 %v2432, %v2428
    %v2529 = vpack.c.b16 %v2433, %v2429
    %v2530 = vpack.c.b16 %v2438, %v2434
    %v2531 = vpack.c.b16 %v2439, %v2435
    %v2532 = vpack.c.b16 %v2440, %v2436
    %v2533 = vpack.c.b16 %v2441, %v2437
    %v2534 = vpack.c.b16 %v2446, %v2442
    %v2535 = vpack.c.b16 %v2447, %v2443
    %v2536 = vpack.c.b16 %v2448, %v2444
    %v2537 = vpack.c.b16 %v2449, %v2445
    %v2538 = vpack.c.b16 %v2454, %v2450
    %v2539 = vpack.c.b16 %v2455, %v2451
    %v2540 = vpack.c.b16 %v2456, %v2452
    %v2541 = vpack.c.b16 %v2457, %v2453
    %v2542 = vpack.c.b16 %v2462, %v2458
    %v2543 = vpack.c.b16 %v2463, %v2459
    %v2544 = vpack.c.b16 %v2464, %v2460
    %v2545 = vpack.c.b16 %v2465, %v2461
    %v2546 = vpack.c.b16 %v2470, %v2466
    %v2547 = vpack.c.b16 %v2471, %v2467
    %v2548 = vpack.c.b16 %v2472, %v2468
    %v2549 = vpack.c.b16 %v2473, %v2469
    %v2550 = vpack.c.b16 %v2478, %v2474
    %v2551 = vpack.c.b16 %v2479, %v2475
    %v2552 = vpack.c.b16 %v2480, %v2476
    %v2553 = vpack.c.b16 %v2481, %v2477
    %v2554 = vpack.c.b16 %v2486, %v2482
    %v2555 = vpack.c.b16 %v2487, %v2483
    %v2556 = vpack.c.b16 %v2488, %v2484
    %v2557 = vpack.c.b16 %v2489, %v2485
    %v2558 = vpack.c.b16 %v2494, %v2490
    %v2559 = vpack.c.b16 %v2495, %v2491
    %v2560 = vpack.c.b16 %v2496, %v2492
    %v2561 = vpack.c.b16 %v2497, %v2493
    %2626 = vmatprep.subr.bf16.mxu0 %v2499
    %2627 = vmatpush1.bf16.msra.mxu0 %v2498
    %2628 = vmatprep.subr.bf16.mxu0 %v2503
    %2629 = vmatpush1.bf16.msra.mxu0 %v2502
    %2630 = vmatprep.subr.bf16.mxu0 %v2507
    %2631 = vmatpush1.bf16.msra.mxu0 %v2506
    %2632 = vmatprep.subr.bf16.mxu0 %v2511
    %2633 = vmatpush1.bf16.msra.mxu0 %v2510
    %2634 = vmatprep.subr.bf16.mxu0 %v2515
    %2635 = vmatpush1.bf16.msra.mxu0 %v2514
    %2636 = vmatprep.subr.bf16.mxu0 %v2519
    %2637 = vmatpush1.bf16.msra.mxu0 %v2518
    %2638 = vmatprep.subr.bf16.mxu0 %v2523
    %2639 = vmatpush1.bf16.msra.mxu0 %v2522
    %2640 = vmatprep.subr.bf16.mxu0 %v2527
    %2641 = vmatpush1.bf16.msra.mxu0 %v2526
    %2642 = vmatprep.subr.bf16.mxu0 %v2531
    %2643 = vmatpush1.bf16.msra.mxu0 %v2530
    %2644 = vmatprep.subr.bf16.mxu0 %v2535
    %2645 = vmatpush1.bf16.msra.mxu0 %v2534
    %2646 = vmatprep.subr.bf16.mxu0 %v2539
    %2647 = vmatpush1.bf16.msra.mxu0 %v2538
    %2648 = vmatprep.subr.bf16.mxu0 %v2543
    %2649 = vmatpush1.bf16.msra.mxu0 %v2542
    %2650 = vmatprep.subr.bf16.mxu0 %v2547
    %2651 = vmatpush1.bf16.msra.mxu0 %v2546
    %2652 = vmatprep.subr.bf16.mxu0 %v2551
    %2653 = vmatpush1.bf16.msra.mxu0 %v2550
    %2654 = vmatprep.subr.bf16.mxu0 %v2555
    %2655 = vmatpush1.bf16.msra.mxu0 %v2554
    %2656 = vmatprep.subr.bf16.mxu0 %v2559
    %2657 = vmatpush1.bf16.msra.mxu0 %v2558
    %2658 = vmatprep.mubr.bf16.mxu0 %v830
    %2659 = vmatmul.mubr.bf16.gmra.mrb[0].mxu0 %v829
    %v2660 = vpop.f32.mrb[0].mxu0
    %v2661 = vadd.f32 0.0, %v2660
    %v2662 = vpop.f32.mrb[0].mxu0
    %v2663 = vadd.f32 0.0, %v2662
    %v2664 = vpop.f32.mrb[0].mxu0
    %v2665 = vpop.f32.mrb[0].mxu0
    %2666 = vdwg.mxu0
    %2667 = vmatprep.subr.bf16.mxu0 %v2501
    %2668 = vmatpush1.bf16.msra.mxu0 %v2500
    %2669 = vmatprep.subr.bf16.mxu0 %v2505
    %2670 = vmatpush1.bf16.msra.mxu0 %v2504
    %2671 = vmatprep.subr.bf16.mxu0 %v2509
    %2672 = vmatpush1.bf16.msra.mxu0 %v2508
    %2673 = vmatprep.subr.bf16.mxu0 %v2513
    %2674 = vmatpush1.bf16.msra.mxu0 %v2512
    %2675 = vmatprep.subr.bf16.mxu0 %v2517
    %2676 = vmatpush1.bf16.msra.mxu0 %v2516
    %2677 = vmatprep.subr.bf16.mxu0 %v2521
    %2678 = vmatpush1.bf16.msra.mxu0 %v2520
    %2679 = vmatprep.subr.bf16.mxu0 %v2525
    %2680 = vmatpush1.bf16.msra.mxu0 %v2524
    %2681 = vmatprep.subr.bf16.mxu0 %v2529
    %2682 = vmatpush1.bf16.msra.mxu0 %v2528
    %2683 = vmatprep.subr.bf16.mxu0 %v2533
    %2684 = vmatpush1.bf16.msra.mxu0 %v2532
    %2685 = vmatprep.subr.bf16.mxu0 %v2537
    %2686 = vmatpush1.bf16.msra.mxu0 %v2536
    %2687 = vmatprep.subr.bf16.mxu0 %v2541
    %2688 = vmatpush1.bf16.msra.mxu0 %v2540
    %2689 = vmatprep.subr.bf16.mxu0 %v2545
    %2690 = vmatpush1.bf16.msra.mxu0 %v2544
    %2691 = vmatprep.subr.bf16.mxu0 %v2549
    %2692 = vmatpush1.bf16.msra.mxu0 %v2548
    %2693 = vmatprep.subr.bf16.mxu0 %v2553
    %2694 = vmatpush1.bf16.msra.mxu0 %v2552
    %2695 = vmatprep.subr.bf16.mxu0 %v2557
    %2696 = vmatpush1.bf16.msra.mxu0 %v2556
    %2697 = vmatprep.subr.bf16.mxu0 %v2561
    %2698 = vmatpush1.bf16.msra.mxu0 %v2560
    %2699 = vmatprep.mubr.bf16.mxu0 %v830
    %2700 = vmatmul.mubr.bf16.gmra.mrb[0].mxu0 %v829
    %v2701 = vpop.f32.mrb[0].mxu0
    %v2702 = vadd.f32 0.0, %v2701
    %v2703 = vpop.f32.mrb[0].mxu0
    %v2704 = vadd.f32 0.0, %v2703
    %v2705 = vpop.f32.mrb[0].mxu0
    %v2706 = vpop.f32.mrb[0].mxu0
    %2707 = vdwg.mxu0
    %v2708 = vadd.f32 %v2237, %v2661
    %v2709 = vadd.f32 %v2238, %v2663
    %v2710 = vadd.f32 %v2239, %v2702
    %v2711 = vadd.f32 %v2240, %v2704
    %s2712 = scalar_lea.vmem [#allocation13], 2048
    %v2713 = vld [vmem:[%s2712] sm:$0xff]
    %v2714 = vld [vmem:[%s2712 + $0x8] sm:$0xff]
    %v2715 = vld [vmem:[%s2712 + $0x10] sm:$0xff]
    %v2716 = vld [vmem:[%s2712 + $0x18] sm:$0xff]
    %v2717 = vld [vmem:[%s2712 + $0x20] sm:$0xff]
    %v2718 = vld [vmem:[%s2712 + $0x28] sm:$0xff]
    %v2719 = vld [vmem:[%s2712 + $0x30] sm:$0xff]
    %v2720 = vld [vmem:[%s2712 + $0x38] sm:$0xff]
    %v2721 = vld [vmem:[%s2712 + $0x40] sm:$0xff]
    %v2722 = vld [vmem:[%s2712 + $0x48] sm:$0xff]
    %v2723 = vld [vmem:[%s2712 + $0x50] sm:$0xff]
    %v2724 = vld [vmem:[%s2712 + $0x58] sm:$0xff]
    %v2725 = vld [vmem:[%s2712 + $0x60] sm:$0xff]
    %v2726 = vld [vmem:[%s2712 + $0x68] sm:$0xff]
    %v2727 = vld [vmem:[%s2712 + $0x70] sm:$0xff]
    %v2728 = vld [vmem:[%s2712 + $0x78] sm:$0xff]
    %v2729 = vld [vmem:[%s2712 + $0x80] sm:$0xff]
    %v2730 = vld [vmem:[%s2712 + $0x88] sm:$0xff]
    %v2731 = vld [vmem:[%s2712 + $0x90] sm:$0xff]
    %v2732 = vld [vmem:[%s2712 + $0x98] sm:$0xff]
    %v2733 = vld [vmem:[%s2712 + $0xa0] sm:$0xff]
    %v2734 = vld [vmem:[%s2712 + $0xa8] sm:$0xff]
    %v2735 = vld [vmem:[%s2712 + $0xb0] sm:$0xff]
    %v2736 = vld [vmem:[%s2712 + $0xb8] sm:$0xff]
    %v2737 = vld [vmem:[%s2712 + $0xc0] sm:$0xff]
    %v2738 = vld [vmem:[%s2712 + $0xc8] sm:$0xff]
    %v2739 = vld [vmem:[%s2712 + $0xd0] sm:$0xff]
    %v2740 = vld [vmem:[%s2712 + $0xd8] sm:$0xff]
    %v2741 = vld [vmem:[%s2712 + $0xe0] sm:$0xff]
    %v2742 = vld [vmem:[%s2712 + $0xe8] sm:$0xff]
    %v2743 = vld [vmem:[%s2712 + $0xf0] sm:$0xff]
    %v2744 = vld [vmem:[%s2712 + $0xf8] sm:$0xff]
    %v2745 = vld [vmem:[%s2712 + $0x100] sm:$0xff]
    %v2746 = vld [vmem:[%s2712 + $0x108] sm:$0xff]
    %v2747 = vld [vmem:[%s2712 + $0x110] sm:$0xff]
    %v2748 = vld [vmem:[%s2712 + $0x118] sm:$0xff]
    %v2749 = vld [vmem:[%s2712 + $0x120] sm:$0xff]
    %v2750 = vld [vmem:[%s2712 + $0x128] sm:$0xff]
    %v2751 = vld [vmem:[%s2712 + $0x130] sm:$0xff]
    %v2752 = vld [vmem:[%s2712 + $0x138] sm:$0xff]
    %v2753 = vld [vmem:[%s2712 + $0x140] sm:$0xff]
    %v2754 = vld [vmem:[%s2712 + $0x148] sm:$0xff]
    %v2755 = vld [vmem:[%s2712 + $0x150] sm:$0xff]
    %v2756 = vld [vmem:[%s2712 + $0x158] sm:$0xff]
    %v2757 = vld [vmem:[%s2712 + $0x160] sm:$0xff]
    %v2758 = vld [vmem:[%s2712 + $0x168] sm:$0xff]
    %v2759 = vld [vmem:[%s2712 + $0x170] sm:$0xff]
    %v2760 = vld [vmem:[%s2712 + $0x178] sm:$0xff]
    %v2761 = vld [vmem:[%s2712 + $0x180] sm:$0xff]
    %v2762 = vld [vmem:[%s2712 + $0x188] sm:$0xff]
    %v2763 = vld [vmem:[%s2712 + $0x190] sm:$0xff]
    %v2764 = vld [vmem:[%s2712 + $0x198] sm:$0xff]
    %v2765 = vld [vmem:[%s2712 + $0x1a0] sm:$0xff]
    %v2766 = vld [vmem:[%s2712 + $0x1a8] sm:$0xff]
    %v2767 = vld [vmem:[%s2712 + $0x1b0] sm:$0xff]
    %v2768 = vld [vmem:[%s2712 + $0x1b8] sm:$0xff]
    %v2769 = vld [vmem:[%s2712 + $0x1c0] sm:$0xff]
    %v2770 = vld [vmem:[%s2712 + $0x1c8] sm:$0xff]
    %v2771 = vld [vmem:[%s2712 + $0x1d0] sm:$0xff]
    %v2772 = vld [vmem:[%s2712 + $0x1d8] sm:$0xff]
    %v2773 = vld [vmem:[%s2712 + $0x1e0] sm:$0xff]
    %v2774 = vld [vmem:[%s2712 + $0x1e8] sm:$0xff]
    %v2775 = vld [vmem:[%s2712 + $0x1f0] sm:$0xff]
    %v2776 = vld [vmem:[%s2712 + $0x1f8] sm:$0xff]
    %v2841 = vunpack.c.l.b16 %v2713
    %v2842 = vunpack.c.h.b16 %v2713
    %v2843 = vunpack.c.l.b16 %v2714
    %v2844 = vunpack.c.h.b16 %v2714
    %v2845 = vunpack.c.l.b16 %v2715
    %v2846 = vunpack.c.h.b16 %v2715
    %v2847 = vunpack.c.l.b16 %v2716
    %v2848 = vunpack.c.h.b16 %v2716
    %v2849 = vunpack.c.l.b16 %v2717
    %v2850 = vunpack.c.h.b16 %v2717
    %v2851 = vunpack.c.l.b16 %v2718
    %v2852 = vunpack.c.h.b16 %v2718
    %v2853 = vunpack.c.l.b16 %v2719
    %v2854 = vunpack.c.h.b16 %v2719
    %v2855 = vunpack.c.l.b16 %v2720
    %v2856 = vunpack.c.h.b16 %v2720
    %v2857 = vunpack.c.l.b16 %v2721
    %v2858 = vunpack.c.h.b16 %v2721
    %v2859 = vunpack.c.l.b16 %v2722
    %v2860 = vunpack.c.h.b16 %v2722
    %v2861 = vunpack.c.l.b16 %v2723
    %v2862 = vunpack.c.h.b16 %v2723
    %v2863 = vunpack.c.l.b16 %v2724
    %v2864 = vunpack.c.h.b16 %v2724
    %v2865 = vunpack.c.l.b16 %v2725
    %v2866 = vunpack.c.h.b16 %v2725
    %v2867 = vunpack.c.l.b16 %v2726
    %v2868 = vunpack.c.h.b16 %v2726
    %v2869 = vunpack.c.l.b16 %v2727
    %v2870 = vunpack.c.h.b16 %v2727
    %v2871 = vunpack.c.l.b16 %v2728
    %v2872 = vunpack.c.h.b16 %v2728
    %v2873 = vunpack.c.l.b16 %v2729
    %v2874 = vunpack.c.h.b16 %v2729
    %v2875 = vunpack.c.l.b16 %v2730
    %v2876 = vunpack.c.h.b16 %v2730
    %v2877 = vunpack.c.l.b16 %v2731
    %v2878 = vunpack.c.h.b16 %v2731
    %v2879 = vunpack.c.l.b16 %v2732
    %v2880 = vunpack.c.h.b16 %v2732
    %v2881 = vunpack.c.l.b16 %v2733
    %v2882 = vunpack.c.h.b16 %v2733
    %v2883 = vunpack.c.l.b16 %v2734
    %v2884 = vunpack.c.h.b16 %v2734
    %v2885 = vunpack.c.l.b16 %v2735
    %v2886 = vunpack.c.h.b16 %v2735
    %v2887 = vunpack.c.l.b16 %v2736
    %v2888 = vunpack.c.h.b16 %v2736
    %v2889 = vunpack.c.l.b16 %v2737
    %v2890 = vunpack.c.h.b16 %v2737
    %v2891 = vunpack.c.l.b16 %v2738
    %v2892 = vunpack.c.h.b16 %v2738
    %v2893 = vunpack.c.l.b16 %v2739
    %v2894 = vunpack.c.h.b16 %v2739
    %v2895 = vunpack.c.l.b16 %v2740
    %v2896 = vunpack.c.h.b16 %v2740
    %v2897 = vunpack.c.l.b16 %v2741
    %v2898 = vunpack.c.h.b16 %v2741
    %v2899 = vunpack.c.l.b16 %v2742
    %v2900 = vunpack.c.h.b16 %v2742
    %v2901 = vunpack.c.l.b16 %v2743
    %v2902 = vunpack.c.h.b16 %v2743
    %v2903 = vunpack.c.l.b16 %v2744
    %v2904 = vunpack.c.h.b16 %v2744
    %v2905 = vunpack.c.l.b16 %v2745
    %v2906 = vunpack.c.h.b16 %v2745
    %v2907 = vunpack.c.l.b16 %v2746
    %v2908 = vunpack.c.h.b16 %v2746
    %v2909 = vunpack.c.l.b16 %v2747
    %v2910 = vunpack.c.h.b16 %v2747
    %v2911 = vunpack.c.l.b16 %v2748
    %v2912 = vunpack.c.h.b16 %v2748
    %v2913 = vunpack.c.l.b16 %v2749
    %v2914 = vunpack.c.h.b16 %v2749
    %v2915 = vunpack.c.l.b16 %v2750
    %v2916 = vunpack.c.h.b16 %v2750
    %v2917 = vunpack.c.l.b16 %v2751
    %v2918 = vunpack.c.h.b16 %v2751
    %v2919 = vunpack.c.l.b16 %v2752
    %v2920 = vunpack.c.h.b16 %v2752
    %v2921 = vunpack.c.l.b16 %v2753
    %v2922 = vunpack.c.h.b16 %v2753
    %v2923 = vunpack.c.l.b16 %v2754
    %v2924 = vunpack.c.h.b16 %v2754
    %v2925 = vunpack.c.l.b16 %v2755
    %v2926 = vunpack.c.h.b16 %v2755
    %v2927 = vunpack.c.l.b16 %v2756
    %v2928 = vunpack.c.h.b16 %v2756
    %v2929 = vunpack.c.l.b16 %v2757
    %v2930 = vunpack.c.h.b16 %v2757
    %v2931 = vunpack.c.l.b16 %v2758
    %v2932 = vunpack.c.h.b16 %v2758
    %v2933 = vunpack.c.l.b16 %v2759
    %v2934 = vunpack.c.h.b16 %v2759
    %v2935 = vunpack.c.l.b16 %v2760
    %v2936 = vunpack.c.h.b16 %v2760
    %v2937 = vunpack.c.l.b16 %v2761
    %v2938 = vunpack.c.h.b16 %v2761
    %v2939 = vunpack.c.l.b16 %v2762
    %v2940 = vunpack.c.h.b16 %v2762
    %v2941 = vunpack.c.l.b16 %v2763
    %v2942 = vunpack.c.h.b16 %v2763
    %v2943 = vunpack.c.l.b16 %v2764
    %v2944 = vunpack.c.h.b16 %v2764
    %v2945 = vunpack.c.l.b16 %v2765
    %v2946 = vunpack.c.h.b16 %v2765
    %v2947 = vunpack.c.l.b16 %v2766
    %v2948 = vunpack.c.h.b16 %v2766
    %v2949 = vunpack.c.l.b16 %v2767
    %v2950 = vunpack.c.h.b16 %v2767
    %v2951 = vunpack.c.l.b16 %v2768
    %v2952 = vunpack.c.h.b16 %v2768
    %v2953 = vunpack.c.l.b16 %v2769
    %v2954 = vunpack.c.h.b16 %v2769
    %v2955 = vunpack.c.l.b16 %v2770
    %v2956 = vunpack.c.h.b16 %v2770
    %v2957 = vunpack.c.l.b16 %v2771
    %v2958 = vunpack.c.h.b16 %v2771
    %v2959 = vunpack.c.l.b16 %v2772
    %v2960 = vunpack.c.h.b16 %v2772
    %v2961 = vunpack.c.l.b16 %v2773
    %v2962 = vunpack.c.h.b16 %v2773
    %v2963 = vunpack.c.l.b16 %v2774
    %v2964 = vunpack.c.h.b16 %v2774
    %v2965 = vunpack.c.l.b16 %v2775
    %v2966 = vunpack.c.h.b16 %v2775
    %v2967 = vunpack.c.l.b16 %v2776
    %v2968 = vunpack.c.h.b16 %v2776
    %v2969 = vpack.c.b16 %v2845, %v2841
    %v2970 = vpack.c.b16 %v2846, %v2842
    %v2971 = vpack.c.b16 %v2847, %v2843
    %v2972 = vpack.c.b16 %v2848, %v2844
    %v2973 = vpack.c.b16 %v2853, %v2849
    %v2974 = vpack.c.b16 %v2854, %v2850
    %v2975 = vpack.c.b16 %v2855, %v2851
    %v2976 = vpack.c.b16 %v2856, %v2852
    %v2977 = vpack.c.b16 %v2861, %v2857
    %v2978 = vpack.c.b16 %v2862, %v2858
    %v2979 = vpack.c.b16 %v2863, %v2859
    %v2980 = vpack.c.b16 %v2864, %v2860
    %v2981 = vpack.c.b16 %v2869, %v2865
    %v2982 = vpack.c.b16 %v2870, %v2866
    %v2983 = vpack.c.b16 %v2871, %v2867
    %v2984 = vpack.c.b16 %v2872, %v2868
    %v2985 = vpack.c.b16 %v2877, %v2873
    %v2986 = vpack.c.b16 %v2878, %v2874
    %v2987 = vpack.c.b16 %v2879, %v2875
    %v2988 = vpack.c.b16 %v2880, %v2876
    %v2989 = vpack.c.b16 %v2885, %v2881
    %v2990 = vpack.c.b16 %v2886, %v2882
    %v2991 = vpack.c.b16 %v2887, %v2883
    %v2992 = vpack.c.b16 %v2888, %v2884
    %v2993 = vpack.c.b16 %v2893, %v2889
    %v2994 = vpack.c.b16 %v2894, %v2890
    %v2995 = vpack.c.b16 %v2895, %v2891
    %v2996 = vpack.c.b16 %v2896, %v2892
    %v2997 = vpack.c.b16 %v2901, %v2897
    %v2998 = vpack.c.b16 %v2902, %v2898
    %v2999 = vpack.c.b16 %v2903, %v2899
    %v3000 = vpack.c.b16 %v2904, %v2900
    %v3001 = vpack.c.b16 %v2909, %v2905
    %v3002 = vpack.c.b16 %v2910, %v2906
    %v3003 = vpack.c.b16 %v2911, %v2907
    %v3004 = vpack.c.b16 %v2912, %v2908
    %v3005 = vpack.c.b16 %v2917, %v2913
    %v3006 = vpack.c.b16 %v2918, %v2914
    %v3007 = vpack.c.b16 %v2919, %v2915
    %v3008 = vpack.c.b16 %v2920, %v2916
    %v3009 = vpack.c.b16 %v2925, %v2921
    %v3010 = vpack.c.b16 %v2926, %v2922
    %v3011 = vpack.c.b16 %v2927, %v2923
    %v3012 = vpack.c.b16 %v2928, %v2924
    %v3013 = vpack.c.b16 %v2933, %v2929
    %v3014 = vpack.c.b16 %v2934, %v2930
    %v3015 = vpack.c.b16 %v2935, %v2931
    %v3016 = vpack.c.b16 %v2936, %v2932
    %v3017 = vpack.c.b16 %v2941, %v2937
    %v3018 = vpack.c.b16 %v2942, %v2938
    %v3019 = vpack.c.b16 %v2943, %v2939
    %v3020 = vpack.c.b16 %v2944, %v2940
    %v3021 = vpack.c.b16 %v2949, %v2945
    %v3022 = vpack.c.b16 %v2950, %v2946
    %v3023 = vpack.c.b16 %v2951, %v2947
    %v3024 = vpack.c.b16 %v2952, %v2948
    %v3025 = vpack.c.b16 %v2957, %v2953
    %v3026 = vpack.c.b16 %v2958, %v2954
    %v3027 = vpack.c.b16 %v2959, %v2955
    %v3028 = vpack.c.b16 %v2960, %v2956
    %v3029 = vpack.c.b16 %v2965, %v2961
    %v3030 = vpack.c.b16 %v2966, %v2962
    %v3031 = vpack.c.b16 %v2967, %v2963
    %v3032 = vpack.c.b16 %v2968, %v2964
    %3097 = vmatprep.subr.bf16.mxu0 %v2970
    %3098 = vmatpush1.bf16.msra.mxu0 %v2969
    %3099 = vmatprep.subr.bf16.mxu0 %v2974
    %3100 = vmatpush1.bf16.msra.mxu0 %v2973
    %3101 = vmatprep.subr.bf16.mxu0 %v2978
    %3102 = vmatpush1.bf16.msra.mxu0 %v2977
    %3103 = vmatprep.subr.bf16.mxu0 %v2982
    %3104 = vmatpush1.bf16.msra.mxu0 %v2981
    %3105 = vmatprep.subr.bf16.mxu0 %v2986
    %3106 = vmatpush1.bf16.msra.mxu0 %v2985
    %3107 = vmatprep.subr.bf16.mxu0 %v2990
    %3108 = vmatpush1.bf16.msra.mxu0 %v2989
    %3109 = vmatprep.subr.bf16.mxu0 %v2994
    %3110 = vmatpush1.bf16.msra.mxu0 %v2993
    %3111 = vmatprep.subr.bf16.mxu0 %v2998
    %3112 = vmatpush1.bf16.msra.mxu0 %v2997
    %3113 = vmatprep.subr.bf16.mxu0 %v3002
    %3114 = vmatpush1.bf16.msra.mxu0 %v3001
    %3115 = vmatprep.subr.bf16.mxu0 %v3006
    %3116 = vmatpush1.bf16.msra.mxu0 %v3005
    %3117 = vmatprep.subr.bf16.mxu0 %v3010
    %3118 = vmatpush1.bf16.msra.mxu0 %v3009
    %3119 = vmatprep.subr.bf16.mxu0 %v3014
    %3120 = vmatpush1.bf16.msra.mxu0 %v3013
    %3121 = vmatprep.subr.bf16.mxu0 %v3018
    %3122 = vmatpush1.bf16.msra.mxu0 %v3017
    %3123 = vmatprep.subr.bf16.mxu0 %v3022
    %3124 = vmatpush1.bf16.msra.mxu0 %v3021
    %3125 = vmatprep.subr.bf16.mxu0 %v3026
    %3126 = vmatpush1.bf16.msra.mxu0 %v3025
    %3127 = vmatprep.subr.bf16.mxu0 %v3030
    %3128 = vmatpush1.bf16.msra.mxu0 %v3029
    %3129 = vmatprep.mubr.bf16.mxu0 %v832
    %3130 = vmatmul.mubr.bf16.gmra.mrb[0].mxu0 %v831
    %v3131 = vpop.f32.mrb[0].mxu0
    %v3132 = vadd.f32 0.0, %v3131
    %v3133 = vpop.f32.mrb[0].mxu0
    %v3134 = vadd.f32 0.0, %v3133
    %v3135 = vpop.f32.mrb[0].mxu0
    %v3136 = vpop.f32.mrb[0].mxu0
    %3137 = vdwg.mxu0
    %3138 = vmatprep.subr.bf16.mxu0 %v2972
    %3139 = vmatpush1.bf16.msra.mxu0 %v2971
    %3140 = vmatprep.subr.bf16.mxu0 %v2976
    %3141 = vmatpush1.bf16.msra.mxu0 %v2975
    %3142 = vmatprep.subr.bf16.mxu0 %v2980
    %3143 = vmatpush1.bf16.msra.mxu0 %v2979
    %3144 = vmatprep.subr.bf16.mxu0 %v2984
    %3145 = vmatpush1.bf16.msra.mxu0 %v2983
    %3146 = vmatprep.subr.bf16.mxu0 %v2988
    %3147 = vmatpush1.bf16.msra.mxu0 %v2987
    %3148 = vmatprep.subr.bf16.mxu0 %v2992
    %3149 = vmatpush1.bf16.msra.mxu0 %v2991
    %3150 = vmatprep.subr.bf16.mxu0 %v2996
    %3151 = vmatpush1.bf16.msra.mxu0 %v2995
    %3152 = vmatprep.subr.bf16.mxu0 %v3000
    %3153 = vmatpush1.bf16.msra.mxu0 %v2999
    %3154 = vmatprep.subr.bf16.mxu0 %v3004
    %3155 = vmatpush1.bf16.msra.mxu0 %v3003
    %3156 = vmatprep.subr.bf16.mxu0 %v3008
    %3157 = vmatpush1.bf16.msra.mxu0 %v3007
    %3158 = vmatprep.subr.bf16.mxu0 %v3012
    %3159 = vmatpush1.bf16.msra.mxu0 %v3011
    %3160 = vmatprep.subr.bf16.mxu0 %v3016
    %3161 = vmatpush1.bf16.msra.mxu0 %v3015
    %3162 = vmatprep.subr.bf16.mxu0 %v3020
    %3163 = vmatpush1.bf16.msra.mxu0 %v3019
    %3164 = vmatprep.subr.bf16.mxu0 %v3024
    %3165 = vmatpush1.bf16.msra.mxu0 %v3023
    %3166 = vmatprep.subr.bf16.mxu0 %v3028
    %3167 = vmatpush1.bf16.msra.mxu0 %v3027
    %3168 = vmatprep.subr.bf16.mxu0 %v3032
    %3169 = vmatpush1.bf16.msra.mxu0 %v3031
    %3170 = vmatprep.mubr.bf16.mxu0 %v832
    %3171 = vmatmul.mubr.bf16.gmra.mrb[0].mxu0 %v831
    %v3172 = vpop.f32.mrb[0].mxu0
    %v3173 = vadd.f32 0.0, %v3172
    %v3174 = vpop.f32.mrb[0].mxu0
    %v3175 = vadd.f32 0.0, %v3174
    %v3176 = vpop.f32.mrb[0].mxu0
    %v3177 = vpop.f32.mrb[0].mxu0
    %3178 = vdwg.mxu0
    %v3179 = vadd.f32 %v2708, %v3132
    %v3180 = vadd.f32 %v2709, %v3134
    %v3181 = vadd.f32 %v2710, %v3173
    %v3182 = vadd.f32 %v2711, %v3175
    %s3183 = scalar_lea.vmem [#allocation13], 2560
    %v3184 = vld [vmem:[%s3183] sm:$0xff]
    %v3185 = vld [vmem:[%s3183 + $0x8] sm:$0xff]
    %v3186 = vld [vmem:[%s3183 + $0x10] sm:$0xff]
    %v3187 = vld [vmem:[%s3183 + $0x18] sm:$0xff]
    %v3188 = vld [vmem:[%s3183 + $0x20] sm:$0xff]
    %v3189 = vld [vmem:[%s3183 + $0x28] sm:$0xff]
    %v3190 = vld [vmem:[%s3183 + $0x30] sm:$0xff]
    %v3191 = vld [vmem:[%s3183 + $0x38] sm:$0xff]
    %v3192 = vld [vmem:[%s3183 + $0x40] sm:$0xff]
    %v3193 = vld [vmem:[%s3183 + $0x48] sm:$0xff]
    %v3194 = vld [vmem:[%s3183 + $0x50] sm:$0xff]
    %v3195 = vld [vmem:[%s3183 + $0x58] sm:$0xff]
    %v3196 = vld [vmem:[%s3183 + $0x60] sm:$0xff]
    %v3197 = vld [vmem:[%s3183 + $0x68] sm:$0xff]
    %v3198 = vld [vmem:[%s3183 + $0x70] sm:$0xff]
    %v3199 = vld [vmem:[%s3183 + $0x78] sm:$0xff]
    %v3200 = vld [vmem:[%s3183 + $0x80] sm:$0xff]
    %v3201 = vld [vmem:[%s3183 + $0x88] sm:$0xff]
    %v3202 = vld [vmem:[%s3183 + $0x90] sm:$0xff]
    %v3203 = vld [vmem:[%s3183 + $0x98] sm:$0xff]
    %v3204 = vld [vmem:[%s3183 + $0xa0] sm:$0xff]
    %v3205 = vld [vmem:[%s3183 + $0xa8] sm:$0xff]
    %v3206 = vld [vmem:[%s3183 + $0xb0] sm:$0xff]
    %v3207 = vld [vmem:[%s3183 + $0xb8] sm:$0xff]
    %v3208 = vld [vmem:[%s3183 + $0xc0] sm:$0xff]
    %v3209 = vld [vmem:[%s3183 + $0xc8] sm:$0xff]
    %v3210 = vld [vmem:[%s3183 + $0xd0] sm:$0xff]
    %v3211 = vld [vmem:[%s3183 + $0xd8] sm:$0xff]
    %v3212 = vld [vmem:[%s3183 + $0xe0] sm:$0xff]
    %v3213 = vld [vmem:[%s3183 + $0xe8] sm:$0xff]
    %v3214 = vld [vmem:[%s3183 + $0xf0] sm:$0xff]
    %v3215 = vld [vmem:[%s3183 + $0xf8] sm:$0xff]
    %v3216 = vld [vmem:[%s3183 + $0x100] sm:$0xff]
    %v3217 = vld [vmem:[%s3183 + $0x108] sm:$0xff]
    %v3218 = vld [vmem:[%s3183 + $0x110] sm:$0xff]
    %v3219 = vld [vmem:[%s3183 + $0x118] sm:$0xff]
    %v3220 = vld [vmem:[%s3183 + $0x120] sm:$0xff]
    %v3221 = vld [vmem:[%s3183 + $0x128] sm:$0xff]
    %v3222 = vld [vmem:[%s3183 + $0x130] sm:$0xff]
    %v3223 = vld [vmem:[%s3183 + $0x138] sm:$0xff]
    %v3224 = vld [vmem:[%s3183 + $0x140] sm:$0xff]
    %v3225 = vld [vmem:[%s3183 + $0x148] sm:$0xff]
    %v3226 = vld [vmem:[%s3183 + $0x150] sm:$0xff]
    %v3227 = vld [vmem:[%s3183 + $0x158] sm:$0xff]
    %v3228 = vld [vmem:[%s3183 + $0x160] sm:$0xff]
    %v3229 = vld [vmem:[%s3183 + $0x168] sm:$0xff]
    %v3230 = vld [vmem:[%s3183 + $0x170] sm:$0xff]
    %v3231 = vld [vmem:[%s3183 + $0x178] sm:$0xff]
    %v3232 = vld [vmem:[%s3183 + $0x180] sm:$0xff]
    %v3233 = vld [vmem:[%s3183 + $0x188] sm:$0xff]
    %v3234 = vld [vmem:[%s3183 + $0x190] sm:$0xff]
    %v3235 = vld [vmem:[%s3183 + $0x198] sm:$0xff]
    %v3236 = vld [vmem:[%s3183 + $0x1a0] sm:$0xff]
    %v3237 = vld [vmem:[%s3183 + $0x1a8] sm:$0xff]
    %v3238 = vld [vmem:[%s3183 + $0x1b0] sm:$0xff]
    %v3239 = vld [vmem:[%s3183 + $0x1b8] sm:$0xff]
    %v3240 = vld [vmem:[%s3183 + $0x1c0] sm:$0xff]
    %v3241 = vld [vmem:[%s3183 + $0x1c8] sm:$0xff]
    %v3242 = vld [vmem:[%s3183 + $0x1d0] sm:$0xff]
    %v3243 = vld [vmem:[%s3183 + $0x1d8] sm:$0xff]
    %v3244 = vld [vmem:[%s3183 + $0x1e0] sm:$0xff]
    %v3245 = vld [vmem:[%s3183 + $0x1e8] sm:$0xff]
    %v3246 = vld [vmem:[%s3183 + $0x1f0] sm:$0xff]
    %v3247 = vld [vmem:[%s3183 + $0x1f8] sm:$0xff]
    %v3312 = vunpack.c.l.b16 %v3184
    %v3313 = vunpack.c.h.b16 %v3184
    %v3314 = vunpack.c.l.b16 %v3185
    %v3315 = vunpack.c.h.b16 %v3185
    %v3316 = vunpack.c.l.b16 %v3186
    %v3317 = vunpack.c.h.b16 %v3186
    %v3318 = vunpack.c.l.b16 %v3187
    %v3319 = vunpack.c.h.b16 %v3187
    %v3320 = vunpack.c.l.b16 %v3188
    %v3321 = vunpack.c.h.b16 %v3188
    %v3322 = vunpack.c.l.b16 %v3189
    %v3323 = vunpack.c.h.b16 %v3189
    %v3324 = vunpack.c.l.b16 %v3190
    %v3325 = vunpack.c.h.b16 %v3190
    %v3326 = vunpack.c.l.b16 %v3191
    %v3327 = vunpack.c.h.b16 %v3191
    %v3328 = vunpack.c.l.b16 %v3192
    %v3329 = vunpack.c.h.b16 %v3192
    %v3330 = vunpack.c.l.b16 %v3193
    %v3331 = vunpack.c.h.b16 %v3193
    %v3332 = vunpack.c.l.b16 %v3194
    %v3333 = vunpack.c.h.b16 %v3194
    %v3334 = vunpack.c.l.b16 %v3195
    %v3335 = vunpack.c.h.b16 %v3195
    %v3336 = vunpack.c.l.b16 %v3196
    %v3337 = vunpack.c.h.b16 %v3196
    %v3338 = vunpack.c.l.b16 %v3197
    %v3339 = vunpack.c.h.b16 %v3197
    %v3340 = vunpack.c.l.b16 %v3198
    %v3341 = vunpack.c.h.b16 %v3198
    %v3342 = vunpack.c.l.b16 %v3199
    %v3343 = vunpack.c.h.b16 %v3199
    %v3344 = vunpack.c.l.b16 %v3200
    %v3345 = vunpack.c.h.b16 %v3200
    %v3346 = vunpack.c.l.b16 %v3201
    %v3347 = vunpack.c.h.b16 %v3201
    %v3348 = vunpack.c.l.b16 %v3202
    %v3349 = vunpack.c.h.b16 %v3202
    %v3350 = vunpack.c.l.b16 %v3203
    %v3351 = vunpack.c.h.b16 %v3203
    %v3352 = vunpack.c.l.b16 %v3204
    %v3353 = vunpack.c.h.b16 %v3204
    %v3354 = vunpack.c.l.b16 %v3205
    %v3355 = vunpack.c.h.b16 %v3205
    %v3356 = vunpack.c.l.b16 %v3206
    %v3357 = vunpack.c.h.b16 %v3206
    %v3358 = vunpack.c.l.b16 %v3207
    %v3359 = vunpack.c.h.b16 %v3207
    %v3360 = vunpack.c.l.b16 %v3208
    %v3361 = vunpack.c.h.b16 %v3208
    %v3362 = vunpack.c.l.b16 %v3209
    %v3363 = vunpack.c.h.b16 %v3209
    %v3364 = vunpack.c.l.b16 %v3210
    %v3365 = vunpack.c.h.b16 %v3210
    %v3366 = vunpack.c.l.b16 %v3211
    %v3367 = vunpack.c.h.b16 %v3211
    %v3368 = vunpack.c.l.b16 %v3212
    %v3369 = vunpack.c.h.b16 %v3212
    %v3370 = vunpack.c.l.b16 %v3213
    %v3371 = vunpack.c.h.b16 %v3213
    %v3372 = vunpack.c.l.b16 %v3214
    %v3373 = vunpack.c.h.b16 %v3214
    %v3374 = vunpack.c.l.b16 %v3215
    %v3375 = vunpack.c.h.b16 %v3215
    %v3376 = vunpack.c.l.b16 %v3216
    %v3377 = vunpack.c.h.b16 %v3216
    %v3378 = vunpack.c.l.b16 %v3217
    %v3379 = vunpack.c.h.b16 %v3217
    %v3380 = vunpack.c.l.b16 %v3218
    %v3381 = vunpack.c.h.b16 %v3218
    %v3382 = vunpack.c.l.b16 %v3219
    %v3383 = vunpack.c.h.b16 %v3219
    %v3384 = vunpack.c.l.b16 %v3220
    %v3385 = vunpack.c.h.b16 %v3220
    %v3386 = vunpack.c.l.b16 %v3221
    %v3387 = vunpack.c.h.b16 %v3221
    %v3388 = vunpack.c.l.b16 %v3222
    %v3389 = vunpack.c.h.b16 %v3222
    %v3390 = vunpack.c.l.b16 %v3223
    %v3391 = vunpack.c.h.b16 %v3223
    %v3392 = vunpack.c.l.b16 %v3224
    %v3393 = vunpack.c.h.b16 %v3224
    %v3394 = vunpack.c.l.b16 %v3225
    %v3395 = vunpack.c.h.b16 %v3225
    %v3396 = vunpack.c.l.b16 %v3226
    %v3397 = vunpack.c.h.b16 %v3226
    %v3398 = vunpack.c.l.b16 %v3227
    %v3399 = vunpack.c.h.b16 %v3227
    %v3400 = vunpack.c.l.b16 %v3228
    %v3401 = vunpack.c.h.b16 %v3228
    %v3402 = vunpack.c.l.b16 %v3229
    %v3403 = vunpack.c.h.b16 %v3229
    %v3404 = vunpack.c.l.b16 %v3230
    %v3405 = vunpack.c.h.b16 %v3230
    %v3406 = vunpack.c.l.b16 %v3231
    %v3407 = vunpack.c.h.b16 %v3231
    %v3408 = vunpack.c.l.b16 %v3232
    %v3409 = vunpack.c.h.b16 %v3232
    %v3410 = vunpack.c.l.b16 %v3233
    %v3411 = vunpack.c.h.b16 %v3233
    %v3412 = vunpack.c.l.b16 %v3234
    %v3413 = vunpack.c.h.b16 %v3234
    %v3414 = vunpack.c.l.b16 %v3235
    %v3415 = vunpack.c.h.b16 %v3235
    %v3416 = vunpack.c.l.b16 %v3236
    %v3417 = vunpack.c.h.b16 %v3236
    %v3418 = vunpack.c.l.b16 %v3237
    %v3419 = vunpack.c.h.b16 %v3237
    %v3420 = vunpack.c.l.b16 %v3238
    %v3421 = vunpack.c.h.b16 %v3238
    %v3422 = vunpack.c.l.b16 %v3239
    %v3423 = vunpack.c.h.b16 %v3239
    %v3424 = vunpack.c.l.b16 %v3240
    %v3425 = vunpack.c.h.b16 %v3240
    %v3426 = vunpack.c.l.b16 %v3241
    %v3427 = vunpack.c.h.b16 %v3241
    %v3428 = vunpack.c.l.b16 %v3242
    %v3429 = vunpack.c.h.b16 %v3242
    %v3430 = vunpack.c.l.b16 %v3243
    %v3431 = vunpack.c.h.b16 %v3243
    %v3432 = vunpack.c.l.b16 %v3244
    %v3433 = vunpack.c.h.b16 %v3244
    %v3434 = vunpack.c.l.b16 %v3245
    %v3435 = vunpack.c.h.b16 %v3245
    %v3436 = vunpack.c.l.b16 %v3246
    %v3437 = vunpack.c.h.b16 %v3246
    %v3438 = vunpack.c.l.b16 %v3247
    %v3439 = vunpack.c.h.b16 %v3247
    %v3440 = vpack.c.b16 %v3316, %v3312
    %v3441 = vpack.c.b16 %v3317, %v3313
    %v3442 = vpack.c.b16 %v3318, %v3314
    %v3443 = vpack.c.b16 %v3319, %v3315
    %v3444 = vpack.c.b16 %v3324, %v3320
    %v3445 = vpack.c.b16 %v3325, %v3321
    %v3446 = vpack.c.b16 %v3326, %v3322
    %v3447 = vpack.c.b16 %v3327, %v3323
    %v3448 = vpack.c.b16 %v3332, %v3328
    %v3449 = vpack.c.b16 %v3333, %v3329
    %v3450 = vpack.c.b16 %v3334, %v3330
    %v3451 = vpack.c.b16 %v3335, %v3331
    %v3452 = vpack.c.b16 %v3340, %v3336
    %v3453 = vpack.c.b16 %v3341, %v3337
    %v3454 = vpack.c.b16 %v3342, %v3338
    %v3455 = vpack.c.b16 %v3343, %v3339
    %v3456 = vpack.c.b16 %v3348, %v3344
    %v3457 = vpack.c.b16 %v3349, %v3345
    %v3458 = vpack.c.b16 %v3350, %v3346
    %v3459 = vpack.c.b16 %v3351, %v3347
    %v3460 = vpack.c.b16 %v3356, %v3352
    %v3461 = vpack.c.b16 %v3357, %v3353
    %v3462 = vpack.c.b16 %v3358, %v3354
    %v3463 = vpack.c.b16 %v3359, %v3355
    %v3464 = vpack.c.b16 %v3364, %v3360
    %v3465 = vpack.c.b16 %v3365, %v3361
    %v3466 = vpack.c.b16 %v3366, %v3362
    %v3467 = vpack.c.b16 %v3367, %v3363
    %v3468 = vpack.c.b16 %v3372, %v3368
    %v3469 = vpack.c.b16 %v3373, %v3369
    %v3470 = vpack.c.b16 %v3374, %v3370
    %v3471 = vpack.c.b16 %v3375, %v3371
    %v3472 = vpack.c.b16 %v3380, %v3376
    %v3473 = vpack.c.b16 %v3381, %v3377
    %v3474 = vpack.c.b16 %v3382, %v3378
    %v3475 = vpack.c.b16 %v3383, %v3379
    %v3476 = vpack.c.b16 %v3388, %v3384
    %v3477 = vpack.c.b16 %v3389, %v3385
    %v3478 = vpack.c.b16 %v3390, %v3386
    %v3479 = vpack.c.b16 %v3391, %v3387
    %v3480 = vpack.c.b16 %v3396, %v3392
    %v3481 = vpack.c.b16 %v3397, %v3393
    %v3482 = vpack.c.b16 %v3398, %v3394
    %v3483 = vpack.c.b16 %v3399, %v3395
    %v3484 = vpack.c.b16 %v3404, %v3400
    %v3485 = vpack.c.b16 %v3405, %v3401
    %v3486 = vpack.c.b16 %v3406, %v3402
    %v3487 = vpack.c.b16 %v3407, %v3403
    %v3488 = vpack.c.b16 %v3412, %v3408
    %v3489 = vpack.c.b16 %v3413, %v3409
    %v3490 = vpack.c.b16 %v3414, %v3410
    %v3491 = vpack.c.b16 %v3415, %v3411
    %v3492 = vpack.c.b16 %v3420, %v3416
    %v3493 = vpack.c.b16 %v3421, %v3417
    %v3494 = vpack.c.b16 %v3422, %v3418
    %v3495 = vpack.c.b16 %v3423, %v3419
    %v3496 = vpack.c.b16 %v3428, %v3424
    %v3497 = vpack.c.b16 %v3429, %v3425
    %v3498 = vpack.c.b16 %v3430, %v3426
    %v3499 = vpack.c.b16 %v3431, %v3427
    %v3500 = vpack.c.b16 %v3436, %v3432
    %v3501 = vpack.c.b16 %v3437, %v3433
    %v3502 = vpack.c.b16 %v3438, %v3434
    %v3503 = vpack.c.b16 %v3439, %v3435
    %3568 = vmatprep.subr.bf16.mxu0 %v3441
    %3569 = vmatpush1.bf16.msra.mxu0 %v3440
    %3570 = vmatprep.subr.bf16.mxu0 %v3445
    %3571 = vmatpush1.bf16.msra.mxu0 %v3444
    %3572 = vmatprep.subr.bf16.mxu0 %v3449
    %3573 = vmatpush1.bf16.msra.mxu0 %v3448
    %3574 = vmatprep.subr.bf16.mxu0 %v3453
    %3575 = vmatpush1.bf16.msra.mxu0 %v3452
    %3576 = vmatprep.subr.bf16.mxu0 %v3457
    %3577 = vmatpush1.bf16.msra.mxu0 %v3456
    %3578 = vmatprep.subr.bf16.mxu0 %v3461
    %3579 = vmatpush1.bf16.msra.mxu0 %v3460
    %3580 = vmatprep.subr.bf16.mxu0 %v3465
    %3581 = vmatpush1.bf16.msra.mxu0 %v3464
    %3582 = vmatprep.subr.bf16.mxu0 %v3469
    %3583 = vmatpush1.bf16.msra.mxu0 %v3468
    %3584 = vmatprep.subr.bf16.mxu0 %v3473
    %3585 = vmatpush1.bf16.msra.mxu0 %v3472
    %3586 = vmatprep.subr.bf16.mxu0 %v3477
    %3587 = vmatpush1.bf16.msra.mxu0 %v3476
    %3588 = vmatprep.subr.bf16.mxu0 %v3481
    %3589 = vmatpush1.bf16.msra.mxu0 %v3480
    %3590 = vmatprep.subr.bf16.mxu0 %v3485
    %3591 = vmatpush1.bf16.msra.mxu0 %v3484
    %3592 = vmatprep.subr.bf16.mxu0 %v3489
    %3593 = vmatpush1.bf16.msra.mxu0 %v3488
    %3594 = vmatprep.subr.bf16.mxu0 %v3493
    %3595 = vmatpush1.bf16.msra.mxu0 %v3492
    %3596 = vmatprep.subr.bf16.mxu0 %v3497
    %3597 = vmatpush1.bf16.msra.mxu0 %v3496
    %3598 = vmatprep.subr.bf16.mxu0 %v3501
    %3599 = vmatpush1.bf16.msra.mxu0 %v3500
    %3600 = vmatprep.mubr.bf16.mxu0 %v834
    %3601 = vmatmul.mubr.bf16.gmra.mrb[0].mxu0 %v833
    %v3602 = vpop.f32.mrb[0].mxu0
    %v3603 = vadd.f32 0.0, %v3602
    %v3604 = vpop.f32.mrb[0].mxu0
    %v3605 = vadd.f32 0.0, %v3604
    %v3606 = vpop.f32.mrb[0].mxu0
    %v3607 = vpop.f32.mrb[0].mxu0
    %3608 = vdwg.mxu0
    %3609 = vmatprep.subr.bf16.mxu0 %v3443
    %3610 = vmatpush1.bf16.msra.mxu0 %v3442
    %3611 = vmatprep.subr.bf16.mxu0 %v3447
    %3612 = vmatpush1.bf16.msra.mxu0 %v3446
    %3613 = vmatprep.subr.bf16.mxu0 %v3451
    %3614 = vmatpush1.bf16.msra.mxu0 %v3450
    %3615 = vmatprep.subr.bf16.mxu0 %v3455
    %3616 = vmatpush1.bf16.msra.mxu0 %v3454
    %3617 = vmatprep.subr.bf16.mxu0 %v3459
    %3618 = vmatpush1.bf16.msra.mxu0 %v3458
    %3619 = vmatprep.subr.bf16.mxu0 %v3463
    %3620 = vmatpush1.bf16.msra.mxu0 %v3462
    %3621 = vmatprep.subr.bf16.mxu0 %v3467
    %3622 = vmatpush1.bf16.msra.mxu0 %v3466
    %3623 = vmatprep.subr.bf16.mxu0 %v3471
    %3624 = vmatpush1.bf16.msra.mxu0 %v3470
    %3625 = vmatprep.subr.bf16.mxu0 %v3475
    %3626 = vmatpush1.bf16.msra.mxu0 %v3474
    %3627 = vmatprep.subr.bf16.mxu0 %v3479
    %3628 = vmatpush1.bf16.msra.mxu0 %v3478
    %3629 = vmatprep.subr.bf16.mxu0 %v3483
    %3630 = vmatpush1.bf16.msra.mxu0 %v3482
    %3631 = vmatprep.subr.bf16.mxu0 %v3487
    %3632 = vmatpush1.bf16.msra.mxu0 %v3486
    %3633 = vmatprep.subr.bf16.mxu0 %v3491
    %3634 = vmatpush1.bf16.msra.mxu0 %v3490
    %3635 = vmatprep.subr.bf16.mxu0 %v3495
    %3636 = vmatpush1.bf16.msra.mxu0 %v3494
    %3637 = vmatprep.subr.bf16.mxu0 %v3499
    %3638 = vmatpush1.bf16.msra.mxu0 %v3498
    %3639 = vmatprep.subr.bf16.mxu0 %v3503
    %3640 = vmatpush1.bf16.msra.mxu0 %v3502
    %3641 = vmatprep.mubr.bf16.mxu0 %v834
    %3642 = vmatmul.mubr.bf16.gmra.mrb[0].mxu0 %v833
    %v3643 = vpop.f32.mrb[0].mxu0
    %v3644 = vadd.f32 0.0, %v3643
    %v3645 = vpop.f32.mrb[0].mxu0
    %v3646 = vadd.f32 0.0, %v3645
    %v3647 = vpop.f32.mrb[0].mxu0
    %v3648 = vpop.f32.mrb[0].mxu0
    %3649 = vdwg.mxu0
    %v3650 = vadd.f32 %v3179, %v3603
    %v3651 = vadd.f32 %v3180, %v3605
    %v3652 = vadd.f32 %v3181, %v3644
    %v3653 = vadd.f32 %v3182, %v3646
    %s3654 = scalar_lea.vmem [#allocation13], 3072
    %v3655 = vld [vmem:[%s3654] sm:$0xff]
    %v3656 = vld [vmem:[%s3654 + $0x8] sm:$0xff]
    %v3657 = vld [vmem:[%s3654 + $0x10] sm:$0xff]
    %v3658 = vld [vmem:[%s3654 + $0x18] sm:$0xff]
    %v3659 = vld [vmem:[%s3654 + $0x20] sm:$0xff]
    %v3660 = vld [vmem:[%s3654 + $0x28] sm:$0xff]
    %v3661 = vld [vmem:[%s3654 + $0x30] sm:$0xff]
    %v3662 = vld [vmem:[%s3654 + $0x38] sm:$0xff]
    %v3663 = vld [vmem:[%s3654 + $0x40] sm:$0xff]
    %v3664 = vld [vmem:[%s3654 + $0x48] sm:$0xff]
    %v3665 = vld [vmem:[%s3654 + $0x50] sm:$0xff]
    %v3666 = vld [vmem:[%s3654 + $0x58] sm:$0xff]
    %v3667 = vld [vmem:[%s3654 + $0x60] sm:$0xff]
    %v3668 = vld [vmem:[%s3654 + $0x68] sm:$0xff]
    %v3669 = vld [vmem:[%s3654 + $0x70] sm:$0xff]
    %v3670 = vld [vmem:[%s3654 + $0x78] sm:$0xff]
    %v3671 = vld [vmem:[%s3654 + $0x80] sm:$0xff]
    %v3672 = vld [vmem:[%s3654 + $0x88] sm:$0xff]
    %v3673 = vld [vmem:[%s3654 + $0x90] sm:$0xff]
    %v3674 = vld [vmem:[%s3654 + $0x98] sm:$0xff]
    %v3675 = vld [vmem:[%s3654 + $0xa0] sm:$0xff]
    %v3676 = vld [vmem:[%s3654 + $0xa8] sm:$0xff]
    %v3677 = vld [vmem:[%s3654 + $0xb0] sm:$0xff]
    %v3678 = vld [vmem:[%s3654 + $0xb8] sm:$0xff]
    %v3679 = vld [vmem:[%s3654 + $0xc0] sm:$0xff]
    %v3680 = vld [vmem:[%s3654 + $0xc8] sm:$0xff]
    %v3681 = vld [vmem:[%s3654 + $0xd0] sm:$0xff]
    %v3682 = vld [vmem:[%s3654 + $0xd8] sm:$0xff]
    %v3683 = vld [vmem:[%s3654 + $0xe0] sm:$0xff]
    %v3684 = vld [vmem:[%s3654 + $0xe8] sm:$0xff]
    %v3685 = vld [vmem:[%s3654 + $0xf0] sm:$0xff]
    %v3686 = vld [vmem:[%s3654 + $0xf8] sm:$0xff]
    %v3687 = vld [vmem:[%s3654 + $0x100] sm:$0xff]
    %v3688 = vld [vmem:[%s3654 + $0x108] sm:$0xff]
    %v3689 = vld [vmem:[%s3654 + $0x110] sm:$0xff]
    %v3690 = vld [vmem:[%s3654 + $0x118] sm:$0xff]
    %v3691 = vld [vmem:[%s3654 + $0x120] sm:$0xff]
    %v3692 = vld [vmem:[%s3654 + $0x128] sm:$0xff]
    %v3693 = vld [vmem:[%s3654 + $0x130] sm:$0xff]
    %v3694 = vld [vmem:[%s3654 + $0x138] sm:$0xff]
    %v3695 = vld [vmem:[%s3654 + $0x140] sm:$0xff]
    %v3696 = vld [vmem:[%s3654 + $0x148] sm:$0xff]
    %v3697 = vld [vmem:[%s3654 + $0x150] sm:$0xff]
    %v3698 = vld [vmem:[%s3654 + $0x158] sm:$0xff]
    %v3699 = vld [vmem:[%s3654 + $0x160] sm:$0xff]
    %v3700 = vld [vmem:[%s3654 + $0x168] sm:$0xff]
    %v3701 = vld [vmem:[%s3654 + $0x170] sm:$0xff]
    %v3702 = vld [vmem:[%s3654 + $0x178] sm:$0xff]
    %v3703 = vld [vmem:[%s3654 + $0x180] sm:$0xff]
    %v3704 = vld [vmem:[%s3654 + $0x188] sm:$0xff]
    %v3705 = vld [vmem:[%s3654 + $0x190] sm:$0xff]
    %v3706 = vld [vmem:[%s3654 + $0x198] sm:$0xff]
    %v3707 = vld [vmem:[%s3654 + $0x1a0] sm:$0xff]
    %v3708 = vld [vmem:[%s3654 + $0x1a8] sm:$0xff]
    %v3709 = vld [vmem:[%s3654 + $0x1b0] sm:$0xff]
    %v3710 = vld [vmem:[%s3654 + $0x1b8] sm:$0xff]
    %v3711 = vld [vmem:[%s3654 + $0x1c0] sm:$0xff]
    %v3712 = vld [vmem:[%s3654 + $0x1c8] sm:$0xff]
    %v3713 = vld [vmem:[%s3654 + $0x1d0] sm:$0xff]
    %v3714 = vld [vmem:[%s3654 + $0x1d8] sm:$0xff]
    %v3715 = vld [vmem:[%s3654 + $0x1e0] sm:$0xff]
    %v3716 = vld [vmem:[%s3654 + $0x1e8] sm:$0xff]
    %v3717 = vld [vmem:[%s3654 + $0x1f0] sm:$0xff]
    %v3718 = vld [vmem:[%s3654 + $0x1f8] sm:$0xff]
    %v3783 = vunpack.c.l.b16 %v3655
    %v3784 = vunpack.c.h.b16 %v3655
    %v3785 = vunpack.c.l.b16 %v3656
    %v3786 = vunpack.c.h.b16 %v3656
    %v3787 = vunpack.c.l.b16 %v3657
    %v3788 = vunpack.c.h.b16 %v3657
    %v3789 = vunpack.c.l.b16 %v3658
    %v3790 = vunpack.c.h.b16 %v3658
    %v3791 = vunpack.c.l.b16 %v3659
    %v3792 = vunpack.c.h.b16 %v3659
    %v3793 = vunpack.c.l.b16 %v3660
    %v3794 = vunpack.c.h.b16 %v3660
    %v3795 = vunpack.c.l.b16 %v3661
    %v3796 = vunpack.c.h.b16 %v3661
    %v3797 = vunpack.c.l.b16 %v3662
    %v3798 = vunpack.c.h.b16 %v3662
    %v3799 = vunpack.c.l.b16 %v3663
    %v3800 = vunpack.c.h.b16 %v3663
    %v3801 = vunpack.c.l.b16 %v3664
    %v3802 = vunpack.c.h.b16 %v3664
    %v3803 = vunpack.c.l.b16 %v3665
    %v3804 = vunpack.c.h.b16 %v3665
    %v3805 = vunpack.c.l.b16 %v3666
    %v3806 = vunpack.c.h.b16 %v3666
    %v3807 = vunpack.c.l.b16 %v3667
    %v3808 = vunpack.c.h.b16 %v3667
    %v3809 = vunpack.c.l.b16 %v3668
    %v3810 = vunpack.c.h.b16 %v3668
    %v3811 = vunpack.c.l.b16 %v3669
    %v3812 = vunpack.c.h.b16 %v3669
    %v3813 = vunpack.c.l.b16 %v3670
    %v3814 = vunpack.c.h.b16 %v3670
    %v3815 = vunpack.c.l.b16 %v3671
    %v3816 = vunpack.c.h.b16 %v3671
    %v3817 = vunpack.c.l.b16 %v3672
    %v3818 = vunpack.c.h.b16 %v3672
    %v3819 = vunpack.c.l.b16 %v3673
    %v3820 = vunpack.c.h.b16 %v3673
    %v3821 = vunpack.c.l.b16 %v3674
    %v3822 = vunpack.c.h.b16 %v3674
    %v3823 = vunpack.c.l.b16 %v3675
    %v3824 = vunpack.c.h.b16 %v3675
    %v3825 = vunpack.c.l.b16 %v3676
    %v3826 = vunpack.c.h.b16 %v3676
    %v3827 = vunpack.c.l.b16 %v3677
    %v3828 = vunpack.c.h.b16 %v3677
    %v3829 = vunpack.c.l.b16 %v3678
    %v3830 = vunpack.c.h.b16 %v3678
    %v3831 = vunpack.c.l.b16 %v3679
    %v3832 = vunpack.c.h.b16 %v3679
    %v3833 = vunpack.c.l.b16 %v3680
    %v3834 = vunpack.c.h.b16 %v3680
    %v3835 = vunpack.c.l.b16 %v3681
    %v3836 = vunpack.c.h.b16 %v3681
    %v3837 = vunpack.c.l.b16 %v3682
    %v3838 = vunpack.c.h.b16 %v3682
    %v3839 = vunpack.c.l.b16 %v3683
    %v3840 = vunpack.c.h.b16 %v3683
    %v3841 = vunpack.c.l.b16 %v3684
    %v3842 = vunpack.c.h.b16 %v3684
    %v3843 = vunpack.c.l.b16 %v3685
    %v3844 = vunpack.c.h.b16 %v3685
    %v3845 = vunpack.c.l.b16 %v3686
    %v3846 = vunpack.c.h.b16 %v3686
    %v3847 = vunpack.c.l.b16 %v3687
    %v3848 = vunpack.c.h.b16 %v3687
    %v3849 = vunpack.c.l.b16 %v3688
    %v3850 = vunpack.c.h.b16 %v3688
    %v3851 = vunpack.c.l.b16 %v3689
    %v3852 = vunpack.c.h.b16 %v3689
    %v3853 = vunpack.c.l.b16 %v3690
    %v3854 = vunpack.c.h.b16 %v3690
    %v3855 = vunpack.c.l.b16 %v3691
    %v3856 = vunpack.c.h.b16 %v3691
    %v3857 = vunpack.c.l.b16 %v3692
    %v3858 = vunpack.c.h.b16 %v3692
    %v3859 = vunpack.c.l.b16 %v3693
    %v3860 = vunpack.c.h.b16 %v3693
    %v3861 = vunpack.c.l.b16 %v3694
    %v3862 = vunpack.c.h.b16 %v3694
    %v3863 = vunpack.c.l.b16 %v3695
    %v3864 = vunpack.c.h.b16 %v3695
    %v3865 = vunpack.c.l.b16 %v3696
    %v3866 = vunpack.c.h.b16 %v3696
    %v3867 = vunpack.c.l.b16 %v3697
    %v3868 = vunpack.c.h.b16 %v3697
    %v3869 = vunpack.c.l.b16 %v3698
    %v3870 = vunpack.c.h.b16 %v3698
    %v3871 = vunpack.c.l.b16 %v3699
    %v3872 = vunpack.c.h.b16 %v3699
    %v3873 = vunpack.c.l.b16 %v3700
    %v3874 = vunpack.c.h.b16 %v3700
    %v3875 = vunpack.c.l.b16 %v3701
    %v3876 = vunpack.c.h.b16 %v3701
    %v3877 = vunpack.c.l.b16 %v3702
    %v3878 = vunpack.c.h.b16 %v3702
    %v3879 = vunpack.c.l.b16 %v3703
    %v3880 = vunpack.c.h.b16 %v3703
    %v3881 = vunpack.c.l.b16 %v3704
    %v3882 = vunpack.c.h.b16 %v3704
    %v3883 = vunpack.c.l.b16 %v3705
    %v3884 = vunpack.c.h.b16 %v3705
    %v3885 = vunpack.c.l.b16 %v3706
    %v3886 = vunpack.c.h.b16 %v3706
    %v3887 = vunpack.c.l.b16 %v3707
    %v3888 = vunpack.c.h.b16 %v3707
    %v3889 = vunpack.c.l.b16 %v3708
    %v3890 = vunpack.c.h.b16 %v3708
    %v3891 = vunpack.c.l.b16 %v3709
    %v3892 = vunpack.c.h.b16 %v3709
    %v3893 = vunpack.c.l.b16 %v3710
    %v3894 = vunpack.c.h.b16 %v3710
    %v3895 = vunpack.c.l.b16 %v3711
    %v3896 = vunpack.c.h.b16 %v3711
    %v3897 = vunpack.c.l.b16 %v3712
    %v3898 = vunpack.c.h.b16 %v3712
    %v3899 = vunpack.c.l.b16 %v3713
    %v3900 = vunpack.c.h.b16 %v3713
    %v3901 = vunpack.c.l.b16 %v3714
    %v3902 = vunpack.c.h.b16 %v3714
    %v3903 = vunpack.c.l.b16 %v3715
    %v3904 = vunpack.c.h.b16 %v3715
    %v3905 = vunpack.c.l.b16 %v3716
    %v3906 = vunpack.c.h.b16 %v3716
    %v3907 = vunpack.c.l.b16 %v3717
    %v3908 = vunpack.c.h.b16 %v3717
    %v3909 = vunpack.c.l.b16 %v3718
    %v3910 = vunpack.c.h.b16 %v3718
    %v3911 = vpack.c.b16 %v3787, %v3783
    %v3912 = vpack.c.b16 %v3788, %v3784
    %v3913 = vpack.c.b16 %v3789, %v3785
    %v3914 = vpack.c.b16 %v3790, %v3786
    %v3915 = vpack.c.b16 %v3795, %v3791
    %v3916 = vpack.c.b16 %v3796, %v3792
    %v3917 = vpack.c.b16 %v3797, %v3793
    %v3918 = vpack.c.b16 %v3798, %v3794
    %v3919 = vpack.c.b16 %v3803, %v3799
    %v3920 = vpack.c.b16 %v3804, %v3800
    %v3921 = vpack.c.b16 %v3805, %v3801
    %v3922 = vpack.c.b16 %v3806, %v3802
    %v3923 = vpack.c.b16 %v3811, %v3807
    %v3924 = vpack.c.b16 %v3812, %v3808
    %v3925 = vpack.c.b16 %v3813, %v3809
    %v3926 = vpack.c.b16 %v3814, %v3810
    %v3927 = vpack.c.b16 %v3819, %v3815
    %v3928 = vpack.c.b16 %v3820, %v3816
    %v3929 = vpack.c.b16 %v3821, %v3817
    %v3930 = vpack.c.b16 %v3822, %v3818
    %v3931 = vpack.c.b16 %v3827, %v3823
    %v3932 = vpack.c.b16 %v3828, %v3824
    %v3933 = vpack.c.b16 %v3829, %v3825
    %v3934 = vpack.c.b16 %v3830, %v3826
    %v3935 = vpack.c.b16 %v3835, %v3831
    %v3936 = vpack.c.b16 %v3836, %v3832
    %v3937 = vpack.c.b16 %v3837, %v3833
    %v3938 = vpack.c.b16 %v3838, %v3834
    %v3939 = vpack.c.b16 %v3843, %v3839
    %v3940 = vpack.c.b16 %v3844, %v3840
    %v3941 = vpack.c.b16 %v3845, %v3841
    %v3942 = vpack.c.b16 %v3846, %v3842
    %v3943 = vpack.c.b16 %v3851, %v3847
    %v3944 = vpack.c.b16 %v3852, %v3848
    %v3945 = vpack.c.b16 %v3853, %v3849
    %v3946 = vpack.c.b16 %v3854, %v3850
    %v3947 = vpack.c.b16 %v3859, %v3855
    %v3948 = vpack.c.b16 %v3860, %v3856
    %v3949 = vpack.c.b16 %v3861, %v3857
    %v3950 = vpack.c.b16 %v3862, %v3858
    %v3951 = vpack.c.b16 %v3867, %v3863
    %v3952 = vpack.c.b16 %v3868, %v3864
    %v3953 = vpack.c.b16 %v3869, %v3865
    %v3954 = vpack.c.b16 %v3870, %v3866
    %v3955 = vpack.c.b16 %v3875, %v3871
    %v3956 = vpack.c.b16 %v3876, %v3872
    %v3957 = vpack.c.b16 %v3877, %v3873
    %v3958 = vpack.c.b16 %v3878, %v3874
    %v3959 = vpack.c.b16 %v3883, %v3879
    %v3960 = vpack.c.b16 %v3884, %v3880
    %v3961 = vpack.c.b16 %v3885, %v3881
    %v3962 = vpack.c.b16 %v3886, %v3882
    %v3963 = vpack.c.b16 %v3891, %v3887
    %v3964 = vpack.c.b16 %v3892, %v3888
    %v3965 = vpack.c.b16 %v3893, %v3889
    %v3966 = vpack.c.b16 %v3894, %v3890
    %v3967 = vpack.c.b16 %v3899, %v3895
    %v3968 = vpack.c.b16 %v3900, %v3896
    %v3969 = vpack.c.b16 %v3901, %v3897
    %v3970 = vpack.c.b16 %v3902, %v3898
    %v3971 = vpack.c.b16 %v3907, %v3903
    %v3972 = vpack.c.b16 %v3908, %v3904
    %v3973 = vpack.c.b16 %v3909, %v3905
    %v3974 = vpack.c.b16 %v3910, %v3906
    %4039 = vmatprep.subr.bf16.mxu0 %v3912
    %4040 = vmatpush1.bf16.msra.mxu0 %v3911
    %4041 = vmatprep.subr.bf16.mxu0 %v3916
    %4042 = vmatpush1.bf16.msra.mxu0 %v3915
    %4043 = vmatprep.subr.bf16.mxu0 %v3920
    %4044 = vmatpush1.bf16.msra.mxu0 %v3919
    %4045 = vmatprep.subr.bf16.mxu0 %v3924
    %4046 = vmatpush1.bf16.msra.mxu0 %v3923
    %4047 = vmatprep.subr.bf16.mxu0 %v3928
    %4048 = vmatpush1.bf16.msra.mxu0 %v3927
    %4049 = vmatprep.subr.bf16.mxu0 %v3932
    %4050 = vmatpush1.bf16.msra.mxu0 %v3931
    %4051 = vmatprep.subr.bf16.mxu0 %v3936
    %4052 = vmatpush1.bf16.msra.mxu0 %v3935
    %4053 = vmatprep.subr.bf16.mxu0 %v3940
    %4054 = vmatpush1.bf16.msra.mxu0 %v3939
    %4055 = vmatprep.subr.bf16.mxu0 %v3944
    %4056 = vmatpush1.bf16.msra.mxu0 %v3943
    %4057 = vmatprep.subr.bf16.mxu0 %v3948
    %4058 = vmatpush1.bf16.msra.mxu0 %v3947
    %4059 = vmatprep.subr.bf16.mxu0 %v3952
    %4060 = vmatpush1.bf16.msra.mxu0 %v3951
    %4061 = vmatprep.subr.bf16.mxu0 %v3956
    %4062 = vmatpush1.bf16.msra.mxu0 %v3955
    %4063 = vmatprep.subr.bf16.mxu0 %v3960
    %4064 = vmatpush1.bf16.msra.mxu0 %v3959
    %4065 = vmatprep.subr.bf16.mxu0 %v3964
    %4066 = vmatpush1.bf16.msra.mxu0 %v3963
    %4067 = vmatprep.subr.bf16.mxu0 %v3968
    %4068 = vmatpush1.bf16.msra.mxu0 %v3967
    %4069 = vmatprep.subr.bf16.mxu0 %v3972
    %4070 = vmatpush1.bf16.msra.mxu0 %v3971
    %4071 = vmatprep.mubr.bf16.mxu0 %v836
    %4072 = vmatmul.mubr.bf16.gmra.mrb[0].mxu0 %v835
    %v4073 = vpop.f32.mrb[0].mxu0
    %v4074 = vadd.f32 0.0, %v4073
    %v4075 = vpop.f32.mrb[0].mxu0
    %v4076 = vadd.f32 0.0, %v4075
    %v4077 = vpop.f32.mrb[0].mxu0
    %v4078 = vpop.f32.mrb[0].mxu0
    %4079 = vdwg.mxu0
    %4080 = vmatprep.subr.bf16.mxu0 %v3914
    %4081 = vmatpush1.bf16.msra.mxu0 %v3913
    %4082 = vmatprep.subr.bf16.mxu0 %v3918
    %4083 = vmatpush1.bf16.msra.mxu0 %v3917
    %4084 = vmatprep.subr.bf16.mxu0 %v3922
    %4085 = vmatpush1.bf16.msra.mxu0 %v3921
    %4086 = vmatprep.subr.bf16.mxu0 %v3926
    %4087 = vmatpush1.bf16.msra.mxu0 %v3925
    %4088 = vmatprep.subr.bf16.mxu0 %v3930
    %4089 = vmatpush1.bf16.msra.mxu0 %v3929
    %4090 = vmatprep.subr.bf16.mxu0 %v3934
    %4091 = vmatpush1.bf16.msra.mxu0 %v3933
    %4092 = vmatprep.subr.bf16.mxu0 %v3938
    %4093 = vmatpush1.bf16.msra.mxu0 %v3937
    %4094 = vmatprep.subr.bf16.mxu0 %v3942
    %4095 = vmatpush1.bf16.msra.mxu0 %v3941
    %4096 = vmatprep.subr.bf16.mxu0 %v3946
    %4097 = vmatpush1.bf16.msra.mxu0 %v3945
    %4098 = vmatprep.subr.bf16.mxu0 %v3950
    %4099 = vmatpush1.bf16.msra.mxu0 %v3949
    %4100 = vmatprep.subr.bf16.mxu0 %v3954
    %4101 = vmatpush1.bf16.msra.mxu0 %v3953
    %4102 = vmatprep.subr.bf16.mxu0 %v3958
    %4103 = vmatpush1.bf16.msra.mxu0 %v3957
    %4104 = vmatprep.subr.bf16.mxu0 %v3962
    %4105 = vmatpush1.bf16.msra.mxu0 %v3961
    %4106 = vmatprep.subr.bf16.mxu0 %v3966
    %4107 = vmatpush1.bf16.msra.mxu0 %v3965
    %4108 = vmatprep.subr.bf16.mxu0 %v3970
    %4109 = vmatpush1.bf16.msra.mxu0 %v3969
    %4110 = vmatprep.subr.bf16.mxu0 %v3974
    %4111 = vmatpush1.bf16.msra.mxu0 %v3973
    %4112 = vmatprep.mubr.bf16.mxu0 %v836
    %4113 = vmatmul.mubr.bf16.gmra.mrb[0].mxu0 %v835
    %v4114 = vpop.f32.mrb[0].mxu0
    %v4115 = vadd.f32 0.0, %v4114
    %v4116 = vpop.f32.mrb[0].mxu0
    %v4117 = vadd.f32 0.0, %v4116
    %v4118 = vpop.f32.mrb[0].mxu0
    %v4119 = vpop.f32.mrb[0].mxu0
    %4120 = vdwg.mxu0
    %v4121 = vadd.f32 %v3650, %v4074
    %v4122 = vadd.f32 %v3651, %v4076
    %v4123 = vadd.f32 %v3652, %v4115
    %v4124 = vadd.f32 %v3653, %v4117
    %v4125 = vld [vmem:[#allocation14] sm:$0xf]
    %v4127 = vlaneseq
    %v4128 = vshrl.u32 %v4127, 7
    %v4129 = vsub.s32 0, %v4128
    %v4130 = vrot.slane %v4125, %v4129
    %v4131 = vlaneseq
    %v4132 = vshrl.u32 %v4131, 7
    %v4133 = vsub.s32 1, %v4132
    %v4134 = vrot.slane %v4125, %v4133
    %v4135 = vlaneseq
    %v4136 = vshrl.u32 %v4135, 7
    %v4137 = vsub.s32 2, %v4136
    %v4138 = vrot.slane %v4125, %v4137
    %v4139 = vlaneseq
    %v4140 = vshrl.u32 %v4139, 7
    %v4141 = vsub.s32 3, %v4140
    %v4142 = vrot.slane %v4125, %v4141
    %v4147 = vadd.f32 %v4121, %v4130
    %v4148 = vadd.f32 %v4122, %v4134
    %v4149 = vadd.f32 %v4123, %v4138
    %v4150 = vadd.f32 %v4124, %v4142
    %v4151 = vmax.f32 %v4147, 0.0
    %v4152 = vmax.f32 %v4148, 0.0
    %v4153 = vmax.f32 %v4149, 0.0
    %v4154 = vmax.f32 %v4150, 0.0
    %v4155 = vpack.c.bf16 %v4151, %v4151
    %v4156 = vpack.c.bf16 %v4152, %v4152
    %v4157 = vpack.c.bf16 %v4153, %v4153
    %v4158 = vpack.c.bf16 %v4154, %v4154
    %v4159 = vld [vmem:[#allocation16] sm:$0xf]
    %v4160 = vld [vmem:[#allocation16 + $0x4] sm:$0xf]
    %v4161 = vld [vmem:[#allocation16 + $0x8] sm:$0xf]
    %v4162 = vld [vmem:[#allocation16 + $0xc] sm:$0xf]
    %v4163 = vld [vmem:[#allocation16 + $0x10] sm:$0xf]
    %v4164 = vld [vmem:[#allocation16 + $0x14] sm:$0xf]
    %v4165 = vld [vmem:[#allocation16 + $0x18] sm:$0xf]
    %v4166 = vld [vmem:[#allocation16 + $0x1c] sm:$0xf]
    %v4167 = vld [vmem:[#allocation16 + $0x20] sm:$0xf]
    %v4168 = vld [vmem:[#allocation16 + $0x24] sm:$0xf]
    %v4169 = vld [vmem:[#allocation16 + $0x28] sm:$0xf]
    %v4170 = vld [vmem:[#allocation16 + $0x2c] sm:$0xf]
    %v4171 = vld [vmem:[#allocation16 + $0x30] sm:$0xf]
    %v4172 = vld [vmem:[#allocation16 + $0x34] sm:$0xf]
    %v4173 = vld [vmem:[#allocation16 + $0x38] sm:$0xf]
    %v4174 = vld [vmem:[#allocation16 + $0x3c] sm:$0xf]
    %v4175 = vld [vmem:[#allocation16 + $0x40] sm:$0xf]
    %v4176 = vld [vmem:[#allocation16 + $0x44] sm:$0xf]
    %v4177 = vld [vmem:[#allocation16 + $0x48] sm:$0xf]
    %v4178 = vld [vmem:[#allocation16 + $0x4c] sm:$0xf]
    %v4179 = vld [vmem:[#allocation16 + $0x50] sm:$0xf]
    %v4180 = vld [vmem:[#allocation16 + $0x54] sm:$0xf]
    %v4181 = vld [vmem:[#allocation16 + $0x58] sm:$0xf]
    %v4182 = vld [vmem:[#allocation16 + $0x5c] sm:$0xf]
    %v4183 = vld [vmem:[#allocation16 + $0x60] sm:$0xf]
    %v4184 = vld [vmem:[#allocation16 + $0x64] sm:$0xf]
    %v4185 = vld [vmem:[#allocation16 + $0x68] sm:$0xf]
    %v4186 = vld [vmem:[#allocation16 + $0x6c] sm:$0xf]
    %v4187 = vld [vmem:[#allocation16 + $0x70] sm:$0xf]
    %v4188 = vld [vmem:[#allocation16 + $0x74] sm:$0xf]
    %v4189 = vld [vmem:[#allocation16 + $0x78] sm:$0xf]
    %v4190 = vld [vmem:[#allocation16 + $0x7c] sm:$0xf]
    %v4191 = vld [vmem:[#allocation16 + $0x80] sm:$0xf]
    %v4192 = vld [vmem:[#allocation16 + $0x84] sm:$0xf]
    %v4193 = vld [vmem:[#allocation16 + $0x88] sm:$0xf]
    %v4194 = vld [vmem:[#allocation16 + $0x8c] sm:$0xf]
    %v4195 = vld [vmem:[#allocation16 + $0x90] sm:$0xf]
    %v4196 = vld [vmem:[#allocation16 + $0x94] sm:$0xf]
    %v4197 = vld [vmem:[#allocation16 + $0x98] sm:$0xf]
    %v4198 = vld [vmem:[#allocation16 + $0x9c] sm:$0xf]
    %v4199 = vld [vmem:[#allocation16 + $0xa0] sm:$0xf]
    %v4200 = vld [vmem:[#allocation16 + $0xa4] sm:$0xf]
    %v4201 = vld [vmem:[#allocation16 + $0xa8] sm:$0xf]
    %v4202 = vld [vmem:[#allocation16 + $0xac] sm:$0xf]
    %v4203 = vld [vmem:[#allocation16 + $0xb0] sm:$0xf]
    %v4204 = vld [vmem:[#allocation16 + $0xb4] sm:$0xf]
    %v4205 = vld [vmem:[#allocation16 + $0xb8] sm:$0xf]
    %v4206 = vld [vmem:[#allocation16 + $0xbc] sm:$0xf]
    %v4207 = vld [vmem:[#allocation16 + $0xc0] sm:$0xf]
    %v4208 = vld [vmem:[#allocation16 + $0xc4] sm:$0xf]
    %v4209 = vld [vmem:[#allocation16 + $0xc8] sm:$0xf]
    %v4210 = vld [vmem:[#allocation16 + $0xcc] sm:$0xf]
    %v4211 = vld [vmem:[#allocation16 + $0xd0] sm:$0xf]
    %v4212 = vld [vmem:[#allocation16 + $0xd4] sm:$0xf]
    %v4213 = vld [vmem:[#allocation16 + $0xd8] sm:$0xf]
    %v4214 = vld [vmem:[#allocation16 + $0xdc] sm:$0xf]
    %v4215 = vld [vmem:[#allocation16 + $0xe0] sm:$0xf]
    %v4216 = vld [vmem:[#allocation16 + $0xe4] sm:$0xf]
    %v4217 = vld [vmem:[#allocation16 + $0xe8] sm:$0xf]
    %v4218 = vld [vmem:[#allocation16 + $0xec] sm:$0xf]
    %v4219 = vld [vmem:[#allocation16 + $0xf0] sm:$0xf]
    %v4220 = vld [vmem:[#allocation16 + $0xf4] sm:$0xf]
    %v4221 = vld [vmem:[#allocation16 + $0xf8] sm:$0xf]
    %v4222 = vld [vmem:[#allocation16 + $0xfc] sm:$0xf]
    %v4223 = vld [vmem:[#allocation17] sm:$0x1]
    %v4225 = vlaneseq
    %v4226 = vshrl.u32 %v4225, 7
    %v4227 = vsub.s32 0, %v4226
    %v4228 = vrot.slane %v4223, %v4227
    %v4294 = vunpack.c.l.b16 %v4159
    %v4295 = vunpack.c.l.b16 %v4160
    %v4296 = vunpack.c.l.b16 %v4161
    %v4297 = vunpack.c.l.b16 %v4162
    %v4298 = vunpack.c.l.b16 %v4163
    %v4299 = vunpack.c.l.b16 %v4164
    %v4300 = vunpack.c.l.b16 %v4165
    %v4301 = vunpack.c.l.b16 %v4166
    %v4302 = vunpack.c.l.b16 %v4167
    %v4303 = vunpack.c.l.b16 %v4168
    %v4304 = vunpack.c.l.b16 %v4169
    %v4305 = vunpack.c.l.b16 %v4170
    %v4306 = vunpack.c.l.b16 %v4171
    %v4307 = vunpack.c.l.b16 %v4172
    %v4308 = vunpack.c.l.b16 %v4173
    %v4309 = vunpack.c.l.b16 %v4174
    %v4310 = vunpack.c.l.b16 %v4175
    %v4311 = vunpack.c.l.b16 %v4176
    %v4312 = vunpack.c.l.b16 %v4177
    %v4313 = vunpack.c.l.b16 %v4178
    %v4314 = vunpack.c.l.b16 %v4179
    %v4315 = vunpack.c.l.b16 %v4180
    %v4316 = vunpack.c.l.b16 %v4181
    %v4317 = vunpack.c.l.b16 %v4182
    %v4318 = vunpack.c.l.b16 %v4183
    %v4319 = vunpack.c.l.b16 %v4184
    %v4320 = vunpack.c.l.b16 %v4185
    %v4321 = vunpack.c.l.b16 %v4186
    %v4322 = vunpack.c.l.b16 %v4187
    %v4323 = vunpack.c.l.b16 %v4188
    %v4324 = vunpack.c.l.b16 %v4189
    %v4325 = vunpack.c.l.b16 %v4190
    %v4326 = vunpack.c.l.b16 %v4191
    %v4327 = vunpack.c.l.b16 %v4192
    %v4328 = vunpack.c.l.b16 %v4193
    %v4329 = vunpack.c.l.b16 %v4194
    %v4330 = vunpack.c.l.b16 %v4195
    %v4331 = vunpack.c.l.b16 %v4196
    %v4332 = vunpack.c.l.b16 %v4197
    %v4333 = vunpack.c.l.b16 %v4198
    %v4334 = vunpack.c.l.b16 %v4199
    %v4335 = vunpack.c.l.b16 %v4200
    %v4336 = vunpack.c.l.b16 %v4201
    %v4337 = vunpack.c.l.b16 %v4202
    %v4338 = vunpack.c.l.b16 %v4203
    %v4339 = vunpack.c.l.b16 %v4204
    %v4340 = vunpack.c.l.b16 %v4205
    %v4341 = vunpack.c.l.b16 %v4206
    %v4342 = vunpack.c.l.b16 %v4207
    %v4343 = vunpack.c.l.b16 %v4208
    %v4344 = vunpack.c.l.b16 %v4209
    %v4345 = vunpack.c.l.b16 %v4210
    %v4346 = vunpack.c.l.b16 %v4211
    %v4347 = vunpack.c.l.b16 %v4212
    %v4348 = vunpack.c.l.b16 %v4213
    %v4349 = vunpack.c.l.b16 %v4214
    %v4350 = vunpack.c.l.b16 %v4215
    %v4351 = vunpack.c.l.b16 %v4216
    %v4352 = vunpack.c.l.b16 %v4217
    %v4353 = vunpack.c.l.b16 %v4218
    %v4354 = vunpack.c.l.b16 %v4219
    %v4355 = vunpack.c.l.b16 %v4220
    %v4356 = vunpack.c.l.b16 %v4221
    %v4357 = vunpack.c.l.b16 %v4222
    %v4358 = vpack.c.b16 %v4295, %v4294
    %v4359 = vpack.c.b16 %v4297, %v4296
    %v4360 = vpack.c.b16 %v4299, %v4298
    %v4361 = vpack.c.b16 %v4301, %v4300
    %v4362 = vpack.c.b16 %v4303, %v4302
    %v4363 = vpack.c.b16 %v4305, %v4304
    %v4364 = vpack.c.b16 %v4307, %v4306
    %v4365 = vpack.c.b16 %v4309, %v4308
    %v4366 = vpack.c.b16 %v4311, %v4310
    %v4367 = vpack.c.b16 %v4313, %v4312
    %v4368 = vpack.c.b16 %v4315, %v4314
    %v4369 = vpack.c.b16 %v4317, %v4316
    %v4370 = vpack.c.b16 %v4319, %v4318
    %v4371 = vpack.c.b16 %v4321, %v4320
    %v4372 = vpack.c.b16 %v4323, %v4322
    %v4373 = vpack.c.b16 %v4325, %v4324
    %v4374 = vpack.c.b16 %v4327, %v4326
    %v4375 = vpack.c.b16 %v4329, %v4328
    %v4376 = vpack.c.b16 %v4331, %v4330
    %v4377 = vpack.c.b16 %v4333, %v4332
    %v4378 = vpack.c.b16 %v4335, %v4334
    %v4379 = vpack.c.b16 %v4337, %v4336
    %v4380 = vpack.c.b16 %v4339, %v4338
    %v4381 = vpack.c.b16 %v4341, %v4340
    %v4382 = vpack.c.b16 %v4343, %v4342
    %v4383 = vpack.c.b16 %v4345, %v4344
    %v4384 = vpack.c.b16 %v4347, %v4346
    %v4385 = vpack.c.b16 %v4349, %v4348
    %v4386 = vpack.c.b16 %v4351, %v4350
    %v4387 = vpack.c.b16 %v4353, %v4352
    %v4388 = vpack.c.b16 %v4355, %v4354
    %v4389 = vpack.c.b16 %v4357, %v4356
    %4422 = vmatprep.subr.bf16.mxu0 0
    %4423 = vmatpush1.bf16.msra.mxu0 %v4358
    %4424 = vmatprep.subr.bf16.mxu0 0
    %4425 = vmatpush1.bf16.msra.mxu0 %v4359
    %4426 = vmatprep.subr.bf16.mxu0 0
    %4427 = vmatpush1.bf16.msra.mxu0 %v4360
    %4428 = vmatprep.subr.bf16.mxu0 0
    %4429 = vmatpush1.bf16.msra.mxu0 %v4361
    %4430 = vmatprep.subr.bf16.mxu0 0
    %4431 = vmatpush1.bf16.msra.mxu0 %v4362
    %4432 = vmatprep.subr.bf16.mxu0 0
    %4433 = vmatpush1.bf16.msra.mxu0 %v4363
    %4434 = vmatprep.subr.bf16.mxu0 0
    %4435 = vmatpush1.bf16.msra.mxu0 %v4364
    %4436 = vmatprep.subr.bf16.mxu0 0
    %4437 = vmatpush1.bf16.msra.mxu0 %v4365
    %4438 = vmatprep.subr.bf16.mxu0 0
    %4439 = vmatpush1.bf16.msra.mxu0 %v4366
    %4440 = vmatprep.subr.bf16.mxu0 0
    %4441 = vmatpush1.bf16.msra.mxu0 %v4367
    %4442 = vmatprep.subr.bf16.mxu0 0
    %4443 = vmatpush1.bf16.msra.mxu0 %v4368
    %4444 = vmatprep.subr.bf16.mxu0 0
    %4445 = vmatpush1.bf16.msra.mxu0 %v4369
    %4446 = vmatprep.subr.bf16.mxu0 0
    %4447 = vmatpush1.bf16.msra.mxu0 %v4370
    %4448 = vmatprep.subr.bf16.mxu0 0
    %4449 = vmatpush1.bf16.msra.mxu0 %v4371
    %4450 = vmatprep.subr.bf16.mxu0 0
    %4451 = vmatpush1.bf16.msra.mxu0 %v4372
    %4452 = vmatprep.subr.bf16.mxu0 0
    %4453 = vmatpush1.bf16.msra.mxu0 %v4373
    %4454 = vmatprep.mubr.bf16.mxu0 %v4156
    %4455 = vmatmul.mubr.bf16.gmra.mrb[0].mxu0 %v4155
    %v4456 = vpop.f32.mrb[0].mxu0
    %v4457 = vadd.f32 %v4228, %v4456
    %v4458 = vpop.f32.mrb[0].mxu0
    %v4459 = vpop.f32.mrb[0].mxu0
    %v4460 = vpop.f32.mrb[0].mxu0
    %4461 = vdwg.mxu0
    %4462 = vmatprep.subr.bf16.mxu0 0
    %4463 = vmatpush1.bf16.msra.mxu0 %v4374
    %4464 = vmatprep.subr.bf16.mxu0 0
    %4465 = vmatpush1.bf16.msra.mxu0 %v4375
    %4466 = vmatprep.subr.bf16.mxu0 0
    %4467 = vmatpush1.bf16.msra.mxu0 %v4376
    %4468 = vmatprep.subr.bf16.mxu0 0
    %4469 = vmatpush1.bf16.msra.mxu0 %v4377
    %4470 = vmatprep.subr.bf16.mxu0 0
    %4471 = vmatpush1.bf16.msra.mxu0 %v4378
    %4472 = vmatprep.subr.bf16.mxu0 0
    %4473 = vmatpush1.bf16.msra.mxu0 %v4379
    %4474 = vmatprep.subr.bf16.mxu0 0
    %4475 = vmatpush1.bf16.msra.mxu0 %v4380
    %4476 = vmatprep.subr.bf16.mxu0 0
    %4477 = vmatpush1.bf16.msra.mxu0 %v4381
    %4478 = vmatprep.subr.bf16.mxu0 0
    %4479 = vmatpush1.bf16.msra.mxu0 %v4382
    %4480 = vmatprep.subr.bf16.mxu0 0
    %4481 = vmatpush1.bf16.msra.mxu0 %v4383
    %4482 = vmatprep.subr.bf16.mxu0 0
    %4483 = vmatpush1.bf16.msra.mxu0 %v4384
    %4484 = vmatprep.subr.bf16.mxu0 0
    %4485 = vmatpush1.bf16.msra.mxu0 %v4385
    %4486 = vmatprep.subr.bf16.mxu0 0
    %4487 = vmatpush1.bf16.msra.mxu0 %v4386
    %4488 = vmatprep.subr.bf16.mxu0 0
    %4489 = vmatpush1.bf16.msra.mxu0 %v4387
    %4490 = vmatprep.subr.bf16.mxu0 0
    %4491 = vmatpush1.bf16.msra.mxu0 %v4388
    %4492 = vmatprep.subr.bf16.mxu0 0
    %4493 = vmatpush1.bf16.msra.mxu0 %v4389
    %4494 = vmatprep.mubr.bf16.mxu0 %v4158
    %4495 = vmatmul.mubr.bf16.gmra.mrb[0].mxu0 %v4157
    %v4496 = vpop.f32.mrb[0].mxu0
    %v4497 = vadd.f32 %v4457, %v4496
    %v4498 = vpop.f32.mrb[0].mxu0
    %v4499 = vpop.f32.mrb[0].mxu0
    %v4500 = vpop.f32.mrb[0].mxu0
    %4501 = vdwg.mxu0
    %4502 = vmax.xlane.f32.xlu0 %v4497
    %v4503 = vpop.xlane.xlu0 %4502
    %v4504 = vsub.f32 %v4497, %v4503
    %v4505 = vmul.f32 %v4504, 1.442695
    %v4506 = vpow.pop %v4505
    %4507 = vadd.xlane.f32.xlu0 %v4506
    %v4508 = vpop.xlane.xlu0 %4507
    %v4509 = vrcp.pop %v4508
    %v4510 = vmul.f32 %v4506, %v4509
    %4511 = vst [vmem:[#allocation19] sm:$0xff] %v4510
    // Predicated region
    $region86: #{tpu_custom_call.1} parent=1 // pred_check
      _
    $region87: #{tpu_custom_call.1} parent=1 // pred_check_branch
      %4513 = sbr.rel (0) target = $region89
    $region88: #{tpu_custom_call.1} parent=1 // pred_region
      %s4515 = ssub.s32 128, 128
      %4516 = vsyncadd [#allocation4], %s4515
      %s4518 = sshll.u32 [#allocation19], 4
      %s4519 = int_to_ptr.vmem [resolvable:$true] %s4518
      %4521 = dma.vmem_to_hbm [thread:$0]  %s4519, 128, %s11, [#allocation4]
    $region89: #{tpu_custom_call.1} parent=1 // pred_fallthru
      _
    // Predicated region
    $region90: #{tpu_custom_call.1} parent=1 // pred_check
      _
    $region91: #{tpu_custom_call.1} parent=1 // pred_check_branch
      %4523 = sbr.rel (0) target = $region93
    $region92: #{tpu_custom_call.1} parent=1 // pred_region
      %4524 = dma.done [#allocation4], 128
    $region93: #{tpu_custom_call.1} parent=1 // pred_fallthru
      _
    %4525 = vsyncpa [#allocation3], 1
    %4526 = vsyncpa [#allocation6], 1
    %4527 = vsyncpa [#allocation9], 1
    %4528 = vsyncpa [#allocation12], 1
    %4529 = vsyncpa [#allocation15], 1
    %4530 = vsyncpa [#allocation18], 1
    %4531 = vsyncpa [#allocation4], 1

</llo_original>
